<compile_context>
chip_gen: v6e
topology: v6e:2x2x1
jax: 0.10.0
libtpu: 0.0.40
codegen_flags: <defaults>
</compile_context>

<pallas_src>
import functools

import jax
import jax.numpy as jnp
from jax.experimental import pallas as pl
from jax.experimental.pallas import tpu as pltpu

EPS = 1e-5  # torch BatchNorm default eps
_TILED_VMEM_LIMIT = 32 * 1024 * 1024   # per-step working set is only a few MiB
_FUSED_VMEM_LIMIT = 48 * 1024 * 1024   # < 64 MiB physical on v7x
_FUSED_BYTES_GATE = 24 * 1024 * 1024   # take the fused path below this estimate


def _round_up(v, m):
    return (v + m - 1) // m * m


# --------------------------------------------------------------------------- #
# Fused single-invocation kernel (small/medium N): everything stays in VMEM.
# --------------------------------------------------------------------------- #
def _fused_kernel(x_ref, w1_ref, w2_ref, aux_ref, o_ref, *, c, n, mm_dtype):
    f32 = jnp.float32
    inv_n = 1.0 / n

    x = x_ref[...]                                                # (n, k1) mm
    # layer1: pts are folded into the last 3 K-rows of w1_aug.
    h1 = jnp.dot(x, w1_ref[...], preferred_element_type=f32)      # (n, cp) f32

    # BN1 (training-mode batch stats, one-pass variance in fp32)
    mu1 = jnp.sum(h1, axis=0, keepdims=True) * inv_n
    var1 = jnp.maximum(jnp.sum(h1 * h1, axis=0, keepdims=True) * inv_n - mu1 * mu1, 0.0)
    scale1 = aux_ref[3:4, :] * jax.lax.rsqrt(var1 + EPS)          # gamma1
    shift1 = aux_ref[4:5, :] - mu1 * scale1                       # beta1 - mu*scale
    a = jnp.maximum(h1 * scale1 + shift1, 0.0)

    # layer2: MXU matmul + point term as 3 VPU FMAs (pts sliced from x_cat)
    h2 = jnp.dot(a.astype(mm_dtype), w2_ref[...], preferred_element_type=f32)
    p0 = x[:, c + 0:c + 1].astype(f32)
    p1 = x[:, c + 1:c + 2].astype(f32)
    p2 = x[:, c + 2:c + 3].astype(f32)
    h2 = h2 + (p0 * aux_ref[0:1, :] + p1 * aux_ref[1:2, :] + p2 * aux_ref[2:3, :])

    # BN2
    mu2 = jnp.sum(h2, axis=0, keepdims=True) * inv_n
    var2 = jnp.maximum(jnp.sum(h2 * h2, axis=0, keepdims=True) * inv_n - mu2 * mu2, 0.0)
    scale2 = aux_ref[5:6, :] * jax.lax.rsqrt(var2 + EPS)
    shift2 = aux_ref[6:7, :] - mu2 * scale2

    # residual add + relu, write only the real c channels
    res = x[:, :c].astype(f32)
    out = jnp.maximum(h2[:, :c] * scale2[:, :c] + shift2[:, :c] + res, 0.0)
    o_ref[...] = out.astype(o_ref.dtype)


# --------------------------------------------------------------------------- #
# Tiled pass 1: layer1 matmul (K = c+3, pts folded) + per-tile BN1 statistics
# --------------------------------------------------------------------------- #
def _layer1_kernel(x_ref, w1_ref, h_ref, stats_ref):
    h = jnp.dot(x_ref[...], w1_ref[...], preferred_element_type=jnp.float32)
    h_ref[...] = h.astype(h_ref.dtype)      # stored in matmul_dtype (bf16 default)
    # stats from the fp32 matmul result, BEFORE the downcast.
    # padded rows of x_cat are exact zeros (and bias is dropped) -> contribute 0.
    s = jnp.sum(h, axis=0, keepdims=True)
    sq = jnp.sum(h * h, axis=0, keepdims=True)
    stats_ref[...] = jnp.concatenate([s, sq], axis=0)[None]       # (1, 2, cp)


# --------------------------------------------------------------------------- #
# Tiled pass 2: BN1 affine + relu + layer2 (+ pts FMAs) + per-tile BN2 stats
# --------------------------------------------------------------------------- #
def _layer2_kernel(h1_ref, pts_ref, aux_ref, w2_ref, h2_ref, stats_ref, *,
                   mm_dtype, tile_n, n_true, need_mask):
    f32 = jnp.float32
    scale1 = aux_ref[0:1, :]
    shift1 = aux_ref[1:2, :]
    a = jnp.maximum(h1_ref[...].astype(f32) * scale1 + shift1, 0.0)

    h2 = jnp.dot(a.astype(mm_dtype), w2_ref[...], preferred_element_type=f32)
    pts = pts_ref[...].astype(f32)                                # (TN, 3)
    h2 = h2 + (pts[:, 0:1] * aux_ref[2:3, :]
               + pts[:, 1:2] * aux_ref[3:4, :]
               + pts[:, 2:3] * aux_ref[4:5, :])
    h2_ref[...] = h2.astype(h2_ref.dtype)

    if need_mask:  # padded rows give relu(shift1) != 0 -> keep them out of stats
        row = (pl.program_id(0) * tile_n
               + jax.lax.broadcasted_iota(jnp.int32, (tile_n, 1), 0))
        hm = jnp.where(row < n_true, h2, 0.0)
    else:
        hm = h2
    s = jnp.sum(hm, axis=0, keepdims=True)
    sq = jnp.sum(hm * hm, axis=0, keepdims=True)
    stats_ref[...] = jnp.concatenate([s, sq], axis=0)[None]       # (1, 2, cp)


# --------------------------------------------------------------------------- #
# Tiled pass 3: BN2 affine + residual add + relu, writes (N, c) directly
# --------------------------------------------------------------------------- #
def _finalize_kernel(h2_ref, x_ref, aff_ref, o_ref, *, c):
    f32 = jnp.float32
    aff = aff_ref[...]
    scale2 = aff[0:1, :c]
    shift2 = aff[1:2, :c]
    h2 = h2_ref[...][:, :c].astype(f32)
    res = x_ref[...][:, :c].astype(f32)
    out = jnp.maximum(h2 * scale2 + shift2 + res, 0.0)
    o_ref[...] = out.astype(o_ref.dtype)


# --------------------------------------------------------------------------- #
# Wrapper
# --------------------------------------------------------------------------- #
@functools.partial(jax.jit, static_argnames=("tile_n", "matmul_dtype", "force_tiled"))
def residual_block_with_points(x, norm_points, params, *,
                               tile_n=1024, matmul_dtype=jnp.bfloat16,
                               force_tiled=False):
    """x: (N, C) features, norm_points: (N, 3). Returns (N, C)."""
    n, c = x.shape
    f32 = jnp.float32
    mm = matmul_dtype
    mm_bytes = jnp.dtype(mm).itemsize
    out_dtype = x.dtype
    out_bytes = jnp.dtype(out_dtype).itemsize

    cp = _round_up(c, 128)          # lane-dense channel width for h1/h2/weights
    k1 = _round_up(c + 3, 8)        # narrow layer-1 contraction dim (x | pts)

    # x_cat = [x | pts | 0..] in the MXU operand dtype; doubles as the residual.
    x_cat = jnp.concatenate([x.astype(mm), norm_points.astype(mm)], axis=1)
    if k1 > c + 3:
        x_cat = jnp.pad(x_cat, ((0, 0), (0, k1 - (c + 3))))

    # weights (padded channels carry zeros -> padded h1/h2 columns stay zero)
    w1_aug = jnp.zeros((k1, cp), f32)
    w1_aug = w1_aug.at[:c, :c].set(params["w1"])
    w1_aug = w1_aug.at[c:c + 3, :c].set(params["p1"])
    w1_aug = w1_aug.astype(mm)
    w2_pad = jnp.zeros((cp, cp), f32).at[:c, :c].set(params["w2"]).astype(mm)
    p2_pad = jnp.zeros((3, cp), f32).at[:, :c].set(params["p2"])

    g1 = jnp.zeros((cp,), f32).at[:c].set(params["g1"])
    be1 = jnp.zeros((cp,), f32).at[:c].set(params["be1"])
    g2 = jnp.zeros((cp,), f32).at[:c].set(params["g2"])
    be2 = jnp.zeros((cp,), f32).at[:c].set(params["be2"])

    # ---------------- fused VMEM-resident fast path ----------------------- #
    fused_bytes = (n * k1 * mm_bytes + n * c * out_bytes            # x_cat, out
                   + n * cp * (4 + 4 + mm_bytes)                    # h1, h2 (f32), a
                   + (k1 * cp + cp * cp) * mm_bytes + 8 * cp * 4)   # weights, aux
    if (not force_tiled) and fused_bytes <= _FUSED_BYTES_GATE:
        aux = jnp.concatenate([p2_pad, g1[None], be1[None], g2[None], be2[None]],
                              axis=0)                               # (7, cp) f32
        return pl.pallas_call(
            functools.partial(_fused_kernel, c=c, n=n, mm_dtype=mm),
            out_shape=jax.ShapeDtypeStruct((n, c), out_dtype),
            compiler_params=pltpu.CompilerParams(
                vmem_limit_bytes=_FUSED_VMEM_LIMIT),
        )(x_cat, w1_aug, w2_pad, aux)

    # ---------------- tiled three-pass path (large N) --------------------- #
    n_pad = _round_up(n, tile_n)
    n_tiles = n_pad // tile_n
    if n_pad != n:  # cheap, narrow (k1-wide) row pad -> padded rows are exact zeros
        x_cat_t = jnp.pad(x_cat, ((0, n_pad - n), (0, 0)))
        pts_mm = jnp.pad(norm_points.astype(mm), ((0, n_pad - n), (0, 0)))
    else:
        x_cat_t = x_cat
        pts_mm = norm_points.astype(mm)

    x_spec = pl.BlockSpec((tile_n, k1), lambda i: (i, 0))
    h_spec = pl.BlockSpec((tile_n, cp), lambda i: (i, 0))
    stats_spec = pl.BlockSpec((1, 2, cp), lambda i: (i, 0, 0))   # per-tile partials
    par = pltpu.CompilerParams(dimension_semantics=("parallel",),
                               vmem_limit_bytes=_TILED_VMEM_LIMIT)

    # pass 1: layer1 + per-tile BN1 stats
    h1, st1 = pl.pallas_call(
        _layer1_kernel,
        grid=(n_tiles,),
        in_specs=[x_spec, pl.BlockSpec((k1, cp), lambda i: (0, 0))],
        out_specs=[h_spec, stats_spec],
        out_shape=[jax.ShapeDtypeStruct((n_pad, cp), mm),
                   jax.ShapeDtypeStruct((n_tiles, 2, cp), f32)],
        compiler_params=par,
    )(x_cat_t, w1_aug)

    inv_n = 1.0 / n  # true point count (padded rows contribute 0)

    def _bn_affine(stats, g, be):
        mu = stats[0] * inv_n
        var = jnp.maximum(stats[1] * inv_n - mu * mu, 0.0)
        scale = g * jax.lax.rsqrt(var + EPS)
        shift = be - mu * scale
        return scale, shift

    scale1, shift1 = _bn_affine(jnp.sum(st1, axis=0), g1, be1)
    aux_b = jnp.concatenate([scale1[None], shift1[None], p2_pad], axis=0)  # (5, cp)

    # pass 2: BN1 + relu + layer2 + per-tile BN2 stats
    h2, st2 = pl.pallas_call(
        functools.partial(_layer2_kernel, mm_dtype=mm, tile_n=tile_n,
                          n_true=n, need_mask=(n_pad != n)),
        grid=(n_tiles,),
        in_specs=[h_spec,
                  pl.BlockSpec((tile_n, 3), lambda i: (i, 0)),
                  pl.BlockSpec((5, cp), lambda i: (0, 0)),
                  pl.BlockSpec((cp, cp), lambda i: (0, 0))],
        out_specs=[h_spec, stats_spec],
        out_shape=[jax.ShapeDtypeStruct((n_pad, cp), mm),
                   jax.ShapeDtypeStruct((n_tiles, 2, cp), f32)],
        compiler_params=par,
    )(h1, pts_mm, aux_b, w2_pad)

    scale2, shift2 = _bn_affine(jnp.sum(st2, axis=0), g2, be2)
    aff2 = jnp.concatenate([scale2[None], shift2[None]], axis=0)  # (2, cp)

    # pass 3: BN2 + residual + relu, caller layout (N, c) written directly
    out = pl.pallas_call(
        functools.partial(_finalize_kernel, c=c),
        grid=(n_tiles,),
        in_specs=[h_spec, x_spec, pl.BlockSpec((2, cp), lambda i: (0, 0))],
        out_specs=pl.BlockSpec((tile_n, c), lambda i: (i, 0)),
        out_shape=jax.ShapeDtypeStruct((n, c), out_dtype),
        compiler_params=par,
    )(h2, x_cat_t, aff2)

    return out


# --------------------------------------------------------------------------- #
# Parameters + pure-JAX reference
# --------------------------------------------------------------------------- #
def init_params(key, in_channels, out_channels=None, kernel_size=3):
    out_channels = in_channels if out_channels is None else out_channels
    del kernel_size  # see TODO(synk) above
    ks = jax.random.split(key, 8)
    s1 = 1.0 / jnp.sqrt(in_channels)
    s2 = 1.0 / jnp.sqrt(out_channels)
    return {
        "w1": jax.random.normal(ks[0], (in_channels, out_channels), jnp.float32) * s1,
        "p1": jax.random.normal(ks[1], (3, out_channels), jnp.float32) * 0.1,
        "g1": 1.0 + 0.1 * jax.random.normal(ks[2], (out_channels,), jnp.float32),
        "be1": 0.1 * jax.random.normal(ks[3], (out_channels,), jnp.float32),
        "w2": jax.random.normal(ks[4], (out_channels, out_channels), jnp.float32) * s2,
        "p2": jax.random.normal(ks[5], (3, out_channels), jnp.float32) * 0.1,
        "g2": 1.0 + 0.1 * jax.random.normal(ks[6], (out_channels,), jnp.float32),
        "be2": 0.1 * jax.random.normal(ks[7], (out_channels,), jnp.float32),
    }


def _reference(x, pts, p):
    """Pure-JAX reference (fp32 everywhere)."""
    h = x @ p["w1"] + pts @ p["p1"]
    mu = h.mean(0, keepdims=True)
    var = ((h - mu) ** 2).mean(0, keepdims=True)
    h = (h - mu) / jnp.sqrt(var + EPS) * p["g1"] + p["be1"]
    h = jnp.maximum(h, 0.0)
    h2 = h @ p["w2"] + pts @ p["p2"]
    mu2 = h2.mean(0, keepdims=True)
    var2 = ((h2 - mu2) ** 2).mean(0, keepdims=True)
    h2 = (h2 - mu2) / jnp.sqrt(var2 + EPS) * p["g2"] + p["be2"]
    return jnp.maximum(h2 + x, 0.0)


if __name__ == "__main__":
    key = jax.random.PRNGKey(0)
    k_x, k_pts, k_params = jax.random.split(key, 3)

    # N deliberately not a multiple of the tile so row masking / clipping is hit.
    N, C = 1000, 32
    x = jax.random.normal(k_x, (N, C), jnp.float32)
    norm_points = jax.random.uniform(k_pts, (N, 3), jnp.float32) * 2.0 - 1.0
    params = init_params(k_params, in_channels=C)

    ref = _reference(x, norm_points, params)

    # fused VMEM-resident path, fp32 operands: tight check
    out = jax.block_until_ready(
        residual_block_with_points(x, norm_points, params, matmul_dtype=jnp.float32))
    assert out.shape == (N, C)
    assert jnp.allclose(out, ref, atol=1e-3, rtol=1e-3), "fused fp32 mismatch"

    # fused path, bf16 operands (default)
    out = jax.block_until_ready(residual_block_with_points(x, norm_points, params))
    assert out.shape == (N, C)
    assert jnp.allclose(out, ref, atol=1e-1, rtol=1e-1), "fused bf16 mismatch"

    # tiled three-pass path, fp32 operands: tight check (exercises row masking)
    out = jax.block_until_ready(
        residual_block_with_points(x, norm_points, params, tile_n=256,
                                   matmul_dtype=jnp.float32, force_tiled=True))
    assert out.shape == (N, C)
    assert jnp.allclose(out, ref, atol=1e-3, rtol=1e-3), "tiled fp32 mismatch"

    # tiled path, bf16 operands / bf16 intermediates
    out = jax.block_until_ready(
        residual_block_with_points(x, norm_points, params, tile_n=256,
                                   force_tiled=True))
    assert out.shape == (N, C)
    assert jnp.allclose(out, ref, atol=1e-1, rtol=1e-1), "tiled bf16 mismatch"

    print("KERNEL_OK")
</pallas_src>

<mosaic_0001>
module attributes {stable_mosaic.version = 11 : i64} {
  func.func @_fused_kernel(%arg0: memref<1000x40xf32, #tpu.memory_space<vmem>>, %arg1: memref<40x128xf32, #tpu.memory_space<vmem>>, %arg2: memref<128x128xf32, #tpu.memory_space<vmem>>, %arg3: memref<7x128xf32, #tpu.memory_space<vmem>>, %arg4: memref<1000x32xf32, #tpu.memory_space<vmem>>) attributes {dimension_semantics = [], scalar_prefetch = 0 : i64, scratch_operands = 0 : i64, tpu.core_type = #tpu.core_type<tc>} {
    %c0 = arith.constant 0 : index
    %c0_0 = arith.constant 0 : index
    %0 = vector.load %arg0[%c0, %c0_0] : memref<1000x40xf32, #tpu.memory_space<vmem>>, vector<1000x40xf32>
    %c0_1 = arith.constant 0 : index
    %c0_2 = arith.constant 0 : index
    %1 = vector.load %arg1[%c0_1, %c0_2] : memref<40x128xf32, #tpu.memory_space<vmem>>, vector<40x128xf32>
    %cst = arith.constant dense<0.000000e+00> : vector<1000x128xf32>
    %2 = tpu.matmul %0, %1, %cst {dimension_numbers = #tpu.dot_dimension_numbers<[1], [0], [0], [1], [0, 0, 1, 1], [], []>} : vector<1000x40xf32>, vector<40x128xf32>, vector<1000x128xf32> -> vector<1000x128xf32>
    %cst_3 = arith.constant dense<0.000000e+00> : vector<128xf32>
    %3 = vector.multi_reduction <add>, %2, %cst_3 [0] : vector<1000x128xf32> to vector<128xf32>
    %4 = vector.shape_cast %3 : vector<128xf32> to vector<1x128xf32>
    %cst_4 = arith.constant 1.000000e-03 : f32
    %5 = vector.broadcast %cst_4 : f32 to vector<1x128xf32>
    %6 = arith.mulf %4, %5 : vector<1x128xf32>
    %7 = arith.mulf %2, %2 : vector<1000x128xf32>
    %cst_5 = arith.constant dense<0.000000e+00> : vector<128xf32>
    %8 = vector.multi_reduction <add>, %7, %cst_5 [0] : vector<1000x128xf32> to vector<128xf32>
    %9 = vector.shape_cast %8 : vector<128xf32> to vector<1x128xf32>
    %cst_6 = arith.constant 1.000000e-03 : f32
    %10 = vector.broadcast %cst_6 : f32 to vector<1x128xf32>
    %11 = arith.mulf %9, %10 : vector<1x128xf32>
    %12 = arith.mulf %6, %6 : vector<1x128xf32>
    %13 = arith.subf %11, %12 : vector<1x128xf32>
    %cst_7 = arith.constant 0.000000e+00 : f32
    %14 = vector.broadcast %cst_7 : f32 to vector<1x128xf32>
    %15 = arith.maximumf %13, %14 : vector<1x128xf32>
    %c3 = arith.constant 3 : index
    %c0_8 = arith.constant 0 : index
    %16 = vector.load %arg3[%c3, %c0_8] : memref<7x128xf32, #tpu.memory_space<vmem>>, vector<1x128xf32>
    %cst_9 = arith.constant 9.99999974E-6 : f32
    %17 = vector.broadcast %cst_9 : f32 to vector<1x128xf32>
    %18 = arith.addf %15, %17 : vector<1x128xf32>
    %19 = math.rsqrt %18 : vector<1x128xf32>
    %20 = arith.mulf %16, %19 : vector<1x128xf32>
    %c4 = arith.constant 4 : index
    %c0_10 = arith.constant 0 : index
    %21 = vector.load %arg3[%c4, %c0_10] : memref<7x128xf32, #tpu.memory_space<vmem>>, vector<1x128xf32>
    %22 = arith.mulf %6, %20 : vector<1x128xf32>
    %23 = arith.subf %21, %22 : vector<1x128xf32>
    %24 = vector.broadcast %20 : vector<1x128xf32> to vector<1000x128xf32>
    %25 = arith.mulf %2, %24 : vector<1000x128xf32>
    %26 = vector.broadcast %23 : vector<1x128xf32> to vector<1000x128xf32>
    %27 = arith.addf %25, %26 : vector<1000x128xf32>
    %cst_11 = arith.constant 0.000000e+00 : f32
    %28 = vector.broadcast %cst_11 : f32 to vector<1000x128xf32>
    %29 = arith.maximumf %27, %28 : vector<1000x128xf32>
    %c0_12 = arith.constant 0 : index
    %c0_13 = arith.constant 0 : index
    %30 = vector.load %arg2[%c0_12, %c0_13] : memref<128x128xf32, #tpu.memory_space<vmem>>, vector<128x128xf32>
    %cst_14 = arith.constant dense<0.000000e+00> : vector<1000x128xf32>
    %31 = tpu.matmul %29, %30, %cst_14 {dimension_numbers = #tpu.dot_dimension_numbers<[1], [0], [0], [1], [0, 0, 1, 1], [], []>} : vector<1000x128xf32>, vector<128x128xf32>, vector<1000x128xf32> -> vector<1000x128xf32>
    %32 = vector.extract_strided_slice %0 {offsets = [0, 32], sizes = [1000, 1], strides = [1, 1]} : vector<1000x40xf32> to vector<1000x1xf32>
    %33 = vector.extract_strided_slice %0 {offsets = [0, 33], sizes = [1000, 1], strides = [1, 1]} : vector<1000x40xf32> to vector<1000x1xf32>
    %34 = vector.extract_strided_slice %0 {offsets = [0, 34], sizes = [1000, 1], strides = [1, 1]} : vector<1000x40xf32> to vector<1000x1xf32>
    %c0_15 = arith.constant 0 : index
    %c0_16 = arith.constant 0 : index
    %35 = vector.load %arg3[%c0_15, %c0_16] : memref<7x128xf32, #tpu.memory_space<vmem>>, vector<1x128xf32>
    %36 = vector.broadcast %32 : vector<1000x1xf32> to vector<1000x128xf32>
    %37 = vector.broadcast %35 : vector<1x128xf32> to vector<1000x128xf32>
    %38 = arith.mulf %36, %37 : vector<1000x128xf32>
    %c1 = arith.constant 1 : index
    %c0_17 = arith.constant 0 : index
    %39 = vector.load %arg3[%c1, %c0_17] : memref<7x128xf32, #tpu.memory_space<vmem>>, vector<1x128xf32>
    %40 = vector.broadcast %33 : vector<1000x1xf32> to vector<1000x128xf32>
    %41 = vector.broadcast %39 : vector<1x128xf32> to vector<1000x128xf32>
    %42 = arith.mulf %40, %41 : vector<1000x128xf32>
    %43 = arith.addf %38, %42 : vector<1000x128xf32>
    %c2 = arith.constant 2 : index
    %c0_18 = arith.constant 0 : index
    %44 = vector.load %arg3[%c2, %c0_18] : memref<7x128xf32, #tpu.memory_space<vmem>>, vector<1x128xf32>
    %45 = vector.broadcast %34 : vector<1000x1xf32> to vector<1000x128xf32>
    %46 = vector.broadcast %44 : vector<1x128xf32> to vector<1000x128xf32>
    %47 = arith.mulf %45, %46 : vector<1000x128xf32>
    %48 = arith.addf %43, %47 : vector<1000x128xf32>
    %49 = arith.addf %31, %48 : vector<1000x128xf32>
    %cst_19 = arith.constant dense<0.000000e+00> : vector<128xf32>
    %50 = vector.multi_reduction <add>, %49, %cst_19 [0] : vector<1000x128xf32> to vector<128xf32>
    %51 = vector.shape_cast %50 : vector<128xf32> to vector<1x128xf32>
    %cst_20 = arith.constant 1.000000e-03 : f32
    %52 = vector.broadcast %cst_20 : f32 to vector<1x128xf32>
    %53 = arith.mulf %51, %52 : vector<1x128xf32>
    %54 = arith.mulf %49, %49 : vector<1000x128xf32>
    %cst_21 = arith.constant dense<0.000000e+00> : vector<128xf32>
    %55 = vector.multi_reduction <add>, %54, %cst_21 [0] : vector<1000x128xf32> to vector<128xf32>
    %56 = vector.shape_cast %55 : vector<128xf32> to vector<1x128xf32>
    %cst_22 = arith.constant 1.000000e-03 : f32
    %57 = vector.broadcast %cst_22 : f32 to vector<1x128xf32>
    %58 = arith.mulf %56, %57 : vector<1x128xf32>
    %59 = arith.mulf %53, %53 : vector<1x128xf32>
    %60 = arith.subf %58, %59 : vector<1x128xf32>
    %cst_23 = arith.constant 0.000000e+00 : f32
    %61 = vector.broadcast %cst_23 : f32 to vector<1x128xf32>
    %62 = arith.maximumf %60, %61 : vector<1x128xf32>
    %c5 = arith.constant 5 : index
    %c0_24 = arith.constant 0 : index
    %63 = vector.load %arg3[%c5, %c0_24] : memref<7x128xf32, #tpu.memory_space<vmem>>, vector<1x128xf32>
    %cst_25 = arith.constant 9.99999974E-6 : f32
    %64 = vector.broadcast %cst_25 : f32 to vector<1x128xf32>
    %65 = arith.addf %62, %64 : vector<1x128xf32>
    %66 = math.rsqrt %65 : vector<1x128xf32>
    %67 = arith.mulf %63, %66 : vector<1x128xf32>
    %c6 = arith.constant 6 : index
    %c0_26 = arith.constant 0 : index
    %68 = vector.load %arg3[%c6, %c0_26] : memref<7x128xf32, #tpu.memory_space<vmem>>, vector<1x128xf32>
    %69 = arith.mulf %53, %67 : vector<1x128xf32>
    %70 = arith.subf %68, %69 : vector<1x128xf32>
    %71 = vector.extract_strided_slice %0 {offsets = [0, 0], sizes = [1000, 32], strides = [1, 1]} : vector<1000x40xf32> to vector<1000x32xf32>
    %72 = vector.extract_strided_slice %49 {offsets = [0, 0], sizes = [1000, 32], strides = [1, 1]} : vector<1000x128xf32> to vector<1000x32xf32>
    %73 = vector.extract_strided_slice %67 {offsets = [0, 0], sizes = [1, 32], strides = [1, 1]} : vector<1x128xf32> to vector<1x32xf32>
    %74 = vector.broadcast %73 : vector<1x32xf32> to vector<1000x32xf32>
    %75 = arith.mulf %72, %74 : vector<1000x32xf32>
    %76 = vector.extract_strided_slice %70 {offsets = [0, 0], sizes = [1, 32], strides = [1, 1]} : vector<1x128xf32> to vector<1x32xf32>
    %77 = vector.broadcast %76 : vector<1x32xf32> to vector<1000x32xf32>
    %78 = arith.addf %75, %77 : vector<1000x32xf32>
    %79 = arith.addf %78, %71 : vector<1000x32xf32>
    %cst_27 = arith.constant 0.000000e+00 : f32
    %80 = vector.broadcast %cst_27 : f32 to vector<1000x32xf32>
    %81 = arith.maximumf %79, %80 : vector<1000x32xf32>
    %c0_28 = arith.constant 0 : index
    %c0_29 = arith.constant 0 : index
    %82 = vector.load %arg4[%c0_28, %c0_29] : memref<1000x32xf32, #tpu.memory_space<vmem>>, vector<1000x32xf32>
    tpu.vector_store %arg4[%c0_28, %c0_29], %81 {strides = array<i32>} : memref<1000x32xf32, #tpu.memory_space<vmem>>, vector<1000x32xf32>,
    return
  }
}

</mosaic_0001>

<llo_original>
// kernel: residual_block_with_points.1
$region0: #{residual_block_with_points.1}
  #allocation0 [shape = 'u32[]', space=smem, size = 0x4, offset = 0x4, fixed_abs, tag = 'smem constant byte address 0x4 - core index']
  #allocation1 [shape = 'u32[144,128]{1,0:T(1,128)}', space=vmem, size = 0x12000, scoped, tag = 'internal scratch']
  %s0 = inlined_call_operand.vmem [shape: f32[1000,40], index: 0, kind: input, shape index: {}]
  %s1 = inlined_call_operand.vmem [shape: f32[40,128], index: 1, kind: input, shape index: {}]
  %s2 = inlined_call_operand.vmem [shape: f32[128,128], index: 2, kind: input, shape index: {}]
  %s3 = inlined_call_operand.vmem [shape: f32[7,128], index: 3, kind: input, shape index: {}]
  %s4 = inlined_call_operand.vmem [shape: f32[1000,32], index: 4, kind: output, shape index: {}]
  %s5 = sld [smem:[#allocation0]]
  $region26: #{residual_block_with_points.1} parent=0
    _
  %s7 = ssub.s32 1, %s5
  %s8 = scalar_select 0, %s7, %s5
  // Predicated region
  $region2: #{residual_block_with_points.1} parent=0 // pred_check
    _
  $region3: #{residual_block_with_points.1} parent=0 // pred_check_branch
    %10 = sbr.rel (0) target = $region5
  $region4: #{residual_block_with_points.1} parent=0 // pred_region
    _
  $region5: #{residual_block_with_points.1} parent=0 // pred_fallthru
    _
  // Predicated region
  $region6: #{residual_block_with_points.1} parent=0 // pred_check
    _
  $region7: #{residual_block_with_points.1} parent=0 // pred_check_branch
    %12 = sbr.rel (0) target = $region9
  $region8: #{residual_block_with_points.1} parent=0 // pred_region
    _
  $region9: #{residual_block_with_points.1} parent=0 // pred_fallthru
    _
  // Predicated region
  $region10: #{residual_block_with_points.1} parent=0 // pred_check
    _
  $region11: #{residual_block_with_points.1} parent=0 // pred_check_branch
    %14 = sbr.rel (0) target = $region13
  $region12: #{residual_block_with_points.1} parent=0 // pred_region
    _
  $region13: #{residual_block_with_points.1} parent=0 // pred_fallthru
    _
  // Predicated region
  $region14: #{residual_block_with_points.1} parent=0 // pred_check
    _
  $region15: #{residual_block_with_points.1} parent=0 // pred_check_branch
    %16 = sbr.rel (0) target = $region17
  $region16: #{residual_block_with_points.1} parent=0 // pred_region
    _
  $region17: #{residual_block_with_points.1} parent=0 // pred_fallthru
    _
  %v17 = vld [vmem:[%s0] sm:$0xff]
  %v18 = vld [vmem:[%s0 + $0x8] sm:$0xff]
  %v19 = vld [vmem:[%s0 + $0x10] sm:$0xff]
  %v20 = vld [vmem:[%s0 + $0x18] sm:$0xff]
  %v21 = vld [vmem:[%s0 + $0x20] sm:$0xff]
  %v22 = vld [vmem:[%s0 + $0x28] sm:$0xff]
  %v23 = vld [vmem:[%s0 + $0x30] sm:$0xff]
  %v24 = vld [vmem:[%s0 + $0x38] sm:$0xff]
  %v25 = vld [vmem:[%s0 + $0x40] sm:$0xff]
  %v26 = vld [vmem:[%s0 + $0x48] sm:$0xff]
  %v27 = vld [vmem:[%s0 + $0x50] sm:$0xff]
  %v28 = vld [vmem:[%s0 + $0x58] sm:$0xff]
  %v29 = vld [vmem:[%s0 + $0x60] sm:$0xff]
  %v30 = vld [vmem:[%s0 + $0x68] sm:$0xff]
  %v31 = vld [vmem:[%s0 + $0x70] sm:$0xff]
  %v32 = vld [vmem:[%s0 + $0x78] sm:$0xff]
  %v33 = vld [vmem:[%s0 + $0x80] sm:$0xff]
  %v34 = vld [vmem:[%s0 + $0x88] sm:$0xff]
  %v35 = vld [vmem:[%s0 + $0x90] sm:$0xff]
  %v36 = vld [vmem:[%s0 + $0x98] sm:$0xff]
  %v37 = vld [vmem:[%s0 + $0xa0] sm:$0xff]
  %v38 = vld [vmem:[%s0 + $0xa8] sm:$0xff]
  %v39 = vld [vmem:[%s0 + $0xb0] sm:$0xff]
  %v40 = vld [vmem:[%s0 + $0xb8] sm:$0xff]
  %v41 = vld [vmem:[%s0 + $0xc0] sm:$0xff]
  %v42 = vld [vmem:[%s0 + $0xc8] sm:$0xff]
  %v43 = vld [vmem:[%s0 + $0xd0] sm:$0xff]
  %v44 = vld [vmem:[%s0 + $0xd8] sm:$0xff]
  %v45 = vld [vmem:[%s0 + $0xe0] sm:$0xff]
  %v46 = vld [vmem:[%s0 + $0xe8] sm:$0xff]
  %v47 = vld [vmem:[%s0 + $0xf0] sm:$0xff]
  %v48 = vld [vmem:[%s0 + $0xf8] sm:$0xff]
  %v49 = vld [vmem:[%s0 + $0x100] sm:$0xff]
  %v50 = vld [vmem:[%s0 + $0x108] sm:$0xff]
  %v51 = vld [vmem:[%s0 + $0x110] sm:$0xff]
  %v52 = vld [vmem:[%s0 + $0x118] sm:$0xff]
  %v53 = vld [vmem:[%s0 + $0x120] sm:$0xff]
  %v54 = vld [vmem:[%s0 + $0x128] sm:$0xff]
  %v55 = vld [vmem:[%s0 + $0x130] sm:$0xff]
  %v56 = vld [vmem:[%s0 + $0x138] sm:$0xff]
  %v57 = vld [vmem:[%s0 + $0x140] sm:$0xff]
  %v58 = vld [vmem:[%s0 + $0x148] sm:$0xff]
  %v59 = vld [vmem:[%s0 + $0x150] sm:$0xff]
  %v60 = vld [vmem:[%s0 + $0x158] sm:$0xff]
  %v61 = vld [vmem:[%s0 + $0x160] sm:$0xff]
  %v62 = vld [vmem:[%s0 + $0x168] sm:$0xff]
  %v63 = vld [vmem:[%s0 + $0x170] sm:$0xff]
  %v64 = vld [vmem:[%s0 + $0x178] sm:$0xff]
  %v65 = vld [vmem:[%s0 + $0x180] sm:$0xff]
  %v66 = vld [vmem:[%s0 + $0x188] sm:$0xff]
  %v67 = vld [vmem:[%s0 + $0x190] sm:$0xff]
  %v68 = vld [vmem:[%s0 + $0x198] sm:$0xff]
  %v69 = vld [vmem:[%s0 + $0x1a0] sm:$0xff]
  %v70 = vld [vmem:[%s0 + $0x1a8] sm:$0xff]
  %v71 = vld [vmem:[%s0 + $0x1b0] sm:$0xff]
  %v72 = vld [vmem:[%s0 + $0x1b8] sm:$0xff]
  %v73 = vld [vmem:[%s0 + $0x1c0] sm:$0xff]
  %v74 = vld [vmem:[%s0 + $0x1c8] sm:$0xff]
  %v75 = vld [vmem:[%s0 + $0x1d0] sm:$0xff]
  %v76 = vld [vmem:[%s0 + $0x1d8] sm:$0xff]
  %v77 = vld [vmem:[%s0 + $0x1e0] sm:$0xff]
  %v78 = vld [vmem:[%s0 + $0x1e8] sm:$0xff]
  %v79 = vld [vmem:[%s0 + $0x1f0] sm:$0xff]
  %v80 = vld [vmem:[%s0 + $0x1f8] sm:$0xff]
  %v81 = vld [vmem:[%s0 + $0x200] sm:$0xff]
  %v82 = vld [vmem:[%s0 + $0x208] sm:$0xff]
  %v83 = vld [vmem:[%s0 + $0x210] sm:$0xff]
  %v84 = vld [vmem:[%s0 + $0x218] sm:$0xff]
  %v85 = vld [vmem:[%s0 + $0x220] sm:$0xff]
  %v86 = vld [vmem:[%s0 + $0x228] sm:$0xff]
  %v87 = vld [vmem:[%s0 + $0x230] sm:$0xff]
  %v88 = vld [vmem:[%s0 + $0x238] sm:$0xff]
  %v89 = vld [vmem:[%s0 + $0x240] sm:$0xff]
  %v90 = vld [vmem:[%s0 + $0x248] sm:$0xff]
  %v91 = vld [vmem:[%s0 + $0x250] sm:$0xff]
  %v92 = vld [vmem:[%s0 + $0x258] sm:$0xff]
  %v93 = vld [vmem:[%s0 + $0x260] sm:$0xff]
  %v94 = vld [vmem:[%s0 + $0x268] sm:$0xff]
  %v95 = vld [vmem:[%s0 + $0x270] sm:$0xff]
  %v96 = vld [vmem:[%s0 + $0x278] sm:$0xff]
  %v97 = vld [vmem:[%s0 + $0x280] sm:$0xff]
  %v98 = vld [vmem:[%s0 + $0x288] sm:$0xff]
  %v99 = vld [vmem:[%s0 + $0x290] sm:$0xff]
  %v100 = vld [vmem:[%s0 + $0x298] sm:$0xff]
  %v101 = vld [vmem:[%s0 + $0x2a0] sm:$0xff]
  %v102 = vld [vmem:[%s0 + $0x2a8] sm:$0xff]
  %v103 = vld [vmem:[%s0 + $0x2b0] sm:$0xff]
  %v104 = vld [vmem:[%s0 + $0x2b8] sm:$0xff]
  %v105 = vld [vmem:[%s0 + $0x2c0] sm:$0xff]
  %v106 = vld [vmem:[%s0 + $0x2c8] sm:$0xff]
  %v107 = vld [vmem:[%s0 + $0x2d0] sm:$0xff]
  %v108 = vld [vmem:[%s0 + $0x2d8] sm:$0xff]
  %v109 = vld [vmem:[%s0 + $0x2e0] sm:$0xff]
  %v110 = vld [vmem:[%s0 + $0x2e8] sm:$0xff]
  %v111 = vld [vmem:[%s0 + $0x2f0] sm:$0xff]
  %v112 = vld [vmem:[%s0 + $0x2f8] sm:$0xff]
  %v113 = vld [vmem:[%s0 + $0x300] sm:$0xff]
  %v114 = vld [vmem:[%s0 + $0x308] sm:$0xff]
  %v115 = vld [vmem:[%s0 + $0x310] sm:$0xff]
  %v116 = vld [vmem:[%s0 + $0x318] sm:$0xff]
  %v117 = vld [vmem:[%s0 + $0x320] sm:$0xff]
  %v118 = vld [vmem:[%s0 + $0x328] sm:$0xff]
  %v119 = vld [vmem:[%s0 + $0x330] sm:$0xff]
  %v120 = vld [vmem:[%s0 + $0x338] sm:$0xff]
  %v121 = vld [vmem:[%s0 + $0x340] sm:$0xff]
  %v122 = vld [vmem:[%s0 + $0x348] sm:$0xff]
  %v123 = vld [vmem:[%s0 + $0x350] sm:$0xff]
  %v124 = vld [vmem:[%s0 + $0x358] sm:$0xff]
  %v125 = vld [vmem:[%s0 + $0x360] sm:$0xff]
  %v126 = vld [vmem:[%s0 + $0x368] sm:$0xff]
  %v127 = vld [vmem:[%s0 + $0x370] sm:$0xff]
  %v128 = vld [vmem:[%s0 + $0x378] sm:$0xff]
  %v129 = vld [vmem:[%s0 + $0x380] sm:$0xff]
  %v130 = vld [vmem:[%s0 + $0x388] sm:$0xff]
  %v131 = vld [vmem:[%s0 + $0x390] sm:$0xff]
  %v132 = vld [vmem:[%s0 + $0x398] sm:$0xff]
  %v133 = vld [vmem:[%s0 + $0x3a0] sm:$0xff]
  %v134 = vld [vmem:[%s0 + $0x3a8] sm:$0xff]
  %v135 = vld [vmem:[%s0 + $0x3b0] sm:$0xff]
  %v136 = vld [vmem:[%s0 + $0x3b8] sm:$0xff]
  %v137 = vld [vmem:[%s0 + $0x3c0] sm:$0xff]
  %v138 = vld [vmem:[%s0 + $0x3c8] sm:$0xff]
  %v139 = vld [vmem:[%s0 + $0x3d0] sm:$0xff]
  %v140 = vld [vmem:[%s0 + $0x3d8] sm:$0xff]
  %v141 = vld [vmem:[%s0 + $0x3e0] sm:$0xff]
  %v142 = vld [vmem:[%s1] sm:$0xff]
  %v143 = vld [vmem:[%s1 + $0x8] sm:$0xff]
  %v144 = vld [vmem:[%s1 + $0x10] sm:$0xff]
  %v145 = vld [vmem:[%s1 + $0x18] sm:$0xff]
  %v146 = vld [vmem:[%s1 + $0x20] sm:$0xff]
  %vm147 = vcmask 326656
  %v149 = vsel %vm147, %v17, 0
  %v152 = vsel %vm147, %v18, 0
  %v155 = vsel %vm147, %v19, 0
  %v158 = vsel %vm147, %v20, 0
  %v161 = vsel %vm147, %v21, 0
  %v164 = vsel %vm147, %v22, 0
  %v167 = vsel %vm147, %v23, 0
  %v170 = vsel %vm147, %v24, 0
  %v173 = vsel %vm147, %v25, 0
  %v176 = vsel %vm147, %v26, 0
  %v179 = vsel %vm147, %v27, 0
  %v182 = vsel %vm147, %v28, 0
  %v185 = vsel %vm147, %v29, 0
  %v188 = vsel %vm147, %v30, 0
  %v191 = vsel %vm147, %v31, 0
  %v194 = vsel %vm147, %v32, 0
  %v197 = vsel %vm147, %v33, 0
  %v200 = vsel %vm147, %v34, 0
  %v203 = vsel %vm147, %v35, 0
  %v206 = vsel %vm147, %v36, 0
  %v209 = vsel %vm147, %v37, 0
  %v212 = vsel %vm147, %v38, 0
  %v215 = vsel %vm147, %v39, 0
  %v218 = vsel %vm147, %v40, 0
  %v221 = vsel %vm147, %v41, 0
  %v224 = vsel %vm147, %v42, 0
  %v227 = vsel %vm147, %v43, 0
  %v230 = vsel %vm147, %v44, 0
  %v233 = vsel %vm147, %v45, 0
  %v236 = vsel %vm147, %v46, 0
  %v239 = vsel %vm147, %v47, 0
  %v242 = vsel %vm147, %v48, 0
  %v245 = vsel %vm147, %v49, 0
  %v248 = vsel %vm147, %v50, 0
  %v251 = vsel %vm147, %v51, 0
  %v254 = vsel %vm147, %v52, 0
  %v257 = vsel %vm147, %v53, 0
  %v260 = vsel %vm147, %v54, 0
  %v263 = vsel %vm147, %v55, 0
  %v266 = vsel %vm147, %v56, 0
  %v269 = vsel %vm147, %v57, 0
  %v272 = vsel %vm147, %v58, 0
  %v275 = vsel %vm147, %v59, 0
  %v278 = vsel %vm147, %v60, 0
  %v281 = vsel %vm147, %v61, 0
  %v284 = vsel %vm147, %v62, 0
  %v287 = vsel %vm147, %v63, 0
  %v290 = vsel %vm147, %v64, 0
  %v293 = vsel %vm147, %v65, 0
  %v296 = vsel %vm147, %v66, 0
  %v299 = vsel %vm147, %v67, 0
  %v302 = vsel %vm147, %v68, 0
  %v305 = vsel %vm147, %v69, 0
  %v308 = vsel %vm147, %v70, 0
  %v311 = vsel %vm147, %v71, 0
  %v314 = vsel %vm147, %v72, 0
  %v317 = vsel %vm147, %v73, 0
  %v320 = vsel %vm147, %v74, 0
  %v323 = vsel %vm147, %v75, 0
  %v326 = vsel %vm147, %v76, 0
  %v329 = vsel %vm147, %v77, 0
  %v332 = vsel %vm147, %v78, 0
  %v335 = vsel %vm147, %v79, 0
  %v338 = vsel %vm147, %v80, 0
  %v341 = vsel %vm147, %v81, 0
  %v344 = vsel %vm147, %v82, 0
  %v347 = vsel %vm147, %v83, 0
  %v350 = vsel %vm147, %v84, 0
  %v353 = vsel %vm147, %v85, 0
  %v356 = vsel %vm147, %v86, 0
  %v359 = vsel %vm147, %v87, 0
  %v362 = vsel %vm147, %v88, 0
  %v365 = vsel %vm147, %v89, 0
  %v368 = vsel %vm147, %v90, 0
  %v371 = vsel %vm147, %v91, 0
  %v374 = vsel %vm147, %v92, 0
  %v377 = vsel %vm147, %v93, 0
  %v380 = vsel %vm147, %v94, 0
  %v383 = vsel %vm147, %v95, 0
  %v386 = vsel %vm147, %v96, 0
  %v389 = vsel %vm147, %v97, 0
  %v392 = vsel %vm147, %v98, 0
  %v395 = vsel %vm147, %v99, 0
  %v398 = vsel %vm147, %v100, 0
  %v401 = vsel %vm147, %v101, 0
  %v404 = vsel %vm147, %v102, 0
  %v407 = vsel %vm147, %v103, 0
  %v410 = vsel %vm147, %v104, 0
  %v413 = vsel %vm147, %v105, 0
  %v416 = vsel %vm147, %v106, 0
  %v419 = vsel %vm147, %v107, 0
  %v422 = vsel %vm147, %v108, 0
  %v425 = vsel %vm147, %v109, 0
  %v428 = vsel %vm147, %v110, 0
  %v431 = vsel %vm147, %v111, 0
  %v434 = vsel %vm147, %v112, 0
  %v437 = vsel %vm147, %v113, 0
  %v440 = vsel %vm147, %v114, 0
  %v443 = vsel %vm147, %v115, 0
  %v446 = vsel %vm147, %v116, 0
  %v449 = vsel %vm147, %v117, 0
  %v452 = vsel %vm147, %v118, 0
  %v455 = vsel %vm147, %v119, 0
  %v458 = vsel %vm147, %v120, 0
  %v461 = vsel %vm147, %v121, 0
  %v464 = vsel %vm147, %v122, 0
  %v467 = vsel %vm147, %v123, 0
  %v470 = vsel %vm147, %v124, 0
  %v473 = vsel %vm147, %v125, 0
  %v476 = vsel %vm147, %v126, 0
  %v479 = vsel %vm147, %v127, 0
  %v482 = vsel %vm147, %v128, 0
  %v485 = vsel %vm147, %v129, 0
  %v488 = vsel %vm147, %v130, 0
  %v491 = vsel %vm147, %v131, 0
  %v494 = vsel %vm147, %v132, 0
  %v497 = vsel %vm147, %v133, 0
  %v500 = vsel %vm147, %v134, 0
  %v503 = vsel %vm147, %v135, 0
  %v506 = vsel %vm147, %v136, 0
  %v509 = vsel %vm147, %v137, 0
  %v512 = vsel %vm147, %v138, 0
  %v515 = vsel %vm147, %v139, 0
  %v518 = vsel %vm147, %v140, 0
  %v521 = vsel %vm147, %v141, 0
  %523 = vmatprep.subr.mxu0 0.0
  %524 = vmatpush1.msra.mxu0 0.0
  %525 = vmatprep.subr.mxu0 0.0
  %526 = vmatpush1.msra.mxu0 0.0
  %527 = vmatprep.subr.mxu0 0.0
  %528 = vmatpush1.msra.mxu0 0.0
  %529 = vmatprep.subr.mxu0 0.0
  %530 = vmatpush1.msra.mxu0 0.0
  %531 = vmatprep.subr.mxu0 0.0
  %532 = vmatpush1.msra.mxu0 0.0
  %533 = vmatprep.subr.mxu0 0.0
  %534 = vmatpush1.msra.mxu0 0.0
  %535 = vmatprep.subr.mxu0 0.0
  %536 = vmatpush1.msra.mxu0 0.0
  %537 = vmatprep.subr.mxu0 0.0
  %538 = vmatpush1.msra.mxu0 0.0
  %539 = vmatprep.subr.mxu0 0.0
  %540 = vmatpush1.msra.mxu0 0.0
  %541 = vmatprep.subr.mxu0 0.0
  %542 = vmatpush1.msra.mxu0 0.0
  %543 = vmatprep.subr.mxu0 0.0
  %544 = vmatpush1.msra.mxu0 0.0
  %545 = vmatprep.subr.mxu0 0.0
  %546 = vmatpush1.msra.mxu0 %v146
  %547 = vmatprep.subr.mxu0 0.0
  %548 = vmatpush1.msra.mxu0 %v145
  %549 = vmatprep.subr.mxu0 0.0
  %550 = vmatpush1.msra.mxu0 %v144
  %551 = vmatprep.subr.mxu0 0.0
  %552 = vmatpush1.msra.mxu0 %v143
  %553 = vmatprep.subr.mxu0 0.0
  %554 = vmatpush1.msra.mxu0 %v142
  %555 = vmatprep.subr.mxu0 0.0
  %556 = vmatpush2.msra.mxu0 0.0
  %557 = vmatprep.subr.mxu0 0.0
  %558 = vmatpush2.msra.mxu0 0.0
  %559 = vmatprep.subr.mxu0 0.0
  %560 = vmatpush2.msra.mxu0 0.0
  %561 = vmatprep.subr.mxu0 0.0
  %562 = vmatpush2.msra.mxu0 0.0
  %563 = vmatprep.subr.mxu0 0.0
  %564 = vmatpush2.msra.mxu0 0.0
  %565 = vmatprep.subr.mxu0 0.0
  %566 = vmatpush2.msra.mxu0 0.0
  %567 = vmatprep.subr.mxu0 0.0
  %568 = vmatpush2.msra.mxu0 0.0
  %569 = vmatprep.subr.mxu0 0.0
  %570 = vmatpush2.msra.mxu0 0.0
  %571 = vmatprep.subr.mxu0 0.0
  %572 = vmatpush2.msra.mxu0 0.0
  %573 = vmatprep.subr.mxu0 0.0
  %574 = vmatpush2.msra.mxu0 0.0
  %575 = vmatprep.subr.mxu0 0.0
  %576 = vmatpush2.msra.mxu0 0.0
  %577 = vmatprep.subr.mxu0 0.0
  %578 = vmatpush2.msra.mxu0 0.0
  %579 = vmatprep.subr.mxu0 0.0
  %580 = vmatpush2.msra.mxu0 0.0
  %581 = vmatprep.subr.mxu0 0.0
  %582 = vmatpush2.msra.mxu0 0.0
  %583 = vmatprep.subr.mxu0 0.0
  %584 = vmatpush2.msra.mxu0 0.0
  %585 = vmatprep.subr.mxu0 0.0
  %586 = vmatpush2.msra.mxu0 0.0
  %587 = vmatprep.mubr.f32.mxu0 0.0
  %588 = vmatmul.mubr.f32.gmra.mxu0 %v149
  %v589 = vpop.f32.mrf.mxu0
  %v590 = vadd.f32 0.0, %v589
  %v591 = vpop.f32.mrf.mxu0
  %592 = vmatprep.mubr.f32.mxu0 0.0
  %593 = vmatmul.mubr.f32.gmra.mxu0 %v152
  %v594 = vpop.f32.mrf.mxu0
  %v595 = vadd.f32 0.0, %v594
  %v596 = vpop.f32.mrf.mxu0
  %597 = vmatprep.mubr.f32.mxu0 0.0
  %598 = vmatmul.mubr.f32.gmra.mxu0 %v155
  %v599 = vpop.f32.mrf.mxu0
  %v600 = vadd.f32 0.0, %v599
  %v601 = vpop.f32.mrf.mxu0
  %602 = vmatprep.mubr.f32.mxu0 0.0
  %603 = vmatmul.mubr.f32.gmra.mxu0 %v158
  %v604 = vpop.f32.mrf.mxu0
  %v605 = vadd.f32 0.0, %v604
  %v606 = vpop.f32.mrf.mxu0
  %607 = vmatprep.mubr.f32.mxu0 0.0
  %608 = vmatmul.mubr.f32.gmra.mxu0 %v161
  %v609 = vpop.f32.mrf.mxu0
  %v610 = vadd.f32 0.0, %v609
  %v611 = vpop.f32.mrf.mxu0
  %612 = vmatprep.mubr.f32.mxu0 0.0
  %613 = vmatmul.mubr.f32.gmra.mxu0 %v164
  %v614 = vpop.f32.mrf.mxu0
  %v615 = vadd.f32 0.0, %v614
  %v616 = vpop.f32.mrf.mxu0
  %617 = vmatprep.mubr.f32.mxu0 0.0
  %618 = vmatmul.mubr.f32.gmra.mxu0 %v167
  %v619 = vpop.f32.mrf.mxu0
  %v620 = vadd.f32 0.0, %v619
  %v621 = vpop.f32.mrf.mxu0
  %622 = vmatprep.mubr.f32.mxu0 0.0
  %623 = vmatmul.mubr.f32.gmra.mxu0 %v170
  %v624 = vpop.f32.mrf.mxu0
  %v625 = vadd.f32 0.0, %v624
  %v626 = vpop.f32.mrf.mxu0
  %627 = vmatprep.mubr.f32.mxu0 0.0
  %628 = vmatmul.mubr.f32.gmra.mxu0 %v173
  %v629 = vpop.f32.mrf.mxu0
  %v630 = vadd.f32 0.0, %v629
  %v631 = vpop.f32.mrf.mxu0
  %632 = vmatprep.mubr.f32.mxu0 0.0
  %633 = vmatmul.mubr.f32.gmra.mxu0 %v176
  %v634 = vpop.f32.mrf.mxu0
  %v635 = vadd.f32 0.0, %v634
  %v636 = vpop.f32.mrf.mxu0
  %637 = vmatprep.mubr.f32.mxu0 0.0
  %638 = vmatmul.mubr.f32.gmra.mxu0 %v179
  %v639 = vpop.f32.mrf.mxu0
  %v640 = vadd.f32 0.0, %v639
  %v641 = vpop.f32.mrf.mxu0
  %642 = vmatprep.mubr.f32.mxu0 0.0
  %643 = vmatmul.mubr.f32.gmra.mxu0 %v182
  %v644 = vpop.f32.mrf.mxu0
  %v645 = vadd.f32 0.0, %v644
  %v646 = vpop.f32.mrf.mxu0
  %647 = vmatprep.mubr.f32.mxu0 0.0
  %648 = vmatmul.mubr.f32.gmra.mxu0 %v185
  %v649 = vpop.f32.mrf.mxu0
  %v650 = vadd.f32 0.0, %v649
  %v651 = vpop.f32.mrf.mxu0
  %652 = vmatprep.mubr.f32.mxu0 0.0
  %653 = vmatmul.mubr.f32.gmra.mxu0 %v188
  %v654 = vpop.f32.mrf.mxu0
  %v655 = vadd.f32 0.0, %v654
  %v656 = vpop.f32.mrf.mxu0
  %657 = vmatprep.mubr.f32.mxu0 0.0
  %658 = vmatmul.mubr.f32.gmra.mxu0 %v191
  %v659 = vpop.f32.mrf.mxu0
  %v660 = vadd.f32 0.0, %v659
  %v661 = vpop.f32.mrf.mxu0
  %662 = vmatprep.mubr.f32.mxu0 0.0
  %663 = vmatmul.mubr.f32.gmra.mxu0 %v194
  %v664 = vpop.f32.mrf.mxu0
  %v665 = vadd.f32 0.0, %v664
  %v666 = vpop.f32.mrf.mxu0
  %667 = vmatprep.mubr.f32.mxu0 0.0
  %668 = vmatmul.mubr.f32.gmra.mxu0 %v197
  %v669 = vpop.f32.mrf.mxu0
  %v670 = vadd.f32 0.0, %v669
  %v671 = vpop.f32.mrf.mxu0
  %672 = vmatprep.mubr.f32.mxu0 0.0
  %673 = vmatmul.mubr.f32.gmra.mxu0 %v200
  %v674 = vpop.f32.mrf.mxu0
  %v675 = vadd.f32 0.0, %v674
  %v676 = vpop.f32.mrf.mxu0
  %677 = vmatprep.mubr.f32.mxu0 0.0
  %678 = vmatmul.mubr.f32.gmra.mxu0 %v203
  %v679 = vpop.f32.mrf.mxu0
  %v680 = vadd.f32 0.0, %v679
  %v681 = vpop.f32.mrf.mxu0
  %682 = vmatprep.mubr.f32.mxu0 0.0
  %683 = vmatmul.mubr.f32.gmra.mxu0 %v206
  %v684 = vpop.f32.mrf.mxu0
  %v685 = vadd.f32 0.0, %v684
  %v686 = vpop.f32.mrf.mxu0
  %687 = vmatprep.mubr.f32.mxu0 0.0
  %688 = vmatmul.mubr.f32.gmra.mxu0 %v209
  %v689 = vpop.f32.mrf.mxu0
  %v690 = vadd.f32 0.0, %v689
  %v691 = vpop.f32.mrf.mxu0
  %692 = vmatprep.mubr.f32.mxu0 0.0
  %693 = vmatmul.mubr.f32.gmra.mxu0 %v212
  %v694 = vpop.f32.mrf.mxu0
  %v695 = vadd.f32 0.0, %v694
  %v696 = vpop.f32.mrf.mxu0
  %697 = vmatprep.mubr.f32.mxu0 0.0
  %698 = vmatmul.mubr.f32.gmra.mxu0 %v215
  %v699 = vpop.f32.mrf.mxu0
  %v700 = vadd.f32 0.0, %v699
  %v701 = vpop.f32.mrf.mxu0
  %702 = vmatprep.mubr.f32.mxu0 0.0
  %703 = vmatmul.mubr.f32.gmra.mxu0 %v218
  %v704 = vpop.f32.mrf.mxu0
  %v705 = vadd.f32 0.0, %v704
  %v706 = vpop.f32.mrf.mxu0
  %707 = vmatprep.mubr.f32.mxu0 0.0
  %708 = vmatmul.mubr.f32.gmra.mxu0 %v221
  %v709 = vpop.f32.mrf.mxu0
  %v710 = vadd.f32 0.0, %v709
  %v711 = vpop.f32.mrf.mxu0
  %712 = vmatprep.mubr.f32.mxu0 0.0
  %713 = vmatmul.mubr.f32.gmra.mxu0 %v224
  %v714 = vpop.f32.mrf.mxu0
  %v715 = vadd.f32 0.0, %v714
  %v716 = vpop.f32.mrf.mxu0
  %717 = vmatprep.mubr.f32.mxu0 0.0
  %718 = vmatmul.mubr.f32.gmra.mxu0 %v227
  %v719 = vpop.f32.mrf.mxu0
  %v720 = vadd.f32 0.0, %v719
  %v721 = vpop.f32.mrf.mxu0
  %722 = vmatprep.mubr.f32.mxu0 0.0
  %723 = vmatmul.mubr.f32.gmra.mxu0 %v230
  %v724 = vpop.f32.mrf.mxu0
  %v725 = vadd.f32 0.0, %v724
  %v726 = vpop.f32.mrf.mxu0
  %727 = vmatprep.mubr.f32.mxu0 0.0
  %728 = vmatmul.mubr.f32.gmra.mxu0 %v233
  %v729 = vpop.f32.mrf.mxu0
  %v730 = vadd.f32 0.0, %v729
  %v731 = vpop.f32.mrf.mxu0
  %732 = vmatprep.mubr.f32.mxu0 0.0
  %733 = vmatmul.mubr.f32.gmra.mxu0 %v236
  %v734 = vpop.f32.mrf.mxu0
  %v735 = vadd.f32 0.0, %v734
  %v736 = vpop.f32.mrf.mxu0
  %737 = vmatprep.mubr.f32.mxu0 0.0
  %738 = vmatmul.mubr.f32.gmra.mxu0 %v239
  %v739 = vpop.f32.mrf.mxu0
  %v740 = vadd.f32 0.0, %v739
  %v741 = vpop.f32.mrf.mxu0
  %742 = vmatprep.mubr.f32.mxu0 0.0
  %743 = vmatmul.mubr.f32.gmra.mxu0 %v242
  %v744 = vpop.f32.mrf.mxu0
  %v745 = vadd.f32 0.0, %v744
  %v746 = vpop.f32.mrf.mxu0
  %747 = vmatprep.mubr.f32.mxu0 0.0
  %748 = vmatmul.mubr.f32.gmra.mxu0 %v245
  %v749 = vpop.f32.mrf.mxu0
  %v750 = vadd.f32 0.0, %v749
  %v751 = vpop.f32.mrf.mxu0
  %752 = vmatprep.mubr.f32.mxu0 0.0
  %753 = vmatmul.mubr.f32.gmra.mxu0 %v248
  %v754 = vpop.f32.mrf.mxu0
  %v755 = vadd.f32 0.0, %v754
  %v756 = vpop.f32.mrf.mxu0
  %757 = vmatprep.mubr.f32.mxu0 0.0
  %758 = vmatmul.mubr.f32.gmra.mxu0 %v251
  %v759 = vpop.f32.mrf.mxu0
  %v760 = vadd.f32 0.0, %v759
  %v761 = vpop.f32.mrf.mxu0
  %762 = vmatprep.mubr.f32.mxu0 0.0
  %763 = vmatmul.mubr.f32.gmra.mxu0 %v254
  %v764 = vpop.f32.mrf.mxu0
  %v765 = vadd.f32 0.0, %v764
  %v766 = vpop.f32.mrf.mxu0
  %767 = vmatprep.mubr.f32.mxu0 0.0
  %768 = vmatmul.mubr.f32.gmra.mxu0 %v257
  %v769 = vpop.f32.mrf.mxu0
  %v770 = vadd.f32 0.0, %v769
  %v771 = vpop.f32.mrf.mxu0
  %772 = vmatprep.mubr.f32.mxu0 0.0
  %773 = vmatmul.mubr.f32.gmra.mxu0 %v260
  %v774 = vpop.f32.mrf.mxu0
  %v775 = vadd.f32 0.0, %v774
  %v776 = vpop.f32.mrf.mxu0
  %777 = vmatprep.mubr.f32.mxu0 0.0
  %778 = vmatmul.mubr.f32.gmra.mxu0 %v263
  %v779 = vpop.f32.mrf.mxu0
  %v780 = vadd.f32 0.0, %v779
  %v781 = vpop.f32.mrf.mxu0
  %782 = vmatprep.mubr.f32.mxu0 0.0
  %783 = vmatmul.mubr.f32.gmra.mxu0 %v266
  %v784 = vpop.f32.mrf.mxu0
  %v785 = vadd.f32 0.0, %v784
  %v786 = vpop.f32.mrf.mxu0
  %787 = vmatprep.mubr.f32.mxu0 0.0
  %788 = vmatmul.mubr.f32.gmra.mxu0 %v269
  %v789 = vpop.f32.mrf.mxu0
  %v790 = vadd.f32 0.0, %v789
  %v791 = vpop.f32.mrf.mxu0
  %792 = vmatprep.mubr.f32.mxu0 0.0
  %793 = vmatmul.mubr.f32.gmra.mxu0 %v272
  %v794 = vpop.f32.mrf.mxu0
  %v795 = vadd.f32 0.0, %v794
  %v796 = vpop.f32.mrf.mxu0
  %797 = vmatprep.mubr.f32.mxu0 0.0
  %798 = vmatmul.mubr.f32.gmra.mxu0 %v275
  %v799 = vpop.f32.mrf.mxu0
  %v800 = vadd.f32 0.0, %v799
  %v801 = vpop.f32.mrf.mxu0
  %802 = vmatprep.mubr.f32.mxu0 0.0
  %803 = vmatmul.mubr.f32.gmra.mxu0 %v278
  %v804 = vpop.f32.mrf.mxu0
  %v805 = vadd.f32 0.0, %v804
  %v806 = vpop.f32.mrf.mxu0
  %807 = vmatprep.mubr.f32.mxu0 0.0
  %808 = vmatmul.mubr.f32.gmra.mxu0 %v281
  %v809 = vpop.f32.mrf.mxu0
  %v810 = vadd.f32 0.0, %v809
  %v811 = vpop.f32.mrf.mxu0
  %812 = vmatprep.mubr.f32.mxu0 0.0
  %813 = vmatmul.mubr.f32.gmra.mxu0 %v284
  %v814 = vpop.f32.mrf.mxu0
  %v815 = vadd.f32 0.0, %v814
  %v816 = vpop.f32.mrf.mxu0
  %817 = vmatprep.mubr.f32.mxu0 0.0
  %818 = vmatmul.mubr.f32.gmra.mxu0 %v287
  %v819 = vpop.f32.mrf.mxu0
  %v820 = vadd.f32 0.0, %v819
  %v821 = vpop.f32.mrf.mxu0
  %822 = vmatprep.mubr.f32.mxu0 0.0
  %823 = vmatmul.mubr.f32.gmra.mxu0 %v290
  %v824 = vpop.f32.mrf.mxu0
  %v825 = vadd.f32 0.0, %v824
  %v826 = vpop.f32.mrf.mxu0
  %827 = vmatprep.mubr.f32.mxu0 0.0
  %828 = vmatmul.mubr.f32.gmra.mxu0 %v293
  %v829 = vpop.f32.mrf.mxu0
  %v830 = vadd.f32 0.0, %v829
  %v831 = vpop.f32.mrf.mxu0
  %832 = vmatprep.mubr.f32.mxu0 0.0
  %833 = vmatmul.mubr.f32.gmra.mxu0 %v296
  %v834 = vpop.f32.mrf.mxu0
  %v835 = vadd.f32 0.0, %v834
  %v836 = vpop.f32.mrf.mxu0
  %837 = vmatprep.mubr.f32.mxu0 0.0
  %838 = vmatmul.mubr.f32.gmra.mxu0 %v299
  %v839 = vpop.f32.mrf.mxu0
  %v840 = vadd.f32 0.0, %v839
  %v841 = vpop.f32.mrf.mxu0
  %842 = vmatprep.mubr.f32.mxu0 0.0
  %843 = vmatmul.mubr.f32.gmra.mxu0 %v302
  %v844 = vpop.f32.mrf.mxu0
  %v845 = vadd.f32 0.0, %v844
  %v846 = vpop.f32.mrf.mxu0
  %847 = vmatprep.mubr.f32.mxu0 0.0
  %848 = vmatmul.mubr.f32.gmra.mxu0 %v305
  %v849 = vpop.f32.mrf.mxu0
  %v850 = vadd.f32 0.0, %v849
  %v851 = vpop.f32.mrf.mxu0
  %852 = vmatprep.mubr.f32.mxu0 0.0
  %853 = vmatmul.mubr.f32.gmra.mxu0 %v308
  %v854 = vpop.f32.mrf.mxu0
  %v855 = vadd.f32 0.0, %v854
  %v856 = vpop.f32.mrf.mxu0
  %857 = vmatprep.mubr.f32.mxu0 0.0
  %858 = vmatmul.mubr.f32.gmra.mxu0 %v311
  %v859 = vpop.f32.mrf.mxu0
  %v860 = vadd.f32 0.0, %v859
  %v861 = vpop.f32.mrf.mxu0
  %862 = vmatprep.mubr.f32.mxu0 0.0
  %863 = vmatmul.mubr.f32.gmra.mxu0 %v314
  %v864 = vpop.f32.mrf.mxu0
  %v865 = vadd.f32 0.0, %v864
  %v866 = vpop.f32.mrf.mxu0
  %867 = vmatprep.mubr.f32.mxu0 0.0
  %868 = vmatmul.mubr.f32.gmra.mxu0 %v317
  %v869 = vpop.f32.mrf.mxu0
  %v870 = vadd.f32 0.0, %v869
  %v871 = vpop.f32.mrf.mxu0
  %872 = vmatprep.mubr.f32.mxu0 0.0
  %873 = vmatmul.mubr.f32.gmra.mxu0 %v320
  %v874 = vpop.f32.mrf.mxu0
  %v875 = vadd.f32 0.0, %v874
  %v876 = vpop.f32.mrf.mxu0
  %877 = vmatprep.mubr.f32.mxu0 0.0
  %878 = vmatmul.mubr.f32.gmra.mxu0 %v323
  %v879 = vpop.f32.mrf.mxu0
  %v880 = vadd.f32 0.0, %v879
  %v881 = vpop.f32.mrf.mxu0
  %882 = vmatprep.mubr.f32.mxu0 0.0
  %883 = vmatmul.mubr.f32.gmra.mxu0 %v326
  %v884 = vpop.f32.mrf.mxu0
  %v885 = vadd.f32 0.0, %v884
  %v886 = vpop.f32.mrf.mxu0
  %887 = vmatprep.mubr.f32.mxu0 0.0
  %888 = vmatmul.mubr.f32.gmra.mxu0 %v329
  %v889 = vpop.f32.mrf.mxu0
  %v890 = vadd.f32 0.0, %v889
  %v891 = vpop.f32.mrf.mxu0
  %892 = vmatprep.mubr.f32.mxu0 0.0
  %893 = vmatmul.mubr.f32.gmra.mxu0 %v332
  %v894 = vpop.f32.mrf.mxu0
  %v895 = vadd.f32 0.0, %v894
  %v896 = vpop.f32.mrf.mxu0
  %897 = vmatprep.mubr.f32.mxu0 0.0
  %898 = vmatmul.mubr.f32.gmra.mxu0 %v335
  %v899 = vpop.f32.mrf.mxu0
  %v900 = vadd.f32 0.0, %v899
  %v901 = vpop.f32.mrf.mxu0
  %902 = vmatprep.mubr.f32.mxu0 0.0
  %903 = vmatmul.mubr.f32.gmra.mxu0 %v338
  %v904 = vpop.f32.mrf.mxu0
  %v905 = vadd.f32 0.0, %v904
  %v906 = vpop.f32.mrf.mxu0
  %907 = vmatprep.mubr.f32.mxu0 0.0
  %908 = vmatmul.mubr.f32.gmra.mxu0 %v341
  %v909 = vpop.f32.mrf.mxu0
  %v910 = vadd.f32 0.0, %v909
  %v911 = vpop.f32.mrf.mxu0
  %912 = vmatprep.mubr.f32.mxu0 0.0
  %913 = vmatmul.mubr.f32.gmra.mxu0 %v344
  %v914 = vpop.f32.mrf.mxu0
  %v915 = vadd.f32 0.0, %v914
  %v916 = vpop.f32.mrf.mxu0
  %917 = vmatprep.mubr.f32.mxu0 0.0
  %918 = vmatmul.mubr.f32.gmra.mxu0 %v347
  %v919 = vpop.f32.mrf.mxu0
  %v920 = vadd.f32 0.0, %v919
  %v921 = vpop.f32.mrf.mxu0
  %922 = vmatprep.mubr.f32.mxu0 0.0
  %923 = vmatmul.mubr.f32.gmra.mxu0 %v350
  %v924 = vpop.f32.mrf.mxu0
  %v925 = vadd.f32 0.0, %v924
  %v926 = vpop.f32.mrf.mxu0
  %927 = vmatprep.mubr.f32.mxu0 0.0
  %928 = vmatmul.mubr.f32.gmra.mxu0 %v353
  %v929 = vpop.f32.mrf.mxu0
  %v930 = vadd.f32 0.0, %v929
  %v931 = vpop.f32.mrf.mxu0
  %932 = vmatprep.mubr.f32.mxu0 0.0
  %933 = vmatmul.mubr.f32.gmra.mxu0 %v356
  %v934 = vpop.f32.mrf.mxu0
  %v935 = vadd.f32 0.0, %v934
  %v936 = vpop.f32.mrf.mxu0
  %937 = vmatprep.mubr.f32.mxu0 0.0
  %938 = vmatmul.mubr.f32.gmra.mxu0 %v359
  %v939 = vpop.f32.mrf.mxu0
  %v940 = vadd.f32 0.0, %v939
  %v941 = vpop.f32.mrf.mxu0
  %942 = vmatprep.mubr.f32.mxu0 0.0
  %943 = vmatmul.mubr.f32.gmra.mxu0 %v362
  %v944 = vpop.f32.mrf.mxu0
  %v945 = vadd.f32 0.0, %v944
  %v946 = vpop.f32.mrf.mxu0
  %947 = vmatprep.mubr.f32.mxu0 0.0
  %948 = vmatmul.mubr.f32.gmra.mxu0 %v365
  %v949 = vpop.f32.mrf.mxu0
  %v950 = vadd.f32 0.0, %v949
  %v951 = vpop.f32.mrf.mxu0
  %952 = vmatprep.mubr.f32.mxu0 0.0
  %953 = vmatmul.mubr.f32.gmra.mxu0 %v368
  %v954 = vpop.f32.mrf.mxu0
  %v955 = vadd.f32 0.0, %v954
  %v956 = vpop.f32.mrf.mxu0
  %957 = vmatprep.mubr.f32.mxu0 0.0
  %958 = vmatmul.mubr.f32.gmra.mxu0 %v371
  %v959 = vpop.f32.mrf.mxu0
  %v960 = vadd.f32 0.0, %v959
  %v961 = vpop.f32.mrf.mxu0
  %962 = vmatprep.mubr.f32.mxu0 0.0
  %963 = vmatmul.mubr.f32.gmra.mxu0 %v374
  %v964 = vpop.f32.mrf.mxu0
  %v965 = vadd.f32 0.0, %v964
  %v966 = vpop.f32.mrf.mxu0
  %967 = vmatprep.mubr.f32.mxu0 0.0
  %968 = vmatmul.mubr.f32.gmra.mxu0 %v377
  %v969 = vpop.f32.mrf.mxu0
  %v970 = vadd.f32 0.0, %v969
  %v971 = vpop.f32.mrf.mxu0
  %972 = vmatprep.mubr.f32.mxu0 0.0
  %973 = vmatmul.mubr.f32.gmra.mxu0 %v380
  %v974 = vpop.f32.mrf.mxu0
  %v975 = vadd.f32 0.0, %v974
  %v976 = vpop.f32.mrf.mxu0
  %977 = vmatprep.mubr.f32.mxu0 0.0
  %978 = vmatmul.mubr.f32.gmra.mxu0 %v383
  %v979 = vpop.f32.mrf.mxu0
  %v980 = vadd.f32 0.0, %v979
  %v981 = vpop.f32.mrf.mxu0
  %982 = vmatprep.mubr.f32.mxu0 0.0
  %983 = vmatmul.mubr.f32.gmra.mxu0 %v386
  %v984 = vpop.f32.mrf.mxu0
  %v985 = vadd.f32 0.0, %v984
  %v986 = vpop.f32.mrf.mxu0
  %987 = vmatprep.mubr.f32.mxu0 0.0
  %988 = vmatmul.mubr.f32.gmra.mxu0 %v389
  %v989 = vpop.f32.mrf.mxu0
  %v990 = vadd.f32 0.0, %v989
  %v991 = vpop.f32.mrf.mxu0
  %992 = vmatprep.mubr.f32.mxu0 0.0
  %993 = vmatmul.mubr.f32.gmra.mxu0 %v392
  %v994 = vpop.f32.mrf.mxu0
  %v995 = vadd.f32 0.0, %v994
  %v996 = vpop.f32.mrf.mxu0
  %997 = vmatprep.mubr.f32.mxu0 0.0
  %998 = vmatmul.mubr.f32.gmra.mxu0 %v395
  %v999 = vpop.f32.mrf.mxu0
  %v1000 = vadd.f32 0.0, %v999
  %v1001 = vpop.f32.mrf.mxu0
  %1002 = vmatprep.mubr.f32.mxu0 0.0
  %1003 = vmatmul.mubr.f32.gmra.mxu0 %v398
  %v1004 = vpop.f32.mrf.mxu0
  %v1005 = vadd.f32 0.0, %v1004
  %v1006 = vpop.f32.mrf.mxu0
  %1007 = vmatprep.mubr.f32.mxu0 0.0
  %1008 = vmatmul.mubr.f32.gmra.mxu0 %v401
  %v1009 = vpop.f32.mrf.mxu0
  %v1010 = vadd.f32 0.0, %v1009
  %v1011 = vpop.f32.mrf.mxu0
  %1012 = vmatprep.mubr.f32.mxu0 0.0
  %1013 = vmatmul.mubr.f32.gmra.mxu0 %v404
  %v1014 = vpop.f32.mrf.mxu0
  %v1015 = vadd.f32 0.0, %v1014
  %v1016 = vpop.f32.mrf.mxu0
  %1017 = vmatprep.mubr.f32.mxu0 0.0
  %1018 = vmatmul.mubr.f32.gmra.mxu0 %v407
  %v1019 = vpop.f32.mrf.mxu0
  %v1020 = vadd.f32 0.0, %v1019
  %v1021 = vpop.f32.mrf.mxu0
  %1022 = vmatprep.mubr.f32.mxu0 0.0
  %1023 = vmatmul.mubr.f32.gmra.mxu0 %v410
  %v1024 = vpop.f32.mrf.mxu0
  %v1025 = vadd.f32 0.0, %v1024
  %v1026 = vpop.f32.mrf.mxu0
  %1027 = vmatprep.mubr.f32.mxu0 0.0
  %1028 = vmatmul.mubr.f32.gmra.mxu0 %v413
  %v1029 = vpop.f32.mrf.mxu0
  %v1030 = vadd.f32 0.0, %v1029
  %v1031 = vpop.f32.mrf.mxu0
  %1032 = vmatprep.mubr.f32.mxu0 0.0
  %1033 = vmatmul.mubr.f32.gmra.mxu0 %v416
  %v1034 = vpop.f32.mrf.mxu0
  %v1035 = vadd.f32 0.0, %v1034
  %v1036 = vpop.f32.mrf.mxu0
  %1037 = vmatprep.mubr.f32.mxu0 0.0
  %1038 = vmatmul.mubr.f32.gmra.mxu0 %v419
  %v1039 = vpop.f32.mrf.mxu0
  %v1040 = vadd.f32 0.0, %v1039
  %v1041 = vpop.f32.mrf.mxu0
  %1042 = vmatprep.mubr.f32.mxu0 0.0
  %1043 = vmatmul.mubr.f32.gmra.mxu0 %v422
  %v1044 = vpop.f32.mrf.mxu0
  %v1045 = vadd.f32 0.0, %v1044
  %v1046 = vpop.f32.mrf.mxu0
  %1047 = vmatprep.mubr.f32.mxu0 0.0
  %1048 = vmatmul.mubr.f32.gmra.mxu0 %v425
  %v1049 = vpop.f32.mrf.mxu0
  %v1050 = vadd.f32 0.0, %v1049
  %v1051 = vpop.f32.mrf.mxu0
  %1052 = vmatprep.mubr.f32.mxu0 0.0
  %1053 = vmatmul.mubr.f32.gmra.mxu0 %v428
  %v1054 = vpop.f32.mrf.mxu0
  %v1055 = vadd.f32 0.0, %v1054
  %v1056 = vpop.f32.mrf.mxu0
  %1057 = vmatprep.mubr.f32.mxu0 0.0
  %1058 = vmatmul.mubr.f32.gmra.mxu0 %v431
  %v1059 = vpop.f32.mrf.mxu0
  %v1060 = vadd.f32 0.0, %v1059
  %v1061 = vpop.f32.mrf.mxu0
  %1062 = vmatprep.mubr.f32.mxu0 0.0
  %1063 = vmatmul.mubr.f32.gmra.mxu0 %v434
  %v1064 = vpop.f32.mrf.mxu0
  %v1065 = vadd.f32 0.0, %v1064
  %v1066 = vpop.f32.mrf.mxu0
  %1067 = vmatprep.mubr.f32.mxu0 0.0
  %1068 = vmatmul.mubr.f32.gmra.mxu0 %v437
  %v1069 = vpop.f32.mrf.mxu0
  %v1070 = vadd.f32 0.0, %v1069
  %v1071 = vpop.f32.mrf.mxu0
  %1072 = vmatprep.mubr.f32.mxu0 0.0
  %1073 = vmatmul.mubr.f32.gmra.mxu0 %v440
  %v1074 = vpop.f32.mrf.mxu0
  %v1075 = vadd.f32 0.0, %v1074
  %v1076 = vpop.f32.mrf.mxu0
  %1077 = vmatprep.mubr.f32.mxu0 0.0
  %1078 = vmatmul.mubr.f32.gmra.mxu0 %v443
  %v1079 = vpop.f32.mrf.mxu0
  %v1080 = vadd.f32 0.0, %v1079
  %v1081 = vpop.f32.mrf.mxu0
  %1082 = vmatprep.mubr.f32.mxu0 0.0
  %1083 = vmatmul.mubr.f32.gmra.mxu0 %v446
  %v1084 = vpop.f32.mrf.mxu0
  %v1085 = vadd.f32 0.0, %v1084
  %v1086 = vpop.f32.mrf.mxu0
  %1087 = vmatprep.mubr.f32.mxu0 0.0
  %1088 = vmatmul.mubr.f32.gmra.mxu0 %v449
  %v1089 = vpop.f32.mrf.mxu0
  %v1090 = vadd.f32 0.0, %v1089
  %v1091 = vpop.f32.mrf.mxu0
  %1092 = vmatprep.mubr.f32.mxu0 0.0
  %1093 = vmatmul.mubr.f32.gmra.mxu0 %v452
  %v1094 = vpop.f32.mrf.mxu0
  %v1095 = vadd.f32 0.0, %v1094
  %v1096 = vpop.f32.mrf.mxu0
  %1097 = vmatprep.mubr.f32.mxu0 0.0
  %1098 = vmatmul.mubr.f32.gmra.mxu0 %v455
  %v1099 = vpop.f32.mrf.mxu0
  %v1100 = vadd.f32 0.0, %v1099
  %v1101 = vpop.f32.mrf.mxu0
  %1102 = vmatprep.mubr.f32.mxu0 0.0
  %1103 = vmatmul.mubr.f32.gmra.mxu0 %v458
  %v1104 = vpop.f32.mrf.mxu0
  %v1105 = vadd.f32 0.0, %v1104
  %v1106 = vpop.f32.mrf.mxu0
  %1107 = vmatprep.mubr.f32.mxu0 0.0
  %1108 = vmatmul.mubr.f32.gmra.mxu0 %v461
  %v1109 = vpop.f32.mrf.mxu0
  %v1110 = vadd.f32 0.0, %v1109
  %v1111 = vpop.f32.mrf.mxu0
  %1112 = vmatprep.mubr.f32.mxu0 0.0
  %1113 = vmatmul.mubr.f32.gmra.mxu0 %v464
  %v1114 = vpop.f32.mrf.mxu0
  %v1115 = vadd.f32 0.0, %v1114
  %v1116 = vpop.f32.mrf.mxu0
  %1117 = vmatprep.mubr.f32.mxu0 0.0
  %1118 = vmatmul.mubr.f32.gmra.mxu0 %v467
  %v1119 = vpop.f32.mrf.mxu0
  %v1120 = vadd.f32 0.0, %v1119
  %v1121 = vpop.f32.mrf.mxu0
  %1122 = vmatprep.mubr.f32.mxu0 0.0
  %1123 = vmatmul.mubr.f32.gmra.mxu0 %v470
  %v1124 = vpop.f32.mrf.mxu0
  %v1125 = vadd.f32 0.0, %v1124
  %v1126 = vpop.f32.mrf.mxu0
  %1127 = vmatprep.mubr.f32.mxu0 0.0
  %1128 = vmatmul.mubr.f32.gmra.mxu0 %v473
  %v1129 = vpop.f32.mrf.mxu0
  %v1130 = vadd.f32 0.0, %v1129
  %v1131 = vpop.f32.mrf.mxu0
  %1132 = vmatprep.mubr.f32.mxu0 0.0
  %1133 = vmatmul.mubr.f32.gmra.mxu0 %v476
  %v1134 = vpop.f32.mrf.mxu0
  %v1135 = vadd.f32 0.0, %v1134
  %v1136 = vpop.f32.mrf.mxu0
  %1137 = vmatprep.mubr.f32.mxu0 0.0
  %1138 = vmatmul.mubr.f32.gmra.mxu0 %v479
  %v1139 = vpop.f32.mrf.mxu0
  %v1140 = vadd.f32 0.0, %v1139
  %v1141 = vpop.f32.mrf.mxu0
  %1142 = vmatprep.mubr.f32.mxu0 0.0
  %1143 = vmatmul.mubr.f32.gmra.mxu0 %v482
  %v1144 = vpop.f32.mrf.mxu0
  %v1145 = vadd.f32 0.0, %v1144
  %v1146 = vpop.f32.mrf.mxu0
  %1147 = vmatprep.mubr.f32.mxu0 0.0
  %1148 = vmatmul.mubr.f32.gmra.mxu0 %v485
  %v1149 = vpop.f32.mrf.mxu0
  %v1150 = vadd.f32 0.0, %v1149
  %v1151 = vpop.f32.mrf.mxu0
  %1152 = vmatprep.mubr.f32.mxu0 0.0
  %1153 = vmatmul.mubr.f32.gmra.mxu0 %v488
  %v1154 = vpop.f32.mrf.mxu0
  %v1155 = vadd.f32 0.0, %v1154
  %v1156 = vpop.f32.mrf.mxu0
  %1157 = vmatprep.mubr.f32.mxu0 0.0
  %1158 = vmatmul.mubr.f32.gmra.mxu0 %v491
  %v1159 = vpop.f32.mrf.mxu0
  %v1160 = vadd.f32 0.0, %v1159
  %v1161 = vpop.f32.mrf.mxu0
  %1162 = vmatprep.mubr.f32.mxu0 0.0
  %1163 = vmatmul.mubr.f32.gmra.mxu0 %v494
  %v1164 = vpop.f32.mrf.mxu0
  %v1165 = vadd.f32 0.0, %v1164
  %v1166 = vpop.f32.mrf.mxu0
  %1167 = vmatprep.mubr.f32.mxu0 0.0
  %1168 = vmatmul.mubr.f32.gmra.mxu0 %v497
  %v1169 = vpop.f32.mrf.mxu0
  %v1170 = vadd.f32 0.0, %v1169
  %v1171 = vpop.f32.mrf.mxu0
  %1172 = vmatprep.mubr.f32.mxu0 0.0
  %1173 = vmatmul.mubr.f32.gmra.mxu0 %v500
  %v1174 = vpop.f32.mrf.mxu0
  %v1175 = vadd.f32 0.0, %v1174
  %v1176 = vpop.f32.mrf.mxu0
  %1177 = vmatprep.mubr.f32.mxu0 0.0
  %1178 = vmatmul.mubr.f32.gmra.mxu0 %v503
  %v1179 = vpop.f32.mrf.mxu0
  %v1180 = vadd.f32 0.0, %v1179
  %v1181 = vpop.f32.mrf.mxu0
  %1182 = vmatprep.mubr.f32.mxu0 0.0
  %1183 = vmatmul.mubr.f32.gmra.mxu0 %v506
  %v1184 = vpop.f32.mrf.mxu0
  %v1185 = vadd.f32 0.0, %v1184
  %v1186 = vpop.f32.mrf.mxu0
  %1187 = vmatprep.mubr.f32.mxu0 0.0
  %1188 = vmatmul.mubr.f32.gmra.mxu0 %v509
  %v1189 = vpop.f32.mrf.mxu0
  %v1190 = vadd.f32 0.0, %v1189
  %v1191 = vpop.f32.mrf.mxu0
  %1192 = vmatprep.mubr.f32.mxu0 0.0
  %1193 = vmatmul.mubr.f32.gmra.mxu0 %v512
  %v1194 = vpop.f32.mrf.mxu0
  %v1195 = vadd.f32 0.0, %v1194
  %v1196 = vpop.f32.mrf.mxu0
  %1197 = vmatprep.mubr.f32.mxu0 0.0
  %1198 = vmatmul.mubr.f32.gmra.mxu0 %v515
  %v1199 = vpop.f32.mrf.mxu0
  %v1200 = vadd.f32 0.0, %v1199
  %v1201 = vpop.f32.mrf.mxu0
  %1202 = vmatprep.mubr.f32.mxu0 0.0
  %1203 = vmatmul.mubr.f32.gmra.mxu0 %v518
  %v1204 = vpop.f32.mrf.mxu0
  %v1205 = vadd.f32 0.0, %v1204
  %v1206 = vpop.f32.mrf.mxu0
  %1207 = vmatprep.mubr.f32.mxu0 0.0
  %1208 = vmatmul.mubr.f32.gmra.mxu0 %v521
  %v1209 = vpop.f32.mrf.mxu0
  %v1210 = vadd.f32 0.0, %v1209
  %v1211 = vpop.f32.mrf.mxu0
  %1212 = vdwg.mxu0
  %v1213 = vadd.f32 %v590, %v595
  %v1214 = vadd.f32 %v1213, %v600
  %v1215 = vadd.f32 %v1214, %v605
  %v1216 = vadd.f32 %v1215, %v610
  %v1217 = vadd.f32 %v1216, %v615
  %v1218 = vadd.f32 %v1217, %v620
  %v1219 = vadd.f32 %v1218, %v625
  %v1220 = vadd.f32 %v1219, %v630
  %v1221 = vadd.f32 %v1220, %v635
  %v1222 = vadd.f32 %v1221, %v640
  %v1223 = vadd.f32 %v1222, %v645
  %v1224 = vadd.f32 %v1223, %v650
  %v1225 = vadd.f32 %v1224, %v655
  %v1226 = vadd.f32 %v1225, %v660
  %v1227 = vadd.f32 %v1226, %v665
  %v1228 = vadd.f32 %v1227, %v670
  %v1229 = vadd.f32 %v1228, %v675
  %v1230 = vadd.f32 %v1229, %v680
  %v1231 = vadd.f32 %v1230, %v685
  %v1232 = vadd.f32 %v1231, %v690
  %v1233 = vadd.f32 %v1232, %v695
  %v1234 = vadd.f32 %v1233, %v700
  %v1235 = vadd.f32 %v1234, %v705
  %v1236 = vadd.f32 %v1235, %v710
  %v1237 = vadd.f32 %v1236, %v715
  %v1238 = vadd.f32 %v1237, %v720
  %v1239 = vadd.f32 %v1238, %v725
  %v1240 = vadd.f32 %v1239, %v730
  %v1241 = vadd.f32 %v1240, %v735
  %v1242 = vadd.f32 %v1241, %v740
  %v1243 = vadd.f32 %v1242, %v745
  %v1244 = vadd.f32 %v1243, %v750
  %v1245 = vadd.f32 %v1244, %v755
  %v1246 = vadd.f32 %v1245, %v760
  %v1247 = vadd.f32 %v1246, %v765
  %v1248 = vadd.f32 %v1247, %v770
  %v1249 = vadd.f32 %v1248, %v775
  %v1250 = vadd.f32 %v1249, %v780
  %v1251 = vadd.f32 %v1250, %v785
  %v1252 = vadd.f32 %v1251, %v790
  %v1253 = vadd.f32 %v1252, %v795
  %v1254 = vadd.f32 %v1253, %v800
  %v1255 = vadd.f32 %v1254, %v805
  %v1256 = vadd.f32 %v1255, %v810
  %v1257 = vadd.f32 %v1256, %v815
  %v1258 = vadd.f32 %v1257, %v820
  %v1259 = vadd.f32 %v1258, %v825
  %v1260 = vadd.f32 %v1259, %v830
  %v1261 = vadd.f32 %v1260, %v835
  %v1262 = vadd.f32 %v1261, %v840
  %v1263 = vadd.f32 %v1262, %v845
  %v1264 = vadd.f32 %v1263, %v850
  %v1265 = vadd.f32 %v1264, %v855
  %v1266 = vadd.f32 %v1265, %v860
  %v1267 = vadd.f32 %v1266, %v865
  %v1268 = vadd.f32 %v1267, %v870
  %v1269 = vadd.f32 %v1268, %v875
  %v1270 = vadd.f32 %v1269, %v880
  %v1271 = vadd.f32 %v1270, %v885
  %v1272 = vadd.f32 %v1271, %v890
  %v1273 = vadd.f32 %v1272, %v895
  %v1274 = vadd.f32 %v1273, %v900
  %v1275 = vadd.f32 %v1274, %v905
  %v1276 = vadd.f32 %v1275, %v910
  %v1277 = vadd.f32 %v1276, %v915
  %v1278 = vadd.f32 %v1277, %v920
  %v1279 = vadd.f32 %v1278, %v925
  %v1280 = vadd.f32 %v1279, %v930
  %v1281 = vadd.f32 %v1280, %v935
  %v1282 = vadd.f32 %v1281, %v940
  %v1283 = vadd.f32 %v1282, %v945
  %v1284 = vadd.f32 %v1283, %v950
  %v1285 = vadd.f32 %v1284, %v955
  %v1286 = vadd.f32 %v1285, %v960
  %v1287 = vadd.f32 %v1286, %v965
  %v1288 = vadd.f32 %v1287, %v970
  %v1289 = vadd.f32 %v1288, %v975
  %v1290 = vadd.f32 %v1289, %v980
  %v1291 = vadd.f32 %v1290, %v985
  %v1292 = vadd.f32 %v1291, %v990
  %v1293 = vadd.f32 %v1292, %v995
  %v1294 = vadd.f32 %v1293, %v1000
  %v1295 = vadd.f32 %v1294, %v1005
  %v1296 = vadd.f32 %v1295, %v1010
  %v1297 = vadd.f32 %v1296, %v1015
  %v1298 = vadd.f32 %v1297, %v1020
  %v1299 = vadd.f32 %v1298, %v1025
  %v1300 = vadd.f32 %v1299, %v1030
  %v1301 = vadd.f32 %v1300, %v1035
  %v1302 = vadd.f32 %v1301, %v1040
  %v1303 = vadd.f32 %v1302, %v1045
  %v1304 = vadd.f32 %v1303, %v1050
  %v1305 = vadd.f32 %v1304, %v1055
  %v1306 = vadd.f32 %v1305, %v1060
  %v1307 = vadd.f32 %v1306, %v1065
  %v1308 = vadd.f32 %v1307, %v1070
  %v1309 = vadd.f32 %v1308, %v1075
  %v1310 = vadd.f32 %v1309, %v1080
  %v1311 = vadd.f32 %v1310, %v1085
  %v1312 = vadd.f32 %v1311, %v1090
  %v1313 = vadd.f32 %v1312, %v1095
  %v1314 = vadd.f32 %v1313, %v1100
  %v1315 = vadd.f32 %v1314, %v1105
  %v1316 = vadd.f32 %v1315, %v1110
  %v1317 = vadd.f32 %v1316, %v1115
  %v1318 = vadd.f32 %v1317, %v1120
  %v1319 = vadd.f32 %v1318, %v1125
  %v1320 = vadd.f32 %v1319, %v1130
  %v1321 = vadd.f32 %v1320, %v1135
  %v1322 = vadd.f32 %v1321, %v1140
  %v1323 = vadd.f32 %v1322, %v1145
  %v1324 = vadd.f32 %v1323, %v1150
  %v1325 = vadd.f32 %v1324, %v1155
  %v1326 = vadd.f32 %v1325, %v1160
  %v1327 = vadd.f32 %v1326, %v1165
  %v1328 = vadd.f32 %v1327, %v1170
  %v1329 = vadd.f32 %v1328, %v1175
  %v1330 = vadd.f32 %v1329, %v1180
  %v1331 = vadd.f32 %v1330, %v1185
  %v1332 = vadd.f32 %v1331, %v1190
  %v1333 = vadd.f32 %v1332, %v1195
  %v1334 = vadd.f32 %v1333, %v1200
  %v1335 = vadd.f32 %v1334, %v1205
  %v1336 = vadd.f32 %v1335, %v1210
  %v1337 = vrot.slane %v1336, 4
  %v1338 = vadd.f32 %v1336, %v1337
  %v1339 = vrot.slane %v1338, 2
  %v1340 = vadd.f32 %v1338, %v1339
  %v1341 = vrot.slane %v1340, 1
  %v1342 = vadd.f32 %v1340, %v1341
  %v1343 = vmul.f32 %v1342, 0.001
  %v1344 = vmul.f32 %v590, %v590
  %v1345 = vmul.f32 %v595, %v595
  %v1346 = vmul.f32 %v600, %v600
  %v1347 = vmul.f32 %v605, %v605
  %v1348 = vmul.f32 %v610, %v610
  %v1349 = vmul.f32 %v615, %v615
  %v1350 = vmul.f32 %v620, %v620
  %v1351 = vmul.f32 %v625, %v625
  %v1352 = vmul.f32 %v630, %v630
  %v1353 = vmul.f32 %v635, %v635
  %v1354 = vmul.f32 %v640, %v640
  %v1355 = vmul.f32 %v645, %v645
  %v1356 = vmul.f32 %v650, %v650
  %v1357 = vmul.f32 %v655, %v655
  %v1358 = vmul.f32 %v660, %v660
  %v1359 = vmul.f32 %v665, %v665
  %v1360 = vmul.f32 %v670, %v670
  %v1361 = vmul.f32 %v675, %v675
  %v1362 = vmul.f32 %v680, %v680
  %v1363 = vmul.f32 %v685, %v685
  %v1364 = vmul.f32 %v690, %v690
  %v1365 = vmul.f32 %v695, %v695
  %v1366 = vmul.f32 %v700, %v700
  %v1367 = vmul.f32 %v705, %v705
  %v1368 = vmul.f32 %v710, %v710
  %v1369 = vmul.f32 %v715, %v715
  %v1370 = vmul.f32 %v720, %v720
  %v1371 = vmul.f32 %v725, %v725
  %v1372 = vmul.f32 %v730, %v730
  %v1373 = vmul.f32 %v735, %v735
  %v1374 = vmul.f32 %v740, %v740
  %v1375 = vmul.f32 %v745, %v745
  %v1376 = vmul.f32 %v750, %v750
  %v1377 = vmul.f32 %v755, %v755
  %v1378 = vmul.f32 %v760, %v760
  %v1379 = vmul.f32 %v765, %v765
  %v1380 = vmul.f32 %v770, %v770
  %v1381 = vmul.f32 %v775, %v775
  %v1382 = vmul.f32 %v780, %v780
  %v1383 = vmul.f32 %v785, %v785
  %v1384 = vmul.f32 %v790, %v790
  %v1385 = vmul.f32 %v795, %v795
  %v1386 = vmul.f32 %v800, %v800
  %v1387 = vmul.f32 %v805, %v805
  %v1388 = vmul.f32 %v810, %v810
  %v1389 = vmul.f32 %v815, %v815
  %v1390 = vmul.f32 %v820, %v820
  %v1391 = vmul.f32 %v825, %v825
  %v1392 = vmul.f32 %v830, %v830
  %v1393 = vmul.f32 %v835, %v835
  %v1394 = vmul.f32 %v840, %v840
  %v1395 = vmul.f32 %v845, %v845
  %v1396 = vmul.f32 %v850, %v850
  %v1397 = vmul.f32 %v855, %v855
  %v1398 = vmul.f32 %v860, %v860
  %v1399 = vmul.f32 %v865, %v865
  %v1400 = vmul.f32 %v870, %v870
  %v1401 = vmul.f32 %v875, %v875
  %v1402 = vmul.f32 %v880, %v880
  %v1403 = vmul.f32 %v885, %v885
  %v1404 = vmul.f32 %v890, %v890
  %v1405 = vmul.f32 %v895, %v895
  %v1406 = vmul.f32 %v900, %v900
  %v1407 = vmul.f32 %v905, %v905
  %v1408 = vmul.f32 %v910, %v910
  %v1409 = vmul.f32 %v915, %v915
  %v1410 = vmul.f32 %v920, %v920
  %v1411 = vmul.f32 %v925, %v925
  %v1412 = vmul.f32 %v930, %v930
  %v1413 = vmul.f32 %v935, %v935
  %v1414 = vmul.f32 %v940, %v940
  %v1415 = vmul.f32 %v945, %v945
  %v1416 = vmul.f32 %v950, %v950
  %v1417 = vmul.f32 %v955, %v955
  %v1418 = vmul.f32 %v960, %v960
  %v1419 = vmul.f32 %v965, %v965
  %v1420 = vmul.f32 %v970, %v970
  %v1421 = vmul.f32 %v975, %v975
  %v1422 = vmul.f32 %v980, %v980
  %v1423 = vmul.f32 %v985, %v985
  %v1424 = vmul.f32 %v990, %v990
  %v1425 = vmul.f32 %v995, %v995
  %v1426 = vmul.f32 %v1000, %v1000
  %v1427 = vmul.f32 %v1005, %v1005
  %v1428 = vmul.f32 %v1010, %v1010
  %v1429 = vmul.f32 %v1015, %v1015
  %v1430 = vmul.f32 %v1020, %v1020
  %v1431 = vmul.f32 %v1025, %v1025
  %v1432 = vmul.f32 %v1030, %v1030
  %v1433 = vmul.f32 %v1035, %v1035
  %v1434 = vmul.f32 %v1040, %v1040
  %v1435 = vmul.f32 %v1045, %v1045
  %v1436 = vmul.f32 %v1050, %v1050
  %v1437 = vmul.f32 %v1055, %v1055
  %v1438 = vmul.f32 %v1060, %v1060
  %v1439 = vmul.f32 %v1065, %v1065
  %v1440 = vmul.f32 %v1070, %v1070
  %v1441 = vmul.f32 %v1075, %v1075
  %v1442 = vmul.f32 %v1080, %v1080
  %v1443 = vmul.f32 %v1085, %v1085
  %v1444 = vmul.f32 %v1090, %v1090
  %v1445 = vmul.f32 %v1095, %v1095
  %v1446 = vmul.f32 %v1100, %v1100
  %v1447 = vmul.f32 %v1105, %v1105
  %v1448 = vmul.f32 %v1110, %v1110
  %v1449 = vmul.f32 %v1115, %v1115
  %v1450 = vmul.f32 %v1120, %v1120
  %v1451 = vmul.f32 %v1125, %v1125
  %v1452 = vmul.f32 %v1130, %v1130
  %v1453 = vmul.f32 %v1135, %v1135
  %v1454 = vmul.f32 %v1140, %v1140
  %v1455 = vmul.f32 %v1145, %v1145
  %v1456 = vmul.f32 %v1150, %v1150
  %v1457 = vmul.f32 %v1155, %v1155
  %v1458 = vmul.f32 %v1160, %v1160
  %v1459 = vmul.f32 %v1165, %v1165
  %v1460 = vmul.f32 %v1170, %v1170
  %v1461 = vmul.f32 %v1175, %v1175
  %v1462 = vmul.f32 %v1180, %v1180
  %v1463 = vmul.f32 %v1185, %v1185
  %v1464 = vmul.f32 %v1190, %v1190
  %v1465 = vmul.f32 %v1195, %v1195
  %v1466 = vmul.f32 %v1200, %v1200
  %v1467 = vmul.f32 %v1205, %v1205
  %v1468 = vmul.f32 %v1210, %v1210
  %v1469 = vadd.f32 %v1344, %v1345
  %v1470 = vadd.f32 %v1469, %v1346
  %v1471 = vadd.f32 %v1470, %v1347
  %v1472 = vadd.f32 %v1471, %v1348
  %v1473 = vadd.f32 %v1472, %v1349
  %v1474 = vadd.f32 %v1473, %v1350
  %v1475 = vadd.f32 %v1474, %v1351
  %v1476 = vadd.f32 %v1475, %v1352
  %v1477 = vadd.f32 %v1476, %v1353
  %v1478 = vadd.f32 %v1477, %v1354
  %v1479 = vadd.f32 %v1478, %v1355
  %v1480 = vadd.f32 %v1479, %v1356
  %v1481 = vadd.f32 %v1480, %v1357
  %v1482 = vadd.f32 %v1481, %v1358
  %v1483 = vadd.f32 %v1482, %v1359
  %v1484 = vadd.f32 %v1483, %v1360
  %v1485 = vadd.f32 %v1484, %v1361
  %v1486 = vadd.f32 %v1485, %v1362
  %v1487 = vadd.f32 %v1486, %v1363
  %v1488 = vadd.f32 %v1487, %v1364
  %v1489 = vadd.f32 %v1488, %v1365
  %v1490 = vadd.f32 %v1489, %v1366
  %v1491 = vadd.f32 %v1490, %v1367
  %v1492 = vadd.f32 %v1491, %v1368
  %v1493 = vadd.f32 %v1492, %v1369
  %v1494 = vadd.f32 %v1493, %v1370
  %v1495 = vadd.f32 %v1494, %v1371
  %v1496 = vadd.f32 %v1495, %v1372
  %v1497 = vadd.f32 %v1496, %v1373
  %v1498 = vadd.f32 %v1497, %v1374
  %v1499 = vadd.f32 %v1498, %v1375
  %v1500 = vadd.f32 %v1499, %v1376
  %v1501 = vadd.f32 %v1500, %v1377
  %v1502 = vadd.f32 %v1501, %v1378
  %v1503 = vadd.f32 %v1502, %v1379
  %v1504 = vadd.f32 %v1503, %v1380
  %v1505 = vadd.f32 %v1504, %v1381
  %v1506 = vadd.f32 %v1505, %v1382
  %v1507 = vadd.f32 %v1506, %v1383
  %v1508 = vadd.f32 %v1507, %v1384
  %v1509 = vadd.f32 %v1508, %v1385
  %v1510 = vadd.f32 %v1509, %v1386
  %v1511 = vadd.f32 %v1510, %v1387
  %v1512 = vadd.f32 %v1511, %v1388
  %v1513 = vadd.f32 %v1512, %v1389
  %v1514 = vadd.f32 %v1513, %v1390
  %v1515 = vadd.f32 %v1514, %v1391
  %v1516 = vadd.f32 %v1515, %v1392
  %v1517 = vadd.f32 %v1516, %v1393
  %v1518 = vadd.f32 %v1517, %v1394
  %v1519 = vadd.f32 %v1518, %v1395
  %v1520 = vadd.f32 %v1519, %v1396
  %v1521 = vadd.f32 %v1520, %v1397
  %v1522 = vadd.f32 %v1521, %v1398
  %v1523 = vadd.f32 %v1522, %v1399
  %v1524 = vadd.f32 %v1523, %v1400
  %v1525 = vadd.f32 %v1524, %v1401
  %v1526 = vadd.f32 %v1525, %v1402
  %v1527 = vadd.f32 %v1526, %v1403
  %v1528 = vadd.f32 %v1527, %v1404
  %v1529 = vadd.f32 %v1528, %v1405
  %v1530 = vadd.f32 %v1529, %v1406
  %v1531 = vadd.f32 %v1530, %v1407
  %v1532 = vadd.f32 %v1531, %v1408
  %v1533 = vadd.f32 %v1532, %v1409
  %v1534 = vadd.f32 %v1533, %v1410
  %v1535 = vadd.f32 %v1534, %v1411
  %v1536 = vadd.f32 %v1535, %v1412
  %v1537 = vadd.f32 %v1536, %v1413
  %v1538 = vadd.f32 %v1537, %v1414
  %v1539 = vadd.f32 %v1538, %v1415
  %v1540 = vadd.f32 %v1539, %v1416
  %v1541 = vadd.f32 %v1540, %v1417
  %v1542 = vadd.f32 %v1541, %v1418
  %v1543 = vadd.f32 %v1542, %v1419
  %v1544 = vadd.f32 %v1543, %v1420
  %v1545 = vadd.f32 %v1544, %v1421
  %v1546 = vadd.f32 %v1545, %v1422
  %v1547 = vadd.f32 %v1546, %v1423
  %v1548 = vadd.f32 %v1547, %v1424
  %v1549 = vadd.f32 %v1548, %v1425
  %v1550 = vadd.f32 %v1549, %v1426
  %v1551 = vadd.f32 %v1550, %v1427
  %v1552 = vadd.f32 %v1551, %v1428
  %v1553 = vadd.f32 %v1552, %v1429
  %v1554 = vadd.f32 %v1553, %v1430
  %v1555 = vadd.f32 %v1554, %v1431
  %v1556 = vadd.f32 %v1555, %v1432
  %v1557 = vadd.f32 %v1556, %v1433
  %v1558 = vadd.f32 %v1557, %v1434
  %v1559 = vadd.f32 %v1558, %v1435
  %v1560 = vadd.f32 %v1559, %v1436
  %v1561 = vadd.f32 %v1560, %v1437
  %v1562 = vadd.f32 %v1561, %v1438
  %v1563 = vadd.f32 %v1562, %v1439
  %v1564 = vadd.f32 %v1563, %v1440
  %v1565 = vadd.f32 %v1564, %v1441
  %v1566 = vadd.f32 %v1565, %v1442
  %v1567 = vadd.f32 %v1566, %v1443
  %v1568 = vadd.f32 %v1567, %v1444
  %v1569 = vadd.f32 %v1568, %v1445
  %v1570 = vadd.f32 %v1569, %v1446
  %v1571 = vadd.f32 %v1570, %v1447
  %v1572 = vadd.f32 %v1571, %v1448
  %v1573 = vadd.f32 %v1572, %v1449
  %v1574 = vadd.f32 %v1573, %v1450
  %v1575 = vadd.f32 %v1574, %v1451
  %v1576 = vadd.f32 %v1575, %v1452
  %v1577 = vadd.f32 %v1576, %v1453
  %v1578 = vadd.f32 %v1577, %v1454
  %v1579 = vadd.f32 %v1578, %v1455
  %v1580 = vadd.f32 %v1579, %v1456
  %v1581 = vadd.f32 %v1580, %v1457
  %v1582 = vadd.f32 %v1581, %v1458
  %v1583 = vadd.f32 %v1582, %v1459
  %v1584 = vadd.f32 %v1583, %v1460
  %v1585 = vadd.f32 %v1584, %v1461
  %v1586 = vadd.f32 %v1585, %v1462
  %v1587 = vadd.f32 %v1586, %v1463
  %v1588 = vadd.f32 %v1587, %v1464
  %v1589 = vadd.f32 %v1588, %v1465
  %v1590 = vadd.f32 %v1589, %v1466
  %v1591 = vadd.f32 %v1590, %v1467
  %v1592 = vadd.f32 %v1591, %v1468
  %v1593 = vrot.slane %v1592, 4
  %v1594 = vadd.f32 %v1592, %v1593
  %v1595 = vrot.slane %v1594, 2
  %v1596 = vadd.f32 %v1594, %v1595
  %v1597 = vrot.slane %v1596, 1
  %v1598 = vadd.f32 %v1596, %v1597
  %v1599 = vmul.f32 %v1598, 0.001
  %v1600 = vmul.f32 %v1343, %v1343
  %v1601 = vsub.f32 %v1599, %v1600
  %v1602 = vmax.f32 %v1601, 0.0
  %v1603 = vld [vmem:[%s3 + $0x3] sm:$0x1]
  %v1604 = vadd.f32 %v1602, 1e-05
  %v1605 = vrsqrt.pop %v1604
  %v1606 = vmul.f32 %v1603, %v1605
  %v1607 = vld [vmem:[%s3 + $0x4] sm:$0x1]
  %v1608 = vmul.f32 %v1343, %v1606
  %v1609 = vsub.f32 %v1607, %v1608
  %v1610 = vlaneseq
  %v1611 = vshrl.u32 %v1610, 7
  %v1612 = vsub.s32 0, %v1611
  %v1613 = vrot.slane %v1606, %v1612
  %v1614 = vmul.f32 %v590, %v1613
  %v1615 = vmul.f32 %v595, %v1613
  %v1616 = vmul.f32 %v600, %v1613
  %v1617 = vmul.f32 %v605, %v1613
  %v1618 = vmul.f32 %v610, %v1613
  %v1619 = vmul.f32 %v615, %v1613
  %v1620 = vmul.f32 %v620, %v1613
  %v1621 = vmul.f32 %v625, %v1613
  %v1622 = vmul.f32 %v630, %v1613
  %v1623 = vmul.f32 %v635, %v1613
  %v1624 = vmul.f32 %v640, %v1613
  %v1625 = vmul.f32 %v645, %v1613
  %v1626 = vmul.f32 %v650, %v1613
  %v1627 = vmul.f32 %v655, %v1613
  %v1628 = vmul.f32 %v660, %v1613
  %v1629 = vmul.f32 %v665, %v1613
  %v1630 = vmul.f32 %v670, %v1613
  %v1631 = vmul.f32 %v675, %v1613
  %v1632 = vmul.f32 %v680, %v1613
  %v1633 = vmul.f32 %v685, %v1613
  %v1634 = vmul.f32 %v690, %v1613
  %v1635 = vmul.f32 %v695, %v1613
  %v1636 = vmul.f32 %v700, %v1613
  %v1637 = vmul.f32 %v705, %v1613
  %v1638 = vmul.f32 %v710, %v1613
  %v1639 = vmul.f32 %v715, %v1613
  %v1640 = vmul.f32 %v720, %v1613
  %v1641 = vmul.f32 %v725, %v1613
  %v1642 = vmul.f32 %v730, %v1613
  %v1643 = vmul.f32 %v735, %v1613
  %v1644 = vmul.f32 %v740, %v1613
  %v1645 = vmul.f32 %v745, %v1613
  %v1646 = vmul.f32 %v750, %v1613
  %v1647 = vmul.f32 %v755, %v1613
  %v1648 = vmul.f32 %v760, %v1613
  %v1649 = vmul.f32 %v765, %v1613
  %v1650 = vmul.f32 %v770, %v1613
  %v1651 = vmul.f32 %v775, %v1613
  %v1652 = vmul.f32 %v780, %v1613
  %v1653 = vmul.f32 %v785, %v1613
  %v1654 = vmul.f32 %v790, %v1613
  %v1655 = vmul.f32 %v795, %v1613
  %v1656 = vmul.f32 %v800, %v1613
  %v1657 = vmul.f32 %v805, %v1613
  %v1658 = vmul.f32 %v810, %v1613
  %v1659 = vmul.f32 %v815, %v1613
  %v1660 = vmul.f32 %v820, %v1613
  %v1661 = vmul.f32 %v825, %v1613
  %v1662 = vmul.f32 %v830, %v1613
  %v1663 = vmul.f32 %v835, %v1613
  %v1664 = vmul.f32 %v840, %v1613
  %v1665 = vmul.f32 %v845, %v1613
  %v1666 = vmul.f32 %v850, %v1613
  %v1667 = vmul.f32 %v855, %v1613
  %v1668 = vmul.f32 %v860, %v1613
  %v1669 = vmul.f32 %v865, %v1613
  %v1670 = vmul.f32 %v870, %v1613
  %v1671 = vmul.f32 %v875, %v1613
  %v1672 = vmul.f32 %v880, %v1613
  %v1673 = vmul.f32 %v885, %v1613
  %v1674 = vmul.f32 %v890, %v1613
  %v1675 = vmul.f32 %v895, %v1613
  %v1676 = vmul.f32 %v900, %v1613
  %v1677 = vmul.f32 %v905, %v1613
  %v1678 = vmul.f32 %v910, %v1613
  %v1679 = vmul.f32 %v915, %v1613
  %v1680 = vmul.f32 %v920, %v1613
  %v1681 = vmul.f32 %v925, %v1613
  %v1682 = vmul.f32 %v930, %v1613
  %v1683 = vmul.f32 %v935, %v1613
  %v1684 = vmul.f32 %v940, %v1613
  %v1685 = vmul.f32 %v945, %v1613
  %v1686 = vmul.f32 %v950, %v1613
  %v1687 = vmul.f32 %v955, %v1613
  %v1688 = vmul.f32 %v960, %v1613
  %v1689 = vmul.f32 %v965, %v1613
  %v1690 = vmul.f32 %v970, %v1613
  %v1691 = vmul.f32 %v975, %v1613
  %v1692 = vmul.f32 %v980, %v1613
  %v1693 = vmul.f32 %v985, %v1613
  %v1694 = vmul.f32 %v990, %v1613
  %v1695 = vmul.f32 %v995, %v1613
  %v1696 = vmul.f32 %v1000, %v1613
  %v1697 = vmul.f32 %v1005, %v1613
  %v1698 = vmul.f32 %v1010, %v1613
  %v1699 = vmul.f32 %v1015, %v1613
  %v1700 = vmul.f32 %v1020, %v1613
  %v1701 = vmul.f32 %v1025, %v1613
  %v1702 = vmul.f32 %v1030, %v1613
  %v1703 = vmul.f32 %v1035, %v1613
  %v1704 = vmul.f32 %v1040, %v1613
  %v1705 = vmul.f32 %v1045, %v1613
  %v1706 = vmul.f32 %v1050, %v1613
  %v1707 = vmul.f32 %v1055, %v1613
  %v1708 = vmul.f32 %v1060, %v1613
  %v1709 = vmul.f32 %v1065, %v1613
  %v1710 = vmul.f32 %v1070, %v1613
  %v1711 = vmul.f32 %v1075, %v1613
  %v1712 = vmul.f32 %v1080, %v1613
  %v1713 = vmul.f32 %v1085, %v1613
  %v1714 = vmul.f32 %v1090, %v1613
  %v1715 = vmul.f32 %v1095, %v1613
  %v1716 = vmul.f32 %v1100, %v1613
  %v1717 = vmul.f32 %v1105, %v1613
  %v1718 = vmul.f32 %v1110, %v1613
  %v1719 = vmul.f32 %v1115, %v1613
  %v1720 = vmul.f32 %v1120, %v1613
  %v1721 = vmul.f32 %v1125, %v1613
  %v1722 = vmul.f32 %v1130, %v1613
  %v1723 = vmul.f32 %v1135, %v1613
  %v1724 = vmul.f32 %v1140, %v1613
  %v1725 = vmul.f32 %v1145, %v1613
  %v1726 = vmul.f32 %v1150, %v1613
  %v1727 = vmul.f32 %v1155, %v1613
  %v1728 = vmul.f32 %v1160, %v1613
  %v1729 = vmul.f32 %v1165, %v1613
  %v1730 = vmul.f32 %v1170, %v1613
  %v1731 = vmul.f32 %v1175, %v1613
  %v1732 = vmul.f32 %v1180, %v1613
  %v1733 = vmul.f32 %v1185, %v1613
  %v1734 = vmul.f32 %v1190, %v1613
  %v1735 = vmul.f32 %v1195, %v1613
  %v1736 = vmul.f32 %v1200, %v1613
  %v1737 = vmul.f32 %v1205, %v1613
  %v1738 = vmul.f32 %v1210, %v1613
  %v1739 = vlaneseq
  %v1740 = vshrl.u32 %v1739, 7
  %v1741 = vsub.s32 0, %v1740
  %v1742 = vrot.slane %v1609, %v1741
  %v1743 = vadd.f32 %v1614, %v1742
  %v1744 = vadd.f32 %v1615, %v1742
  %v1745 = vadd.f32 %v1616, %v1742
  %v1746 = vadd.f32 %v1617, %v1742
  %v1747 = vadd.f32 %v1618, %v1742
  %v1748 = vadd.f32 %v1619, %v1742
  %v1749 = vadd.f32 %v1620, %v1742
  %v1750 = vadd.f32 %v1621, %v1742
  %v1751 = vadd.f32 %v1622, %v1742
  %v1752 = vadd.f32 %v1623, %v1742
  %v1753 = vadd.f32 %v1624, %v1742
  %v1754 = vadd.f32 %v1625, %v1742
  %v1755 = vadd.f32 %v1626, %v1742
  %v1756 = vadd.f32 %v1627, %v1742
  %v1757 = vadd.f32 %v1628, %v1742
  %v1758 = vadd.f32 %v1629, %v1742
  %v1759 = vadd.f32 %v1630, %v1742
  %v1760 = vadd.f32 %v1631, %v1742
  %v1761 = vadd.f32 %v1632, %v1742
  %v1762 = vadd.f32 %v1633, %v1742
  %v1763 = vadd.f32 %v1634, %v1742
  %v1764 = vadd.f32 %v1635, %v1742
  %v1765 = vadd.f32 %v1636, %v1742
  %v1766 = vadd.f32 %v1637, %v1742
  %v1767 = vadd.f32 %v1638, %v1742
  %v1768 = vadd.f32 %v1639, %v1742
  %v1769 = vadd.f32 %v1640, %v1742
  %v1770 = vadd.f32 %v1641, %v1742
  %v1771 = vadd.f32 %v1642, %v1742
  %v1772 = vadd.f32 %v1643, %v1742
  %v1773 = vadd.f32 %v1644, %v1742
  %v1774 = vadd.f32 %v1645, %v1742
  %v1775 = vadd.f32 %v1646, %v1742
  %v1776 = vadd.f32 %v1647, %v1742
  %v1777 = vadd.f32 %v1648, %v1742
  %v1778 = vadd.f32 %v1649, %v1742
  %v1779 = vadd.f32 %v1650, %v1742
  %v1780 = vadd.f32 %v1651, %v1742
  %v1781 = vadd.f32 %v1652, %v1742
  %v1782 = vadd.f32 %v1653, %v1742
  %v1783 = vadd.f32 %v1654, %v1742
  %v1784 = vadd.f32 %v1655, %v1742
  %v1785 = vadd.f32 %v1656, %v1742
  %v1786 = vadd.f32 %v1657, %v1742
  %v1787 = vadd.f32 %v1658, %v1742
  %v1788 = vadd.f32 %v1659, %v1742
  %v1789 = vadd.f32 %v1660, %v1742
  %v1790 = vadd.f32 %v1661, %v1742
  %v1791 = vadd.f32 %v1662, %v1742
  %v1792 = vadd.f32 %v1663, %v1742
  %v1793 = vadd.f32 %v1664, %v1742
  %v1794 = vadd.f32 %v1665, %v1742
  %v1795 = vadd.f32 %v1666, %v1742
  %v1796 = vadd.f32 %v1667, %v1742
  %v1797 = vadd.f32 %v1668, %v1742
  %v1798 = vadd.f32 %v1669, %v1742
  %v1799 = vadd.f32 %v1670, %v1742
  %v1800 = vadd.f32 %v1671, %v1742
  %v1801 = vadd.f32 %v1672, %v1742
  %v1802 = vadd.f32 %v1673, %v1742
  %v1803 = vadd.f32 %v1674, %v1742
  %v1804 = vadd.f32 %v1675, %v1742
  %v1805 = vadd.f32 %v1676, %v1742
  %v1806 = vadd.f32 %v1677, %v1742
  %v1807 = vadd.f32 %v1678, %v1742
  %v1808 = vadd.f32 %v1679, %v1742
  %v1809 = vadd.f32 %v1680, %v1742
  %v1810 = vadd.f32 %v1681, %v1742
  %v1811 = vadd.f32 %v1682, %v1742
  %v1812 = vadd.f32 %v1683, %v1742
  %v1813 = vadd.f32 %v1684, %v1742
  %v1814 = vadd.f32 %v1685, %v1742
  %v1815 = vadd.f32 %v1686, %v1742
  %v1816 = vadd.f32 %v1687, %v1742
  %v1817 = vadd.f32 %v1688, %v1742
  %v1818 = vadd.f32 %v1689, %v1742
  %v1819 = vadd.f32 %v1690, %v1742
  %v1820 = vadd.f32 %v1691, %v1742
  %v1821 = vadd.f32 %v1692, %v1742
  %v1822 = vadd.f32 %v1693, %v1742
  %v1823 = vadd.f32 %v1694, %v1742
  %v1824 = vadd.f32 %v1695, %v1742
  %v1825 = vadd.f32 %v1696, %v1742
  %v1826 = vadd.f32 %v1697, %v1742
  %v1827 = vadd.f32 %v1698, %v1742
  %v1828 = vadd.f32 %v1699, %v1742
  %v1829 = vadd.f32 %v1700, %v1742
  %v1830 = vadd.f32 %v1701, %v1742
  %v1831 = vadd.f32 %v1702, %v1742
  %v1832 = vadd.f32 %v1703, %v1742
  %v1833 = vadd.f32 %v1704, %v1742
  %v1834 = vadd.f32 %v1705, %v1742
  %v1835 = vadd.f32 %v1706, %v1742
  %v1836 = vadd.f32 %v1707, %v1742
  %v1837 = vadd.f32 %v1708, %v1742
  %v1838 = vadd.f32 %v1709, %v1742
  %v1839 = vadd.f32 %v1710, %v1742
  %v1840 = vadd.f32 %v1711, %v1742
  %v1841 = vadd.f32 %v1712, %v1742
  %v1842 = vadd.f32 %v1713, %v1742
  %v1843 = vadd.f32 %v1714, %v1742
  %v1844 = vadd.f32 %v1715, %v1742
  %v1845 = vadd.f32 %v1716, %v1742
  %v1846 = vadd.f32 %v1717, %v1742
  %v1847 = vadd.f32 %v1718, %v1742
  %v1848 = vadd.f32 %v1719, %v1742
  %v1849 = vadd.f32 %v1720, %v1742
  %v1850 = vadd.f32 %v1721, %v1742
  %v1851 = vadd.f32 %v1722, %v1742
  %v1852 = vadd.f32 %v1723, %v1742
  %v1853 = vadd.f32 %v1724, %v1742
  %v1854 = vadd.f32 %v1725, %v1742
  %v1855 = vadd.f32 %v1726, %v1742
  %v1856 = vadd.f32 %v1727, %v1742
  %v1857 = vadd.f32 %v1728, %v1742
  %v1858 = vadd.f32 %v1729, %v1742
  %v1859 = vadd.f32 %v1730, %v1742
  %v1860 = vadd.f32 %v1731, %v1742
  %v1861 = vadd.f32 %v1732, %v1742
  %v1862 = vadd.f32 %v1733, %v1742
  %v1863 = vadd.f32 %v1734, %v1742
  %v1864 = vadd.f32 %v1735, %v1742
  %v1865 = vadd.f32 %v1736, %v1742
  %v1866 = vadd.f32 %v1737, %v1742
  %v1867 = vadd.f32 %v1738, %v1742
  %v1868 = vmax.f32 %v1743, 0.0
  %v1869 = vmax.f32 %v1744, 0.0
  %v1870 = vmax.f32 %v1745, 0.0
  %v1871 = vmax.f32 %v1746, 0.0
  %v1872 = vmax.f32 %v1747, 0.0
  %v1873 = vmax.f32 %v1748, 0.0
  %v1874 = vmax.f32 %v1749, 0.0
  %v1875 = vmax.f32 %v1750, 0.0
  %v1876 = vmax.f32 %v1751, 0.0
  %v1877 = vmax.f32 %v1752, 0.0
  %v1878 = vmax.f32 %v1753, 0.0
  %v1879 = vmax.f32 %v1754, 0.0
  %v1880 = vmax.f32 %v1755, 0.0
  %v1881 = vmax.f32 %v1756, 0.0
  %v1882 = vmax.f32 %v1757, 0.0
  %v1883 = vmax.f32 %v1758, 0.0
  %v1884 = vmax.f32 %v1759, 0.0
  %v1885 = vmax.f32 %v1760, 0.0
  %v1886 = vmax.f32 %v1761, 0.0
  %v1887 = vmax.f32 %v1762, 0.0
  %v1888 = vmax.f32 %v1763, 0.0
  %v1889 = vmax.f32 %v1764, 0.0
  %v1890 = vmax.f32 %v1765, 0.0
  %v1891 = vmax.f32 %v1766, 0.0
  %v1892 = vmax.f32 %v1767, 0.0
  %v1893 = vmax.f32 %v1768, 0.0
  %v1894 = vmax.f32 %v1769, 0.0
  %v1895 = vmax.f32 %v1770, 0.0
  %v1896 = vmax.f32 %v1771, 0.0
  %v1897 = vmax.f32 %v1772, 0.0
  %v1898 = vmax.f32 %v1773, 0.0
  %v1899 = vmax.f32 %v1774, 0.0
  %v1900 = vmax.f32 %v1775, 0.0
  %v1901 = vmax.f32 %v1776, 0.0
  %v1902 = vmax.f32 %v1777, 0.0
  %v1903 = vmax.f32 %v1778, 0.0
  %v1904 = vmax.f32 %v1779, 0.0
  %v1905 = vmax.f32 %v1780, 0.0
  %v1906 = vmax.f32 %v1781, 0.0
  %v1907 = vmax.f32 %v1782, 0.0
  %v1908 = vmax.f32 %v1783, 0.0
  %v1909 = vmax.f32 %v1784, 0.0
  %v1910 = vmax.f32 %v1785, 0.0
  %v1911 = vmax.f32 %v1786, 0.0
  %v1912 = vmax.f32 %v1787, 0.0
  %v1913 = vmax.f32 %v1788, 0.0
  %v1914 = vmax.f32 %v1789, 0.0
  %v1915 = vmax.f32 %v1790, 0.0
  %v1916 = vmax.f32 %v1791, 0.0
  %v1917 = vmax.f32 %v1792, 0.0
  %v1918 = vmax.f32 %v1793, 0.0
  %v1919 = vmax.f32 %v1794, 0.0
  %v1920 = vmax.f32 %v1795, 0.0
  %v1921 = vmax.f32 %v1796, 0.0
  %v1922 = vmax.f32 %v1797, 0.0
  %v1923 = vmax.f32 %v1798, 0.0
  %v1924 = vmax.f32 %v1799, 0.0
  %v1925 = vmax.f32 %v1800, 0.0
  %v1926 = vmax.f32 %v1801, 0.0
  %v1927 = vmax.f32 %v1802, 0.0
  %v1928 = vmax.f32 %v1803, 0.0
  %v1929 = vmax.f32 %v1804, 0.0
  %v1930 = vmax.f32 %v1805, 0.0
  %v1931 = vmax.f32 %v1806, 0.0
  %v1932 = vmax.f32 %v1807, 0.0
  %v1933 = vmax.f32 %v1808, 0.0
  %v1934 = vmax.f32 %v1809, 0.0
  %v1935 = vmax.f32 %v1810, 0.0
  %v1936 = vmax.f32 %v1811, 0.0
  %v1937 = vmax.f32 %v1812, 0.0
  %v1938 = vmax.f32 %v1813, 0.0
  %v1939 = vmax.f32 %v1814, 0.0
  %v1940 = vmax.f32 %v1815, 0.0
  %v1941 = vmax.f32 %v1816, 0.0
  %v1942 = vmax.f32 %v1817, 0.0
  %v1943 = vmax.f32 %v1818, 0.0
  %v1944 = vmax.f32 %v1819, 0.0
  %v1945 = vmax.f32 %v1820, 0.0
  %v1946 = vmax.f32 %v1821, 0.0
  %v1947 = vmax.f32 %v1822, 0.0
  %v1948 = vmax.f32 %v1823, 0.0
  %v1949 = vmax.f32 %v1824, 0.0
  %v1950 = vmax.f32 %v1825, 0.0
  %v1951 = vmax.f32 %v1826, 0.0
  %v1952 = vmax.f32 %v1827, 0.0
  %v1953 = vmax.f32 %v1828, 0.0
  %v1954 = vmax.f32 %v1829, 0.0
  %v1955 = vmax.f32 %v1830, 0.0
  %v1956 = vmax.f32 %v1831, 0.0
  %v1957 = vmax.f32 %v1832, 0.0
  %v1958 = vmax.f32 %v1833, 0.0
  %v1959 = vmax.f32 %v1834, 0.0
  %v1960 = vmax.f32 %v1835, 0.0
  %v1961 = vmax.f32 %v1836, 0.0
  %v1962 = vmax.f32 %v1837, 0.0
  %v1963 = vmax.f32 %v1838, 0.0
  %v1964 = vmax.f32 %v1839, 0.0
  %v1965 = vmax.f32 %v1840, 0.0
  %v1966 = vmax.f32 %v1841, 0.0
  %v1967 = vmax.f32 %v1842, 0.0
  %v1968 = vmax.f32 %v1843, 0.0
  %v1969 = vmax.f32 %v1844, 0.0
  %v1970 = vmax.f32 %v1845, 0.0
  %v1971 = vmax.f32 %v1846, 0.0
  %v1972 = vmax.f32 %v1847, 0.0
  %v1973 = vmax.f32 %v1848, 0.0
  %v1974 = vmax.f32 %v1849, 0.0
  %v1975 = vmax.f32 %v1850, 0.0
  %v1976 = vmax.f32 %v1851, 0.0
  %v1977 = vmax.f32 %v1852, 0.0
  %v1978 = vmax.f32 %v1853, 0.0
  %v1979 = vmax.f32 %v1854, 0.0
  %v1980 = vmax.f32 %v1855, 0.0
  %v1981 = vmax.f32 %v1856, 0.0
  %v1982 = vmax.f32 %v1857, 0.0
  %v1983 = vmax.f32 %v1858, 0.0
  %v1984 = vmax.f32 %v1859, 0.0
  %v1985 = vmax.f32 %v1860, 0.0
  %v1986 = vmax.f32 %v1861, 0.0
  %v1987 = vmax.f32 %v1862, 0.0
  %v1988 = vmax.f32 %v1863, 0.0
  %v1989 = vmax.f32 %v1864, 0.0
  %v1990 = vmax.f32 %v1865, 0.0
  %v1991 = vmax.f32 %v1866, 0.0
  %v1992 = vmax.f32 %v1867, 0.0
  %v1993 = vld [vmem:[%s2] sm:$0xff]
  %v1994 = vld [vmem:[%s2 + $0x8] sm:$0xff]
  %v1995 = vld [vmem:[%s2 + $0x10] sm:$0xff]
  %v1996 = vld [vmem:[%s2 + $0x18] sm:$0xff]
  %v1997 = vld [vmem:[%s2 + $0x20] sm:$0xff]
  %v1998 = vld [vmem:[%s2 + $0x28] sm:$0xff]
  %v1999 = vld [vmem:[%s2 + $0x30] sm:$0xff]
  %v2000 = vld [vmem:[%s2 + $0x38] sm:$0xff]
  %v2001 = vld [vmem:[%s2 + $0x40] sm:$0xff]
  %v2002 = vld [vmem:[%s2 + $0x48] sm:$0xff]
  %v2003 = vld [vmem:[%s2 + $0x50] sm:$0xff]
  %v2004 = vld [vmem:[%s2 + $0x58] sm:$0xff]
  %v2005 = vld [vmem:[%s2 + $0x60] sm:$0xff]
  %v2006 = vld [vmem:[%s2 + $0x68] sm:$0xff]
  %v2007 = vld [vmem:[%s2 + $0x70] sm:$0xff]
  %v2008 = vld [vmem:[%s2 + $0x78] sm:$0xff]
  %v2009 = vld [vmem:[%s3] sm:$0x1]
  %2010 = vset.pattern.permute.xlu0 32
  %2011 = vperm.xlu0 %2010, %v17
  %v2012 = vpop.permute.xlu0 %2011
  %2014 = vset.pattern.permute.xlu0 32
  %2015 = vperm.xlu0 %2014, %v18
  %v2016 = vpop.permute.xlu0 %2015
  %2018 = vset.pattern.permute.xlu0 32
  %2019 = vperm.xlu0 %2018, %v19
  %v2020 = vpop.permute.xlu0 %2019
  %2022 = vset.pattern.permute.xlu0 32
  %2023 = vperm.xlu0 %2022, %v20
  %v2024 = vpop.permute.xlu0 %2023
  %2026 = vset.pattern.permute.xlu0 32
  %2027 = vperm.xlu0 %2026, %v21
  %v2028 = vpop.permute.xlu0 %2027
  %2030 = vset.pattern.permute.xlu0 32
  %2031 = vperm.xlu0 %2030, %v22
  %v2032 = vpop.permute.xlu0 %2031
  %2034 = vset.pattern.permute.xlu0 32
  %2035 = vperm.xlu0 %2034, %v23
  %v2036 = vpop.permute.xlu0 %2035
  %2038 = vset.pattern.permute.xlu0 32
  %2039 = vperm.xlu0 %2038, %v24
  %v2040 = vpop.permute.xlu0 %2039
  %2042 = vset.pattern.permute.xlu0 32
  %2043 = vperm.xlu0 %2042, %v25
  %v2044 = vpop.permute.xlu0 %2043
  %2046 = vset.pattern.permute.xlu0 32
  %2047 = vperm.xlu0 %2046, %v26
  %v2048 = vpop.permute.xlu0 %2047
  %2050 = vset.pattern.permute.xlu0 32
  %2051 = vperm.xlu0 %2050, %v27
  %v2052 = vpop.permute.xlu0 %2051
  %2054 = vset.pattern.permute.xlu0 32
  %2055 = vperm.xlu0 %2054, %v28
  %v2056 = vpop.permute.xlu0 %2055
  %2058 = vset.pattern.permute.xlu0 32
  %2059 = vperm.xlu0 %2058, %v29
  %v2060 = vpop.permute.xlu0 %2059
  %2062 = vset.pattern.permute.xlu0 32
  %2063 = vperm.xlu0 %2062, %v30
  %v2064 = vpop.permute.xlu0 %2063
  %2066 = vset.pattern.permute.xlu0 32
  %2067 = vperm.xlu0 %2066, %v31
  %v2068 = vpop.permute.xlu0 %2067
  %2070 = vset.pattern.permute.xlu0 32
  %2071 = vperm.xlu0 %2070, %v32
  %v2072 = vpop.permute.xlu0 %2071
  %2074 = vset.pattern.permute.xlu0 32
  %2075 = vperm.xlu0 %2074, %v33
  %v2076 = vpop.permute.xlu0 %2075
  %2078 = vset.pattern.permute.xlu0 32
  %2079 = vperm.xlu0 %2078, %v34
  %v2080 = vpop.permute.xlu0 %2079
  %2082 = vset.pattern.permute.xlu0 32
  %2083 = vperm.xlu0 %2082, %v35
  %v2084 = vpop.permute.xlu0 %2083
  %2086 = vset.pattern.permute.xlu0 32
  %2087 = vperm.xlu0 %2086, %v36
  %v2088 = vpop.permute.xlu0 %2087
  %2090 = vset.pattern.permute.xlu0 32
  %2091 = vperm.xlu0 %2090, %v37
  %v2092 = vpop.permute.xlu0 %2091
  %2094 = vset.pattern.permute.xlu0 32
  %2095 = vperm.xlu0 %2094, %v38
  %v2096 = vpop.permute.xlu0 %2095
  %2098 = vset.pattern.permute.xlu0 32
  %2099 = vperm.xlu0 %2098, %v39
  %v2100 = vpop.permute.xlu0 %2099
  %2102 = vset.pattern.permute.xlu0 32
  %2103 = vperm.xlu0 %2102, %v40
  %v2104 = vpop.permute.xlu0 %2103
  %2106 = vset.pattern.permute.xlu0 32
  %2107 = vperm.xlu0 %2106, %v41
  %v2108 = vpop.permute.xlu0 %2107
  %2110 = vset.pattern.permute.xlu0 32
  %2111 = vperm.xlu0 %2110, %v42
  %v2112 = vpop.permute.xlu0 %2111
  %2114 = vset.pattern.permute.xlu0 32
  %2115 = vperm.xlu0 %2114, %v43
  %v2116 = vpop.permute.xlu0 %2115
  %2118 = vset.pattern.permute.xlu0 32
  %2119 = vperm.xlu0 %2118, %v44
  %v2120 = vpop.permute.xlu0 %2119
  %2122 = vset.pattern.permute.xlu0 32
  %2123 = vperm.xlu0 %2122, %v45
  %v2124 = vpop.permute.xlu0 %2123
  %2126 = vset.pattern.permute.xlu0 32
  %2127 = vperm.xlu0 %2126, %v46
  %v2128 = vpop.permute.xlu0 %2127
  %2130 = vset.pattern.permute.xlu0 32
  %2131 = vperm.xlu0 %2130, %v47
  %v2132 = vpop.permute.xlu0 %2131
  %2134 = vset.pattern.permute.xlu0 32
  %2135 = vperm.xlu0 %2134, %v48
  %v2136 = vpop.permute.xlu0 %2135
  %2138 = vset.pattern.permute.xlu0 32
  %2139 = vperm.xlu0 %2138, %v49
  %v2140 = vpop.permute.xlu0 %2139
  %2142 = vset.pattern.permute.xlu0 32
  %2143 = vperm.xlu0 %2142, %v50
  %v2144 = vpop.permute.xlu0 %2143
  %2146 = vset.pattern.permute.xlu0 32
  %2147 = vperm.xlu0 %2146, %v51
  %v2148 = vpop.permute.xlu0 %2147
  %2150 = vset.pattern.permute.xlu0 32
  %2151 = vperm.xlu0 %2150, %v52
  %v2152 = vpop.permute.xlu0 %2151
  %2154 = vset.pattern.permute.xlu0 32
  %2155 = vperm.xlu0 %2154, %v53
  %v2156 = vpop.permute.xlu0 %2155
  %2158 = vset.pattern.permute.xlu0 32
  %2159 = vperm.xlu0 %2158, %v54
  %v2160 = vpop.permute.xlu0 %2159
  %2162 = vset.pattern.permute.xlu0 32
  %2163 = vperm.xlu0 %2162, %v55
  %v2164 = vpop.permute.xlu0 %2163
  %2166 = vset.pattern.permute.xlu0 32
  %2167 = vperm.xlu0 %2166, %v56
  %v2168 = vpop.permute.xlu0 %2167
  %2170 = vset.pattern.permute.xlu0 32
  %2171 = vperm.xlu0 %2170, %v57
  %v2172 = vpop.permute.xlu0 %2171
  %2174 = vset.pattern.permute.xlu0 32
  %2175 = vperm.xlu0 %2174, %v58
  %v2176 = vpop.permute.xlu0 %2175
  %2178 = vset.pattern.permute.xlu0 32
  %2179 = vperm.xlu0 %2178, %v59
  %v2180 = vpop.permute.xlu0 %2179
  %2182 = vset.pattern.permute.xlu0 32
  %2183 = vperm.xlu0 %2182, %v60
  %v2184 = vpop.permute.xlu0 %2183
  %2186 = vset.pattern.permute.xlu0 32
  %2187 = vperm.xlu0 %2186, %v61
  %v2188 = vpop.permute.xlu0 %2187
  %2190 = vset.pattern.permute.xlu0 32
  %2191 = vperm.xlu0 %2190, %v62
  %v2192 = vpop.permute.xlu0 %2191
  %2194 = vset.pattern.permute.xlu0 32
  %2195 = vperm.xlu0 %2194, %v63
  %v2196 = vpop.permute.xlu0 %2195
  %2198 = vset.pattern.permute.xlu0 32
  %2199 = vperm.xlu0 %2198, %v64
  %v2200 = vpop.permute.xlu0 %2199
  %2202 = vset.pattern.permute.xlu0 32
  %2203 = vperm.xlu0 %2202, %v65
  %v2204 = vpop.permute.xlu0 %2203
  %2206 = vset.pattern.permute.xlu0 32
  %2207 = vperm.xlu0 %2206, %v66
  %v2208 = vpop.permute.xlu0 %2207
  %2210 = vset.pattern.permute.xlu0 32
  %2211 = vperm.xlu0 %2210, %v67
  %v2212 = vpop.permute.xlu0 %2211
  %2214 = vset.pattern.permute.xlu0 32
  %2215 = vperm.xlu0 %2214, %v68
  %v2216 = vpop.permute.xlu0 %2215
  %2218 = vset.pattern.permute.xlu0 32
  %2219 = vperm.xlu0 %2218, %v69
  %v2220 = vpop.permute.xlu0 %2219
  %2222 = vset.pattern.permute.xlu0 32
  %2223 = vperm.xlu0 %2222, %v70
  %v2224 = vpop.permute.xlu0 %2223
  %2226 = vset.pattern.permute.xlu0 32
  %2227 = vperm.xlu0 %2226, %v71
  %v2228 = vpop.permute.xlu0 %2227
  %2230 = vset.pattern.permute.xlu0 32
  %2231 = vperm.xlu0 %2230, %v72
  %v2232 = vpop.permute.xlu0 %2231
  %2234 = vset.pattern.permute.xlu0 32
  %2235 = vperm.xlu0 %2234, %v73
  %v2236 = vpop.permute.xlu0 %2235
  %2238 = vset.pattern.permute.xlu0 32
  %2239 = vperm.xlu0 %2238, %v74
  %v2240 = vpop.permute.xlu0 %2239
  %2242 = vset.pattern.permute.xlu0 32
  %2243 = vperm.xlu0 %2242, %v75
  %v2244 = vpop.permute.xlu0 %2243
  %2246 = vset.pattern.permute.xlu0 32
  %2247 = vperm.xlu0 %2246, %v76
  %v2248 = vpop.permute.xlu0 %2247
  %2250 = vset.pattern.permute.xlu0 32
  %2251 = vperm.xlu0 %2250, %v77
  %v2252 = vpop.permute.xlu0 %2251
  %2254 = vset.pattern.permute.xlu0 32
  %2255 = vperm.xlu0 %2254, %v78
  %v2256 = vpop.permute.xlu0 %2255
  %2258 = vset.pattern.permute.xlu0 32
  %2259 = vperm.xlu0 %2258, %v79
  %v2260 = vpop.permute.xlu0 %2259
  %2262 = vset.pattern.permute.xlu0 32
  %2263 = vperm.xlu0 %2262, %v80
  %v2264 = vpop.permute.xlu0 %2263
  %2266 = vset.pattern.permute.xlu0 32
  %2267 = vperm.xlu0 %2266, %v81
  %v2268 = vpop.permute.xlu0 %2267
  %2270 = vset.pattern.permute.xlu0 32
  %2271 = vperm.xlu0 %2270, %v82
  %v2272 = vpop.permute.xlu0 %2271
  %2274 = vset.pattern.permute.xlu0 32
  %2275 = vperm.xlu0 %2274, %v83
  %v2276 = vpop.permute.xlu0 %2275
  %2278 = vset.pattern.permute.xlu0 32
  %2279 = vperm.xlu0 %2278, %v84
  %v2280 = vpop.permute.xlu0 %2279
  %2282 = vset.pattern.permute.xlu0 32
  %2283 = vperm.xlu0 %2282, %v85
  %v2284 = vpop.permute.xlu0 %2283
  %2286 = vset.pattern.permute.xlu0 32
  %2287 = vperm.xlu0 %2286, %v86
  %v2288 = vpop.permute.xlu0 %2287
  %2290 = vset.pattern.permute.xlu0 32
  %2291 = vperm.xlu0 %2290, %v87
  %v2292 = vpop.permute.xlu0 %2291
  %2294 = vset.pattern.permute.xlu0 32
  %2295 = vperm.xlu0 %2294, %v88
  %v2296 = vpop.permute.xlu0 %2295
  %2298 = vset.pattern.permute.xlu0 32
  %2299 = vperm.xlu0 %2298, %v89
  %v2300 = vpop.permute.xlu0 %2299
  %2302 = vset.pattern.permute.xlu0 32
  %2303 = vperm.xlu0 %2302, %v90
  %v2304 = vpop.permute.xlu0 %2303
  %2306 = vset.pattern.permute.xlu0 32
  %2307 = vperm.xlu0 %2306, %v91
  %v2308 = vpop.permute.xlu0 %2307
  %2310 = vset.pattern.permute.xlu0 32
  %2311 = vperm.xlu0 %2310, %v92
  %v2312 = vpop.permute.xlu0 %2311
  %2314 = vset.pattern.permute.xlu0 32
  %2315 = vperm.xlu0 %2314, %v93
  %v2316 = vpop.permute.xlu0 %2315
  %2318 = vset.pattern.permute.xlu0 32
  %2319 = vperm.xlu0 %2318, %v94
  %v2320 = vpop.permute.xlu0 %2319
  %2322 = vset.pattern.permute.xlu0 32
  %2323 = vperm.xlu0 %2322, %v95
  %v2324 = vpop.permute.xlu0 %2323
  %2326 = vset.pattern.permute.xlu0 32
  %2327 = vperm.xlu0 %2326, %v96
  %v2328 = vpop.permute.xlu0 %2327
  %2330 = vset.pattern.permute.xlu0 32
  %2331 = vperm.xlu0 %2330, %v97
  %v2332 = vpop.permute.xlu0 %2331
  %2334 = vset.pattern.permute.xlu0 32
  %2335 = vperm.xlu0 %2334, %v98
  %v2336 = vpop.permute.xlu0 %2335
  %2338 = vset.pattern.permute.xlu0 32
  %2339 = vperm.xlu0 %2338, %v99
  %v2340 = vpop.permute.xlu0 %2339
  %2342 = vset.pattern.permute.xlu0 32
  %2343 = vperm.xlu0 %2342, %v100
  %v2344 = vpop.permute.xlu0 %2343
  %2346 = vset.pattern.permute.xlu0 32
  %2347 = vperm.xlu0 %2346, %v101
  %v2348 = vpop.permute.xlu0 %2347
  %2350 = vset.pattern.permute.xlu0 32
  %2351 = vperm.xlu0 %2350, %v102
  %v2352 = vpop.permute.xlu0 %2351
  %2354 = vset.pattern.permute.xlu0 32
  %2355 = vperm.xlu0 %2354, %v103
  %v2356 = vpop.permute.xlu0 %2355
  %2358 = vset.pattern.permute.xlu0 32
  %2359 = vperm.xlu0 %2358, %v104
  %v2360 = vpop.permute.xlu0 %2359
  %2362 = vset.pattern.permute.xlu0 32
  %2363 = vperm.xlu0 %2362, %v105
  %v2364 = vpop.permute.xlu0 %2363
  %2366 = vset.pattern.permute.xlu0 32
  %2367 = vperm.xlu0 %2366, %v106
  %v2368 = vpop.permute.xlu0 %2367
  %2370 = vset.pattern.permute.xlu0 32
  %2371 = vperm.xlu0 %2370, %v107
  %v2372 = vpop.permute.xlu0 %2371
  %2374 = vset.pattern.permute.xlu0 32
  %2375 = vperm.xlu0 %2374, %v108
  %v2376 = vpop.permute.xlu0 %2375
  %2378 = vset.pattern.permute.xlu0 32
  %2379 = vperm.xlu0 %2378, %v109
  %v2380 = vpop.permute.xlu0 %2379
  %2382 = vset.pattern.permute.xlu0 32
  %2383 = vperm.xlu0 %2382, %v110
  %v2384 = vpop.permute.xlu0 %2383
  %2386 = vset.pattern.permute.xlu0 32
  %2387 = vperm.xlu0 %2386, %v111
  %v2388 = vpop.permute.xlu0 %2387
  %2390 = vset.pattern.permute.xlu0 32
  %2391 = vperm.xlu0 %2390, %v112
  %v2392 = vpop.permute.xlu0 %2391
  %2394 = vset.pattern.permute.xlu0 32
  %2395 = vperm.xlu0 %2394, %v113
  %v2396 = vpop.permute.xlu0 %2395
  %2398 = vset.pattern.permute.xlu0 32
  %2399 = vperm.xlu0 %2398, %v114
  %v2400 = vpop.permute.xlu0 %2399
  %2402 = vset.pattern.permute.xlu0 32
  %2403 = vperm.xlu0 %2402, %v115
  %v2404 = vpop.permute.xlu0 %2403
  %2406 = vset.pattern.permute.xlu0 32
  %2407 = vperm.xlu0 %2406, %v116
  %v2408 = vpop.permute.xlu0 %2407
  %2410 = vset.pattern.permute.xlu0 32
  %2411 = vperm.xlu0 %2410, %v117
  %v2412 = vpop.permute.xlu0 %2411
  %2414 = vset.pattern.permute.xlu0 32
  %2415 = vperm.xlu0 %2414, %v118
  %v2416 = vpop.permute.xlu0 %2415
  %2418 = vset.pattern.permute.xlu0 32
  %2419 = vperm.xlu0 %2418, %v119
  %v2420 = vpop.permute.xlu0 %2419
  %2422 = vset.pattern.permute.xlu0 32
  %2423 = vperm.xlu0 %2422, %v120
  %v2424 = vpop.permute.xlu0 %2423
  %2426 = vset.pattern.permute.xlu0 32
  %2427 = vperm.xlu0 %2426, %v121
  %v2428 = vpop.permute.xlu0 %2427
  %2430 = vset.pattern.permute.xlu0 32
  %2431 = vperm.xlu0 %2430, %v122
  %v2432 = vpop.permute.xlu0 %2431
  %2434 = vset.pattern.permute.xlu0 32
  %2435 = vperm.xlu0 %2434, %v123
  %v2436 = vpop.permute.xlu0 %2435
  %2438 = vset.pattern.permute.xlu0 32
  %2439 = vperm.xlu0 %2438, %v124
  %v2440 = vpop.permute.xlu0 %2439
  %2442 = vset.pattern.permute.xlu0 32
  %2443 = vperm.xlu0 %2442, %v125
  %v2444 = vpop.permute.xlu0 %2443
  %2446 = vset.pattern.permute.xlu0 32
  %2447 = vperm.xlu0 %2446, %v126
  %v2448 = vpop.permute.xlu0 %2447
  %2450 = vset.pattern.permute.xlu0 32
  %2451 = vperm.xlu0 %2450, %v127
  %v2452 = vpop.permute.xlu0 %2451
  %2454 = vset.pattern.permute.xlu0 32
  %2455 = vperm.xlu0 %2454, %v128
  %v2456 = vpop.permute.xlu0 %2455
  %2458 = vset.pattern.permute.xlu0 32
  %2459 = vperm.xlu0 %2458, %v129
  %v2460 = vpop.permute.xlu0 %2459
  %2462 = vset.pattern.permute.xlu0 32
  %2463 = vperm.xlu0 %2462, %v130
  %v2464 = vpop.permute.xlu0 %2463
  %2466 = vset.pattern.permute.xlu0 32
  %2467 = vperm.xlu0 %2466, %v131
  %v2468 = vpop.permute.xlu0 %2467
  %2470 = vset.pattern.permute.xlu0 32
  %2471 = vperm.xlu0 %2470, %v132
  %v2472 = vpop.permute.xlu0 %2471
  %2474 = vset.pattern.permute.xlu0 32
  %2475 = vperm.xlu0 %2474, %v133
  %v2476 = vpop.permute.xlu0 %2475
  %2478 = vset.pattern.permute.xlu0 32
  %2479 = vperm.xlu0 %2478, %v134
  %v2480 = vpop.permute.xlu0 %2479
  %2482 = vset.pattern.permute.xlu0 32
  %2483 = vperm.xlu0 %2482, %v135
  %v2484 = vpop.permute.xlu0 %2483
  %2486 = vset.pattern.permute.xlu0 32
  %2487 = vperm.xlu0 %2486, %v136
  %v2488 = vpop.permute.xlu0 %2487
  %2490 = vset.pattern.permute.xlu0 32
  %2491 = vperm.xlu0 %2490, %v137
  %v2492 = vpop.permute.xlu0 %2491
  %2494 = vset.pattern.permute.xlu0 32
  %2495 = vperm.xlu0 %2494, %v138
  %v2496 = vpop.permute.xlu0 %2495
  %2498 = vset.pattern.permute.xlu0 32
  %2499 = vperm.xlu0 %2498, %v139
  %v2500 = vpop.permute.xlu0 %2499
  %2502 = vset.pattern.permute.xlu0 32
  %2503 = vperm.xlu0 %2502, %v140
  %v2504 = vpop.permute.xlu0 %2503
  %2506 = vset.pattern.permute.xlu0 32
  %2507 = vperm.xlu0 %2506, %v141
  %v2508 = vpop.permute.xlu0 %2507
  %v2510 = vlaneseq
  %v2511 = vshrl.u32 %v2510, 7
  %v2512 = vsub.s32 0, %v2511
  %v2513 = vrot.slane %v2009, %v2512
  %v2514 = vmul.f32 %v2012, %v2513
  %v2515 = vmul.f32 %v2016, %v2513
  %v2516 = vmul.f32 %v2020, %v2513
  %v2517 = vmul.f32 %v2024, %v2513
  %v2518 = vmul.f32 %v2028, %v2513
  %v2519 = vmul.f32 %v2032, %v2513
  %v2520 = vmul.f32 %v2036, %v2513
  %v2521 = vmul.f32 %v2040, %v2513
  %v2522 = vmul.f32 %v2044, %v2513
  %v2523 = vmul.f32 %v2048, %v2513
  %v2524 = vmul.f32 %v2052, %v2513
  %v2525 = vmul.f32 %v2056, %v2513
  %v2526 = vmul.f32 %v2060, %v2513
  %v2527 = vmul.f32 %v2064, %v2513
  %v2528 = vmul.f32 %v2068, %v2513
  %v2529 = vmul.f32 %v2072, %v2513
  %v2530 = vmul.f32 %v2076, %v2513
  %v2531 = vmul.f32 %v2080, %v2513
  %v2532 = vmul.f32 %v2084, %v2513
  %v2533 = vmul.f32 %v2088, %v2513
  %v2534 = vmul.f32 %v2092, %v2513
  %v2535 = vmul.f32 %v2096, %v2513
  %v2536 = vmul.f32 %v2100, %v2513
  %v2537 = vmul.f32 %v2104, %v2513
  %v2538 = vmul.f32 %v2108, %v2513
  %v2539 = vmul.f32 %v2112, %v2513
  %v2540 = vmul.f32 %v2116, %v2513
  %v2541 = vmul.f32 %v2120, %v2513
  %v2542 = vmul.f32 %v2124, %v2513
  %v2543 = vmul.f32 %v2128, %v2513
  %v2544 = vmul.f32 %v2132, %v2513
  %v2545 = vmul.f32 %v2136, %v2513
  %v2546 = vmul.f32 %v2140, %v2513
  %v2547 = vmul.f32 %v2144, %v2513
  %v2548 = vmul.f32 %v2148, %v2513
  %v2549 = vmul.f32 %v2152, %v2513
  %v2550 = vmul.f32 %v2156, %v2513
  %v2551 = vmul.f32 %v2160, %v2513
  %v2552 = vmul.f32 %v2164, %v2513
  %v2553 = vmul.f32 %v2168, %v2513
  %v2554 = vmul.f32 %v2172, %v2513
  %v2555 = vmul.f32 %v2176, %v2513
  %v2556 = vmul.f32 %v2180, %v2513
  %v2557 = vmul.f32 %v2184, %v2513
  %v2558 = vmul.f32 %v2188, %v2513
  %v2559 = vmul.f32 %v2192, %v2513
  %v2560 = vmul.f32 %v2196, %v2513
  %v2561 = vmul.f32 %v2200, %v2513
  %v2562 = vmul.f32 %v2204, %v2513
  %v2563 = vmul.f32 %v2208, %v2513
  %v2564 = vmul.f32 %v2212, %v2513
  %v2565 = vmul.f32 %v2216, %v2513
  %v2566 = vmul.f32 %v2220, %v2513
  %v2567 = vmul.f32 %v2224, %v2513
  %v2568 = vmul.f32 %v2228, %v2513
  %v2569 = vmul.f32 %v2232, %v2513
  %v2570 = vmul.f32 %v2236, %v2513
  %v2571 = vmul.f32 %v2240, %v2513
  %v2572 = vmul.f32 %v2244, %v2513
  %v2573 = vmul.f32 %v2248, %v2513
  %v2574 = vmul.f32 %v2252, %v2513
  %v2575 = vmul.f32 %v2256, %v2513
  %v2576 = vmul.f32 %v2260, %v2513
  %v2577 = vmul.f32 %v2264, %v2513
  %v2578 = vmul.f32 %v2268, %v2513
  %v2579 = vmul.f32 %v2272, %v2513
  %v2580 = vmul.f32 %v2276, %v2513
  %v2581 = vmul.f32 %v2280, %v2513
  %v2582 = vmul.f32 %v2284, %v2513
  %v2583 = vmul.f32 %v2288, %v2513
  %v2584 = vmul.f32 %v2292, %v2513
  %v2585 = vmul.f32 %v2296, %v2513
  %v2586 = vmul.f32 %v2300, %v2513
  %v2587 = vmul.f32 %v2304, %v2513
  %v2588 = vmul.f32 %v2308, %v2513
  %v2589 = vmul.f32 %v2312, %v2513
  %v2590 = vmul.f32 %v2316, %v2513
  %v2591 = vmul.f32 %v2320, %v2513
  %v2592 = vmul.f32 %v2324, %v2513
  %v2593 = vmul.f32 %v2328, %v2513
  %v2594 = vmul.f32 %v2332, %v2513
  %v2595 = vmul.f32 %v2336, %v2513
  %v2596 = vmul.f32 %v2340, %v2513
  %v2597 = vmul.f32 %v2344, %v2513
  %v2598 = vmul.f32 %v2348, %v2513
  %v2599 = vmul.f32 %v2352, %v2513
  %v2600 = vmul.f32 %v2356, %v2513
  %v2601 = vmul.f32 %v2360, %v2513
  %v2602 = vmul.f32 %v2364, %v2513
  %v2603 = vmul.f32 %v2368, %v2513
  %v2604 = vmul.f32 %v2372, %v2513
  %v2605 = vmul.f32 %v2376, %v2513
  %v2606 = vmul.f32 %v2380, %v2513
  %v2607 = vmul.f32 %v2384, %v2513
  %v2608 = vmul.f32 %v2388, %v2513
  %v2609 = vmul.f32 %v2392, %v2513
  %v2610 = vmul.f32 %v2396, %v2513
  %v2611 = vmul.f32 %v2400, %v2513
  %v2612 = vmul.f32 %v2404, %v2513
  %v2613 = vmul.f32 %v2408, %v2513
  %v2614 = vmul.f32 %v2412, %v2513
  %v2615 = vmul.f32 %v2416, %v2513
  %v2616 = vmul.f32 %v2420, %v2513
  %v2617 = vmul.f32 %v2424, %v2513
  %v2618 = vmul.f32 %v2428, %v2513
  %v2619 = vmul.f32 %v2432, %v2513
  %v2620 = vmul.f32 %v2436, %v2513
  %v2621 = vmul.f32 %v2440, %v2513
  %v2622 = vmul.f32 %v2444, %v2513
  %v2623 = vmul.f32 %v2448, %v2513
  %v2624 = vmul.f32 %v2452, %v2513
  %v2625 = vmul.f32 %v2456, %v2513
  %v2626 = vmul.f32 %v2460, %v2513
  %v2627 = vmul.f32 %v2464, %v2513
  %v2628 = vmul.f32 %v2468, %v2513
  %v2629 = vmul.f32 %v2472, %v2513
  %v2630 = vmul.f32 %v2476, %v2513
  %v2631 = vmul.f32 %v2480, %v2513
  %v2632 = vmul.f32 %v2484, %v2513
  %v2633 = vmul.f32 %v2488, %v2513
  %v2634 = vmul.f32 %v2492, %v2513
  %v2635 = vmul.f32 %v2496, %v2513
  %v2636 = vmul.f32 %v2500, %v2513
  %v2637 = vmul.f32 %v2504, %v2513
  %v2638 = vmul.f32 %v2508, %v2513
  %v2639 = vld [vmem:[%s3 + $0x1] sm:$0x1]
  %2640 = vset.pattern.permute.xlu0 33
  %2641 = vperm.xlu0 %2640, %v17
  %v2642 = vpop.permute.xlu0 %2641
  %2644 = vset.pattern.permute.xlu0 33
  %2645 = vperm.xlu0 %2644, %v18
  %v2646 = vpop.permute.xlu0 %2645
  %2648 = vset.pattern.permute.xlu0 33
  %2649 = vperm.xlu0 %2648, %v19
  %v2650 = vpop.permute.xlu0 %2649
  %2652 = vset.pattern.permute.xlu0 33
  %2653 = vperm.xlu0 %2652, %v20
  %v2654 = vpop.permute.xlu0 %2653
  %2656 = vset.pattern.permute.xlu0 33
  %2657 = vperm.xlu0 %2656, %v21
  %v2658 = vpop.permute.xlu0 %2657
  %2660 = vset.pattern.permute.xlu0 33
  %2661 = vperm.xlu0 %2660, %v22
  %v2662 = vpop.permute.xlu0 %2661
  %2664 = vset.pattern.permute.xlu0 33
  %2665 = vperm.xlu0 %2664, %v23
  %v2666 = vpop.permute.xlu0 %2665
  %2668 = vset.pattern.permute.xlu0 33
  %2669 = vperm.xlu0 %2668, %v24
  %v2670 = vpop.permute.xlu0 %2669
  %2672 = vset.pattern.permute.xlu0 33
  %2673 = vperm.xlu0 %2672, %v25
  %v2674 = vpop.permute.xlu0 %2673
  %2676 = vset.pattern.permute.xlu0 33
  %2677 = vperm.xlu0 %2676, %v26
  %v2678 = vpop.permute.xlu0 %2677
  %2680 = vset.pattern.permute.xlu0 33
  %2681 = vperm.xlu0 %2680, %v27
  %v2682 = vpop.permute.xlu0 %2681
  %2684 = vset.pattern.permute.xlu0 33
  %2685 = vperm.xlu0 %2684, %v28
  %v2686 = vpop.permute.xlu0 %2685
  %2688 = vset.pattern.permute.xlu0 33
  %2689 = vperm.xlu0 %2688, %v29
  %v2690 = vpop.permute.xlu0 %2689
  %2692 = vset.pattern.permute.xlu0 33
  %2693 = vperm.xlu0 %2692, %v30
  %v2694 = vpop.permute.xlu0 %2693
  %2696 = vset.pattern.permute.xlu0 33
  %2697 = vperm.xlu0 %2696, %v31
  %v2698 = vpop.permute.xlu0 %2697
  %2700 = vset.pattern.permute.xlu0 33
  %2701 = vperm.xlu0 %2700, %v32
  %v2702 = vpop.permute.xlu0 %2701
  %2704 = vset.pattern.permute.xlu0 33
  %2705 = vperm.xlu0 %2704, %v33
  %v2706 = vpop.permute.xlu0 %2705
  %2708 = vset.pattern.permute.xlu0 33
  %2709 = vperm.xlu0 %2708, %v34
  %v2710 = vpop.permute.xlu0 %2709
  %2712 = vset.pattern.permute.xlu0 33
  %2713 = vperm.xlu0 %2712, %v35
  %v2714 = vpop.permute.xlu0 %2713
  %2716 = vset.pattern.permute.xlu0 33
  %2717 = vperm.xlu0 %2716, %v36
  %v2718 = vpop.permute.xlu0 %2717
  %2720 = vset.pattern.permute.xlu0 33
  %2721 = vperm.xlu0 %2720, %v37
  %v2722 = vpop.permute.xlu0 %2721
  %2724 = vset.pattern.permute.xlu0 33
  %2725 = vperm.xlu0 %2724, %v38
  %v2726 = vpop.permute.xlu0 %2725
  %2728 = vset.pattern.permute.xlu0 33
  %2729 = vperm.xlu0 %2728, %v39
  %v2730 = vpop.permute.xlu0 %2729
  %2732 = vset.pattern.permute.xlu0 33
  %2733 = vperm.xlu0 %2732, %v40
  %v2734 = vpop.permute.xlu0 %2733
  %2736 = vset.pattern.permute.xlu0 33
  %2737 = vperm.xlu0 %2736, %v41
  %v2738 = vpop.permute.xlu0 %2737
  %2740 = vset.pattern.permute.xlu0 33
  %2741 = vperm.xlu0 %2740, %v42
  %v2742 = vpop.permute.xlu0 %2741
  %2744 = vset.pattern.permute.xlu0 33
  %2745 = vperm.xlu0 %2744, %v43
  %v2746 = vpop.permute.xlu0 %2745
  %2748 = vset.pattern.permute.xlu0 33
  %2749 = vperm.xlu0 %2748, %v44
  %v2750 = vpop.permute.xlu0 %2749
  %2752 = vset.pattern.permute.xlu0 33
  %2753 = vperm.xlu0 %2752, %v45
  %v2754 = vpop.permute.xlu0 %2753
  %2756 = vset.pattern.permute.xlu0 33
  %2757 = vperm.xlu0 %2756, %v46
  %v2758 = vpop.permute.xlu0 %2757
  %2760 = vset.pattern.permute.xlu0 33
  %2761 = vperm.xlu0 %2760, %v47
  %v2762 = vpop.permute.xlu0 %2761
  %2764 = vset.pattern.permute.xlu0 33
  %2765 = vperm.xlu0 %2764, %v48
  %v2766 = vpop.permute.xlu0 %2765
  %2768 = vset.pattern.permute.xlu0 33
  %2769 = vperm.xlu0 %2768, %v49
  %v2770 = vpop.permute.xlu0 %2769
  %2772 = vset.pattern.permute.xlu0 33
  %2773 = vperm.xlu0 %2772, %v50
  %v2774 = vpop.permute.xlu0 %2773
  %2776 = vset.pattern.permute.xlu0 33
  %2777 = vperm.xlu0 %2776, %v51
  %v2778 = vpop.permute.xlu0 %2777
  %2780 = vset.pattern.permute.xlu0 33
  %2781 = vperm.xlu0 %2780, %v52
  %v2782 = vpop.permute.xlu0 %2781
  %2784 = vset.pattern.permute.xlu0 33
  %2785 = vperm.xlu0 %2784, %v53
  %v2786 = vpop.permute.xlu0 %2785
  %2788 = vset.pattern.permute.xlu0 33
  %2789 = vperm.xlu0 %2788, %v54
  %v2790 = vpop.permute.xlu0 %2789
  %2792 = vset.pattern.permute.xlu0 33
  %2793 = vperm.xlu0 %2792, %v55
  %v2794 = vpop.permute.xlu0 %2793
  %2796 = vset.pattern.permute.xlu0 33
  %2797 = vperm.xlu0 %2796, %v56
  %v2798 = vpop.permute.xlu0 %2797
  %2800 = vset.pattern.permute.xlu0 33
  %2801 = vperm.xlu0 %2800, %v57
  %v2802 = vpop.permute.xlu0 %2801
  %2804 = vset.pattern.permute.xlu0 33
  %2805 = vperm.xlu0 %2804, %v58
  %v2806 = vpop.permute.xlu0 %2805
  %2808 = vset.pattern.permute.xlu0 33
  %2809 = vperm.xlu0 %2808, %v59
  %v2810 = vpop.permute.xlu0 %2809
  %2812 = vset.pattern.permute.xlu0 33
  %2813 = vperm.xlu0 %2812, %v60
  %v2814 = vpop.permute.xlu0 %2813
  %2816 = vset.pattern.permute.xlu0 33
  %2817 = vperm.xlu0 %2816, %v61
  %v2818 = vpop.permute.xlu0 %2817
  %2820 = vset.pattern.permute.xlu0 33
  %2821 = vperm.xlu0 %2820, %v62
  %v2822 = vpop.permute.xlu0 %2821
  %2824 = vset.pattern.permute.xlu0 33
  %2825 = vperm.xlu0 %2824, %v63
  %v2826 = vpop.permute.xlu0 %2825
  %2828 = vset.pattern.permute.xlu0 33
  %2829 = vperm.xlu0 %2828, %v64
  %v2830 = vpop.permute.xlu0 %2829
  %2832 = vset.pattern.permute.xlu0 33
  %2833 = vperm.xlu0 %2832, %v65
  %v2834 = vpop.permute.xlu0 %2833
  %2836 = vset.pattern.permute.xlu0 33
  %2837 = vperm.xlu0 %2836, %v66
  %v2838 = vpop.permute.xlu0 %2837
  %2840 = vset.pattern.permute.xlu0 33
  %2841 = vperm.xlu0 %2840, %v67
  %v2842 = vpop.permute.xlu0 %2841
  %2844 = vset.pattern.permute.xlu0 33
  %2845 = vperm.xlu0 %2844, %v68
  %v2846 = vpop.permute.xlu0 %2845
  %2848 = vset.pattern.permute.xlu0 33
  %2849 = vperm.xlu0 %2848, %v69
  %v2850 = vpop.permute.xlu0 %2849
  %2852 = vset.pattern.permute.xlu0 33
  %2853 = vperm.xlu0 %2852, %v70
  %v2854 = vpop.permute.xlu0 %2853
  %2856 = vset.pattern.permute.xlu0 33
  %2857 = vperm.xlu0 %2856, %v71
  %v2858 = vpop.permute.xlu0 %2857
  %2860 = vset.pattern.permute.xlu0 33
  %2861 = vperm.xlu0 %2860, %v72
  %v2862 = vpop.permute.xlu0 %2861
  %2864 = vset.pattern.permute.xlu0 33
  %2865 = vperm.xlu0 %2864, %v73
  %v2866 = vpop.permute.xlu0 %2865
  %2868 = vset.pattern.permute.xlu0 33
  %2869 = vperm.xlu0 %2868, %v74
  %v2870 = vpop.permute.xlu0 %2869
  %2872 = vset.pattern.permute.xlu0 33
  %2873 = vperm.xlu0 %2872, %v75
  %v2874 = vpop.permute.xlu0 %2873
  %2876 = vset.pattern.permute.xlu0 33
  %2877 = vperm.xlu0 %2876, %v76
  %v2878 = vpop.permute.xlu0 %2877
  %2880 = vset.pattern.permute.xlu0 33
  %2881 = vperm.xlu0 %2880, %v77
  %v2882 = vpop.permute.xlu0 %2881
  %2884 = vset.pattern.permute.xlu0 33
  %2885 = vperm.xlu0 %2884, %v78
  %v2886 = vpop.permute.xlu0 %2885
  %2888 = vset.pattern.permute.xlu0 33
  %2889 = vperm.xlu0 %2888, %v79
  %v2890 = vpop.permute.xlu0 %2889
  %2892 = vset.pattern.permute.xlu0 33
  %2893 = vperm.xlu0 %2892, %v80
  %v2894 = vpop.permute.xlu0 %2893
  %2896 = vset.pattern.permute.xlu0 33
  %2897 = vperm.xlu0 %2896, %v81
  %v2898 = vpop.permute.xlu0 %2897
  %2900 = vset.pattern.permute.xlu0 33
  %2901 = vperm.xlu0 %2900, %v82
  %v2902 = vpop.permute.xlu0 %2901
  %2904 = vset.pattern.permute.xlu0 33
  %2905 = vperm.xlu0 %2904, %v83
  %v2906 = vpop.permute.xlu0 %2905
  %2908 = vset.pattern.permute.xlu0 33
  %2909 = vperm.xlu0 %2908, %v84
  %v2910 = vpop.permute.xlu0 %2909
  %2912 = vset.pattern.permute.xlu0 33
  %2913 = vperm.xlu0 %2912, %v85
  %v2914 = vpop.permute.xlu0 %2913
  %2916 = vset.pattern.permute.xlu0 33
  %2917 = vperm.xlu0 %2916, %v86
  %v2918 = vpop.permute.xlu0 %2917
  %2920 = vset.pattern.permute.xlu0 33
  %2921 = vperm.xlu0 %2920, %v87
  %v2922 = vpop.permute.xlu0 %2921
  %2924 = vset.pattern.permute.xlu0 33
  %2925 = vperm.xlu0 %2924, %v88
  %v2926 = vpop.permute.xlu0 %2925
  %2928 = vset.pattern.permute.xlu0 33
  %2929 = vperm.xlu0 %2928, %v89
  %v2930 = vpop.permute.xlu0 %2929
  %2932 = vset.pattern.permute.xlu0 33
  %2933 = vperm.xlu0 %2932, %v90
  %v2934 = vpop.permute.xlu0 %2933
  %2936 = vset.pattern.permute.xlu0 33
  %2937 = vperm.xlu0 %2936, %v91
  %v2938 = vpop.permute.xlu0 %2937
  %2940 = vset.pattern.permute.xlu0 33
  %2941 = vperm.xlu0 %2940, %v92
  %v2942 = vpop.permute.xlu0 %2941
  %2944 = vset.pattern.permute.xlu0 33
  %2945 = vperm.xlu0 %2944, %v93
  %v2946 = vpop.permute.xlu0 %2945
  %2948 = vset.pattern.permute.xlu0 33
  %2949 = vperm.xlu0 %2948, %v94
  %v2950 = vpop.permute.xlu0 %2949
  %2952 = vset.pattern.permute.xlu0 33
  %2953 = vperm.xlu0 %2952, %v95
  %v2954 = vpop.permute.xlu0 %2953
  %2956 = vset.pattern.permute.xlu0 33
  %2957 = vperm.xlu0 %2956, %v96
  %v2958 = vpop.permute.xlu0 %2957
  %2960 = vset.pattern.permute.xlu0 33
  %2961 = vperm.xlu0 %2960, %v97
  %v2962 = vpop.permute.xlu0 %2961
  %2964 = vset.pattern.permute.xlu0 33
  %2965 = vperm.xlu0 %2964, %v98
  %v2966 = vpop.permute.xlu0 %2965
  %2968 = vset.pattern.permute.xlu0 33
  %2969 = vperm.xlu0 %2968, %v99
  %v2970 = vpop.permute.xlu0 %2969
  %2972 = vset.pattern.permute.xlu0 33
  %2973 = vperm.xlu0 %2972, %v100
  %v2974 = vpop.permute.xlu0 %2973
  %2976 = vset.pattern.permute.xlu0 33
  %2977 = vperm.xlu0 %2976, %v101
  %v2978 = vpop.permute.xlu0 %2977
  %2980 = vset.pattern.permute.xlu0 33
  %2981 = vperm.xlu0 %2980, %v102
  %v2982 = vpop.permute.xlu0 %2981
  %2984 = vset.pattern.permute.xlu0 33
  %2985 = vperm.xlu0 %2984, %v103
  %v2986 = vpop.permute.xlu0 %2985
  %2988 = vset.pattern.permute.xlu0 33
  %2989 = vperm.xlu0 %2988, %v104
  %v2990 = vpop.permute.xlu0 %2989
  %2992 = vset.pattern.permute.xlu0 33
  %2993 = vperm.xlu0 %2992, %v105
  %v2994 = vpop.permute.xlu0 %2993
  %2996 = vset.pattern.permute.xlu0 33
  %2997 = vperm.xlu0 %2996, %v106
  %v2998 = vpop.permute.xlu0 %2997
  %3000 = vset.pattern.permute.xlu0 33
  %3001 = vperm.xlu0 %3000, %v107
  %v3002 = vpop.permute.xlu0 %3001
  %3004 = vset.pattern.permute.xlu0 33
  %3005 = vperm.xlu0 %3004, %v108
  %v3006 = vpop.permute.xlu0 %3005
  %3008 = vset.pattern.permute.xlu0 33
  %3009 = vperm.xlu0 %3008, %v109
  %v3010 = vpop.permute.xlu0 %3009
  %3012 = vset.pattern.permute.xlu0 33
  %3013 = vperm.xlu0 %3012, %v110
  %v3014 = vpop.permute.xlu0 %3013
  %3016 = vset.pattern.permute.xlu0 33
  %3017 = vperm.xlu0 %3016, %v111
  %v3018 = vpop.permute.xlu0 %3017
  %3020 = vset.pattern.permute.xlu0 33
  %3021 = vperm.xlu0 %3020, %v112
  %v3022 = vpop.permute.xlu0 %3021
  %3024 = vset.pattern.permute.xlu0 33
  %3025 = vperm.xlu0 %3024, %v113
  %v3026 = vpop.permute.xlu0 %3025
  %3028 = vset.pattern.permute.xlu0 33
  %3029 = vperm.xlu0 %3028, %v114
  %v3030 = vpop.permute.xlu0 %3029
  %3032 = vset.pattern.permute.xlu0 33
  %3033 = vperm.xlu0 %3032, %v115
  %v3034 = vpop.permute.xlu0 %3033
  %3036 = vset.pattern.permute.xlu0 33
  %3037 = vperm.xlu0 %3036, %v116
  %v3038 = vpop.permute.xlu0 %3037
  %3040 = vset.pattern.permute.xlu0 33
  %3041 = vperm.xlu0 %3040, %v117
  %v3042 = vpop.permute.xlu0 %3041
  %3044 = vset.pattern.permute.xlu0 33
  %3045 = vperm.xlu0 %3044, %v118
  %v3046 = vpop.permute.xlu0 %3045
  %3048 = vset.pattern.permute.xlu0 33
  %3049 = vperm.xlu0 %3048, %v119
  %v3050 = vpop.permute.xlu0 %3049
  %3052 = vset.pattern.permute.xlu0 33
  %3053 = vperm.xlu0 %3052, %v120
  %v3054 = vpop.permute.xlu0 %3053
  %3056 = vset.pattern.permute.xlu0 33
  %3057 = vperm.xlu0 %3056, %v121
  %v3058 = vpop.permute.xlu0 %3057
  %3060 = vset.pattern.permute.xlu0 33
  %3061 = vperm.xlu0 %3060, %v122
  %v3062 = vpop.permute.xlu0 %3061
  %3064 = vset.pattern.permute.xlu0 33
  %3065 = vperm.xlu0 %3064, %v123
  %v3066 = vpop.permute.xlu0 %3065
  %3068 = vset.pattern.permute.xlu0 33
  %3069 = vperm.xlu0 %3068, %v124
  %v3070 = vpop.permute.xlu0 %3069
  %3072 = vset.pattern.permute.xlu0 33
  %3073 = vperm.xlu0 %3072, %v125
  %v3074 = vpop.permute.xlu0 %3073
  %3076 = vset.pattern.permute.xlu0 33
  %3077 = vperm.xlu0 %3076, %v126
  %v3078 = vpop.permute.xlu0 %3077
  %3080 = vset.pattern.permute.xlu0 33
  %3081 = vperm.xlu0 %3080, %v127
  %v3082 = vpop.permute.xlu0 %3081
  %3084 = vset.pattern.permute.xlu0 33
  %3085 = vperm.xlu0 %3084, %v128
  %v3086 = vpop.permute.xlu0 %3085
  %3088 = vset.pattern.permute.xlu0 33
  %3089 = vperm.xlu0 %3088, %v129
  %v3090 = vpop.permute.xlu0 %3089
  %3092 = vset.pattern.permute.xlu0 33
  %3093 = vperm.xlu0 %3092, %v130
  %v3094 = vpop.permute.xlu0 %3093
  %3096 = vset.pattern.permute.xlu0 33
  %3097 = vperm.xlu0 %3096, %v131
  %v3098 = vpop.permute.xlu0 %3097
  %3100 = vset.pattern.permute.xlu0 33
  %3101 = vperm.xlu0 %3100, %v132
  %v3102 = vpop.permute.xlu0 %3101
  %3104 = vset.pattern.permute.xlu0 33
  %3105 = vperm.xlu0 %3104, %v133
  %v3106 = vpop.permute.xlu0 %3105
  %3108 = vset.pattern.permute.xlu0 33
  %3109 = vperm.xlu0 %3108, %v134
  %v3110 = vpop.permute.xlu0 %3109
  %3112 = vset.pattern.permute.xlu0 33
  %3113 = vperm.xlu0 %3112, %v135
  %v3114 = vpop.permute.xlu0 %3113
  %3116 = vset.pattern.permute.xlu0 33
  %3117 = vperm.xlu0 %3116, %v136
  %v3118 = vpop.permute.xlu0 %3117
  %3120 = vset.pattern.permute.xlu0 33
  %3121 = vperm.xlu0 %3120, %v137
  %v3122 = vpop.permute.xlu0 %3121
  %3124 = vset.pattern.permute.xlu0 33
  %3125 = vperm.xlu0 %3124, %v138
  %v3126 = vpop.permute.xlu0 %3125
  %3128 = vset.pattern.permute.xlu0 33
  %3129 = vperm.xlu0 %3128, %v139
  %v3130 = vpop.permute.xlu0 %3129
  %3132 = vset.pattern.permute.xlu0 33
  %3133 = vperm.xlu0 %3132, %v140
  %v3134 = vpop.permute.xlu0 %3133
  %3136 = vset.pattern.permute.xlu0 33
  %3137 = vperm.xlu0 %3136, %v141
  %v3138 = vpop.permute.xlu0 %3137
  %v3140 = vlaneseq
  %v3141 = vshrl.u32 %v3140, 7
  %v3142 = vsub.s32 0, %v3141
  %v3143 = vrot.slane %v2639, %v3142
  %v3144 = vmul.f32 %v2642, %v3143
  %v3145 = vmul.f32 %v2646, %v3143
  %v3146 = vmul.f32 %v2650, %v3143
  %v3147 = vmul.f32 %v2654, %v3143
  %v3148 = vmul.f32 %v2658, %v3143
  %v3149 = vmul.f32 %v2662, %v3143
  %v3150 = vmul.f32 %v2666, %v3143
  %v3151 = vmul.f32 %v2670, %v3143
  %v3152 = vmul.f32 %v2674, %v3143
  %v3153 = vmul.f32 %v2678, %v3143
  %v3154 = vmul.f32 %v2682, %v3143
  %v3155 = vmul.f32 %v2686, %v3143
  %v3156 = vmul.f32 %v2690, %v3143
  %v3157 = vmul.f32 %v2694, %v3143
  %v3158 = vmul.f32 %v2698, %v3143
  %v3159 = vmul.f32 %v2702, %v3143
  %v3160 = vmul.f32 %v2706, %v3143
  %v3161 = vmul.f32 %v2710, %v3143
  %v3162 = vmul.f32 %v2714, %v3143
  %v3163 = vmul.f32 %v2718, %v3143
  %v3164 = vmul.f32 %v2722, %v3143
  %v3165 = vmul.f32 %v2726, %v3143
  %v3166 = vmul.f32 %v2730, %v3143
  %v3167 = vmul.f32 %v2734, %v3143
  %v3168 = vmul.f32 %v2738, %v3143
  %v3169 = vmul.f32 %v2742, %v3143
  %v3170 = vmul.f32 %v2746, %v3143
  %v3171 = vmul.f32 %v2750, %v3143
  %v3172 = vmul.f32 %v2754, %v3143
  %v3173 = vmul.f32 %v2758, %v3143
  %v3174 = vmul.f32 %v2762, %v3143
  %v3175 = vmul.f32 %v2766, %v3143
  %v3176 = vmul.f32 %v2770, %v3143
  %v3177 = vmul.f32 %v2774, %v3143
  %v3178 = vmul.f32 %v2778, %v3143
  %v3179 = vmul.f32 %v2782, %v3143
  %v3180 = vmul.f32 %v2786, %v3143
  %v3181 = vmul.f32 %v2790, %v3143
  %v3182 = vmul.f32 %v2794, %v3143
  %v3183 = vmul.f32 %v2798, %v3143
  %v3184 = vmul.f32 %v2802, %v3143
  %v3185 = vmul.f32 %v2806, %v3143
  %v3186 = vmul.f32 %v2810, %v3143
  %v3187 = vmul.f32 %v2814, %v3143
  %v3188 = vmul.f32 %v2818, %v3143
  %v3189 = vmul.f32 %v2822, %v3143
  %v3190 = vmul.f32 %v2826, %v3143
  %v3191 = vmul.f32 %v2830, %v3143
  %v3192 = vmul.f32 %v2834, %v3143
  %v3193 = vmul.f32 %v2838, %v3143
  %v3194 = vmul.f32 %v2842, %v3143
  %v3195 = vmul.f32 %v2846, %v3143
  %v3196 = vmul.f32 %v2850, %v3143
  %v3197 = vmul.f32 %v2854, %v3143
  %v3198 = vmul.f32 %v2858, %v3143
  %v3199 = vmul.f32 %v2862, %v3143
  %v3200 = vmul.f32 %v2866, %v3143
  %v3201 = vmul.f32 %v2870, %v3143
  %v3202 = vmul.f32 %v2874, %v3143
  %v3203 = vmul.f32 %v2878, %v3143
  %v3204 = vmul.f32 %v2882, %v3143
  %v3205 = vmul.f32 %v2886, %v3143
  %v3206 = vmul.f32 %v2890, %v3143
  %v3207 = vmul.f32 %v2894, %v3143
  %v3208 = vmul.f32 %v2898, %v3143
  %v3209 = vmul.f32 %v2902, %v3143
  %v3210 = vmul.f32 %v2906, %v3143
  %v3211 = vmul.f32 %v2910, %v3143
  %v3212 = vmul.f32 %v2914, %v3143
  %v3213 = vmul.f32 %v2918, %v3143
  %v3214 = vmul.f32 %v2922, %v3143
  %v3215 = vmul.f32 %v2926, %v3143
  %v3216 = vmul.f32 %v2930, %v3143
  %v3217 = vmul.f32 %v2934, %v3143
  %v3218 = vmul.f32 %v2938, %v3143
  %v3219 = vmul.f32 %v2942, %v3143
  %v3220 = vmul.f32 %v2946, %v3143
  %v3221 = vmul.f32 %v2950, %v3143
  %v3222 = vmul.f32 %v2954, %v3143
  %v3223 = vmul.f32 %v2958, %v3143
  %v3224 = vmul.f32 %v2962, %v3143
  %v3225 = vmul.f32 %v2966, %v3143
  %v3226 = vmul.f32 %v2970, %v3143
  %v3227 = vmul.f32 %v2974, %v3143
  %v3228 = vmul.f32 %v2978, %v3143
  %v3229 = vmul.f32 %v2982, %v3143
  %v3230 = vmul.f32 %v2986, %v3143
  %v3231 = vmul.f32 %v2990, %v3143
  %v3232 = vmul.f32 %v2994, %v3143
  %v3233 = vmul.f32 %v2998, %v3143
  %v3234 = vmul.f32 %v3002, %v3143
  %v3235 = vmul.f32 %v3006, %v3143
  %v3236 = vmul.f32 %v3010, %v3143
  %v3237 = vmul.f32 %v3014, %v3143
  %v3238 = vmul.f32 %v3018, %v3143
  %v3239 = vmul.f32 %v3022, %v3143
  %v3240 = vmul.f32 %v3026, %v3143
  %v3241 = vmul.f32 %v3030, %v3143
  %v3242 = vmul.f32 %v3034, %v3143
  %v3243 = vmul.f32 %v3038, %v3143
  %v3244 = vmul.f32 %v3042, %v3143
  %v3245 = vmul.f32 %v3046, %v3143
  %v3246 = vmul.f32 %v3050, %v3143
  %v3247 = vmul.f32 %v3054, %v3143
  %v3248 = vmul.f32 %v3058, %v3143
  %v3249 = vmul.f32 %v3062, %v3143
  %v3250 = vmul.f32 %v3066, %v3143
  %v3251 = vmul.f32 %v3070, %v3143
  %v3252 = vmul.f32 %v3074, %v3143
  %v3253 = vmul.f32 %v3078, %v3143
  %v3254 = vmul.f32 %v3082, %v3143
  %v3255 = vmul.f32 %v3086, %v3143
  %v3256 = vmul.f32 %v3090, %v3143
  %v3257 = vmul.f32 %v3094, %v3143
  %v3258 = vmul.f32 %v3098, %v3143
  %v3259 = vmul.f32 %v3102, %v3143
  %v3260 = vmul.f32 %v3106, %v3143
  %v3261 = vmul.f32 %v3110, %v3143
  %v3262 = vmul.f32 %v3114, %v3143
  %v3263 = vmul.f32 %v3118, %v3143
  %v3264 = vmul.f32 %v3122, %v3143
  %v3265 = vmul.f32 %v3126, %v3143
  %v3266 = vmul.f32 %v3130, %v3143
  %v3267 = vmul.f32 %v3134, %v3143
  %v3268 = vmul.f32 %v3138, %v3143
  %v3269 = vadd.f32 %v2514, %v3144
  %v3270 = vadd.f32 %v2515, %v3145
  %v3271 = vadd.f32 %v2516, %v3146
  %v3272 = vadd.f32 %v2517, %v3147
  %v3273 = vadd.f32 %v2518, %v3148
  %v3274 = vadd.f32 %v2519, %v3149
  %v3275 = vadd.f32 %v2520, %v3150
  %v3276 = vadd.f32 %v2521, %v3151
  %v3277 = vadd.f32 %v2522, %v3152
  %v3278 = vadd.f32 %v2523, %v3153
  %v3279 = vadd.f32 %v2524, %v3154
  %v3280 = vadd.f32 %v2525, %v3155
  %v3281 = vadd.f32 %v2526, %v3156
  %v3282 = vadd.f32 %v2527, %v3157
  %v3283 = vadd.f32 %v2528, %v3158
  %v3284 = vadd.f32 %v2529, %v3159
  %v3285 = vadd.f32 %v2530, %v3160
  %v3286 = vadd.f32 %v2531, %v3161
  %v3287 = vadd.f32 %v2532, %v3162
  %v3288 = vadd.f32 %v2533, %v3163
  %v3289 = vadd.f32 %v2534, %v3164
  %v3290 = vadd.f32 %v2535, %v3165
  %v3291 = vadd.f32 %v2536, %v3166
  %v3292 = vadd.f32 %v2537, %v3167
  %v3293 = vadd.f32 %v2538, %v3168
  %v3294 = vadd.f32 %v2539, %v3169
  %v3295 = vadd.f32 %v2540, %v3170
  %v3296 = vadd.f32 %v2541, %v3171
  %v3297 = vadd.f32 %v2542, %v3172
  %v3298 = vadd.f32 %v2543, %v3173
  %v3299 = vadd.f32 %v2544, %v3174
  %v3300 = vadd.f32 %v2545, %v3175
  %v3301 = vadd.f32 %v2546, %v3176
  %v3302 = vadd.f32 %v2547, %v3177
  %v3303 = vadd.f32 %v2548, %v3178
  %v3304 = vadd.f32 %v2549, %v3179
  %v3305 = vadd.f32 %v2550, %v3180
  %v3306 = vadd.f32 %v2551, %v3181
  %v3307 = vadd.f32 %v2552, %v3182
  %v3308 = vadd.f32 %v2553, %v3183
  %v3309 = vadd.f32 %v2554, %v3184
  %v3310 = vadd.f32 %v2555, %v3185
  %v3311 = vadd.f32 %v2556, %v3186
  %v3312 = vadd.f32 %v2557, %v3187
  %v3313 = vadd.f32 %v2558, %v3188
  %v3314 = vadd.f32 %v2559, %v3189
  %v3315 = vadd.f32 %v2560, %v3190
  %v3316 = vadd.f32 %v2561, %v3191
  %v3317 = vadd.f32 %v2562, %v3192
  %v3318 = vadd.f32 %v2563, %v3193
  %v3319 = vadd.f32 %v2564, %v3194
  %v3320 = vadd.f32 %v2565, %v3195
  %v3321 = vadd.f32 %v2566, %v3196
  %v3322 = vadd.f32 %v2567, %v3197
  %v3323 = vadd.f32 %v2568, %v3198
  %v3324 = vadd.f32 %v2569, %v3199
  %v3325 = vadd.f32 %v2570, %v3200
  %v3326 = vadd.f32 %v2571, %v3201
  %v3327 = vadd.f32 %v2572, %v3202
  %v3328 = vadd.f32 %v2573, %v3203
  %v3329 = vadd.f32 %v2574, %v3204
  %v3330 = vadd.f32 %v2575, %v3205
  %v3331 = vadd.f32 %v2576, %v3206
  %v3332 = vadd.f32 %v2577, %v3207
  %v3333 = vadd.f32 %v2578, %v3208
  %v3334 = vadd.f32 %v2579, %v3209
  %v3335 = vadd.f32 %v2580, %v3210
  %v3336 = vadd.f32 %v2581, %v3211
  %v3337 = vadd.f32 %v2582, %v3212
  %v3338 = vadd.f32 %v2583, %v3213
  %v3339 = vadd.f32 %v2584, %v3214
  %v3340 = vadd.f32 %v2585, %v3215
  %v3341 = vadd.f32 %v2586, %v3216
  %v3342 = vadd.f32 %v2587, %v3217
  %v3343 = vadd.f32 %v2588, %v3218
  %v3344 = vadd.f32 %v2589, %v3219
  %v3345 = vadd.f32 %v2590, %v3220
  %v3346 = vadd.f32 %v2591, %v3221
  %v3347 = vadd.f32 %v2592, %v3222
  %v3348 = vadd.f32 %v2593, %v3223
  %v3349 = vadd.f32 %v2594, %v3224
  %v3350 = vadd.f32 %v2595, %v3225
  %v3351 = vadd.f32 %v2596, %v3226
  %v3352 = vadd.f32 %v2597, %v3227
  %v3353 = vadd.f32 %v2598, %v3228
  %v3354 = vadd.f32 %v2599, %v3229
  %v3355 = vadd.f32 %v2600, %v3230
  %v3356 = vadd.f32 %v2601, %v3231
  %v3357 = vadd.f32 %v2602, %v3232
  %v3358 = vadd.f32 %v2603, %v3233
  %v3359 = vadd.f32 %v2604, %v3234
  %v3360 = vadd.f32 %v2605, %v3235
  %v3361 = vadd.f32 %v2606, %v3236
  %v3362 = vadd.f32 %v2607, %v3237
  %v3363 = vadd.f32 %v2608, %v3238
  %v3364 = vadd.f32 %v2609, %v3239
  %v3365 = vadd.f32 %v2610, %v3240
  %v3366 = vadd.f32 %v2611, %v3241
  %v3367 = vadd.f32 %v2612, %v3242
  %v3368 = vadd.f32 %v2613, %v3243
  %v3369 = vadd.f32 %v2614, %v3244
  %v3370 = vadd.f32 %v2615, %v3245
  %v3371 = vadd.f32 %v2616, %v3246
  %v3372 = vadd.f32 %v2617, %v3247
  %v3373 = vadd.f32 %v2618, %v3248
  %v3374 = vadd.f32 %v2619, %v3249
  %v3375 = vadd.f32 %v2620, %v3250
  %v3376 = vadd.f32 %v2621, %v3251
  %v3377 = vadd.f32 %v2622, %v3252
  %v3378 = vadd.f32 %v2623, %v3253
  %v3379 = vadd.f32 %v2624, %v3254
  %v3380 = vadd.f32 %v2625, %v3255
  %v3381 = vadd.f32 %v2626, %v3256
  %v3382 = vadd.f32 %v2627, %v3257
  %v3383 = vadd.f32 %v2628, %v3258
  %v3384 = vadd.f32 %v2629, %v3259
  %v3385 = vadd.f32 %v2630, %v3260
  %v3386 = vadd.f32 %v2631, %v3261
  %v3387 = vadd.f32 %v2632, %v3262
  %v3388 = vadd.f32 %v2633, %v3263
  %v3389 = vadd.f32 %v2634, %v3264
  %v3390 = vadd.f32 %v2635, %v3265
  %v3391 = vadd.f32 %v2636, %v3266
  %v3392 = vadd.f32 %v2637, %v3267
  %v3393 = vadd.f32 %v2638, %v3268
  %v3394 = vld [vmem:[%s3 + $0x2] sm:$0x1]
  %3395 = vset.pattern.permute.xlu0 34
  %3396 = vperm.xlu0 %3395, %v17
  %v3397 = vpop.permute.xlu0 %3396
  %3399 = vset.pattern.permute.xlu0 34
  %3400 = vperm.xlu0 %3399, %v18
  %v3401 = vpop.permute.xlu0 %3400
  %3403 = vset.pattern.permute.xlu0 34
  %3404 = vperm.xlu0 %3403, %v19
  %v3405 = vpop.permute.xlu0 %3404
  %3407 = vset.pattern.permute.xlu0 34
  %3408 = vperm.xlu0 %3407, %v20
  %v3409 = vpop.permute.xlu0 %3408
  %3411 = vset.pattern.permute.xlu0 34
  %3412 = vperm.xlu0 %3411, %v21
  %v3413 = vpop.permute.xlu0 %3412
  %3415 = vset.pattern.permute.xlu0 34
  %3416 = vperm.xlu0 %3415, %v22
  %v3417 = vpop.permute.xlu0 %3416
  %3419 = vset.pattern.permute.xlu0 34
  %3420 = vperm.xlu0 %3419, %v23
  %v3421 = vpop.permute.xlu0 %3420
  %3423 = vset.pattern.permute.xlu0 34
  %3424 = vperm.xlu0 %3423, %v24
  %v3425 = vpop.permute.xlu0 %3424
  %3427 = vset.pattern.permute.xlu0 34
  %3428 = vperm.xlu0 %3427, %v25
  %v3429 = vpop.permute.xlu0 %3428
  %3431 = vset.pattern.permute.xlu0 34
  %3432 = vperm.xlu0 %3431, %v26
  %v3433 = vpop.permute.xlu0 %3432
  %3435 = vset.pattern.permute.xlu0 34
  %3436 = vperm.xlu0 %3435, %v27
  %v3437 = vpop.permute.xlu0 %3436
  %3439 = vset.pattern.permute.xlu0 34
  %3440 = vperm.xlu0 %3439, %v28
  %v3441 = vpop.permute.xlu0 %3440
  %3443 = vset.pattern.permute.xlu0 34
  %3444 = vperm.xlu0 %3443, %v29
  %v3445 = vpop.permute.xlu0 %3444
  %3447 = vset.pattern.permute.xlu0 34
  %3448 = vperm.xlu0 %3447, %v30
  %v3449 = vpop.permute.xlu0 %3448
  %3451 = vset.pattern.permute.xlu0 34
  %3452 = vperm.xlu0 %3451, %v31
  %v3453 = vpop.permute.xlu0 %3452
  %3455 = vset.pattern.permute.xlu0 34
  %3456 = vperm.xlu0 %3455, %v32
  %v3457 = vpop.permute.xlu0 %3456
  %3459 = vset.pattern.permute.xlu0 34
  %3460 = vperm.xlu0 %3459, %v33
  %v3461 = vpop.permute.xlu0 %3460
  %3463 = vset.pattern.permute.xlu0 34
  %3464 = vperm.xlu0 %3463, %v34
  %v3465 = vpop.permute.xlu0 %3464
  %3467 = vset.pattern.permute.xlu0 34
  %3468 = vperm.xlu0 %3467, %v35
  %v3469 = vpop.permute.xlu0 %3468
  %3471 = vset.pattern.permute.xlu0 34
  %3472 = vperm.xlu0 %3471, %v36
  %v3473 = vpop.permute.xlu0 %3472
  %3475 = vset.pattern.permute.xlu0 34
  %3476 = vperm.xlu0 %3475, %v37
  %v3477 = vpop.permute.xlu0 %3476
  %3479 = vset.pattern.permute.xlu0 34
  %3480 = vperm.xlu0 %3479, %v38
  %v3481 = vpop.permute.xlu0 %3480
  %3483 = vset.pattern.permute.xlu0 34
  %3484 = vperm.xlu0 %3483, %v39
  %v3485 = vpop.permute.xlu0 %3484
  %3487 = vset.pattern.permute.xlu0 34
  %3488 = vperm.xlu0 %3487, %v40
  %v3489 = vpop.permute.xlu0 %3488
  %3491 = vset.pattern.permute.xlu0 34
  %3492 = vperm.xlu0 %3491, %v41
  %v3493 = vpop.permute.xlu0 %3492
  %3495 = vset.pattern.permute.xlu0 34
  %3496 = vperm.xlu0 %3495, %v42
  %v3497 = vpop.permute.xlu0 %3496
  %3499 = vset.pattern.permute.xlu0 34
  %3500 = vperm.xlu0 %3499, %v43
  %v3501 = vpop.permute.xlu0 %3500
  %3503 = vset.pattern.permute.xlu0 34
  %3504 = vperm.xlu0 %3503, %v44
  %v3505 = vpop.permute.xlu0 %3504
  %3507 = vset.pattern.permute.xlu0 34
  %3508 = vperm.xlu0 %3507, %v45
  %v3509 = vpop.permute.xlu0 %3508
  %3511 = vset.pattern.permute.xlu0 34
  %3512 = vperm.xlu0 %3511, %v46
  %v3513 = vpop.permute.xlu0 %3512
  %3515 = vset.pattern.permute.xlu0 34
  %3516 = vperm.xlu0 %3515, %v47
  %v3517 = vpop.permute.xlu0 %3516
  %3519 = vset.pattern.permute.xlu0 34
  %3520 = vperm.xlu0 %3519, %v48
  %v3521 = vpop.permute.xlu0 %3520
  %3523 = vset.pattern.permute.xlu0 34
  %3524 = vperm.xlu0 %3523, %v49
  %v3525 = vpop.permute.xlu0 %3524
  %3527 = vset.pattern.permute.xlu0 34
  %3528 = vperm.xlu0 %3527, %v50
  %v3529 = vpop.permute.xlu0 %3528
  %3531 = vset.pattern.permute.xlu0 34
  %3532 = vperm.xlu0 %3531, %v51
  %v3533 = vpop.permute.xlu0 %3532
  %3535 = vset.pattern.permute.xlu0 34
  %3536 = vperm.xlu0 %3535, %v52
  %v3537 = vpop.permute.xlu0 %3536
  %3539 = vset.pattern.permute.xlu0 34
  %3540 = vperm.xlu0 %3539, %v53
  %v3541 = vpop.permute.xlu0 %3540
  %3543 = vset.pattern.permute.xlu0 34
  %3544 = vperm.xlu0 %3543, %v54
  %v3545 = vpop.permute.xlu0 %3544
  %3547 = vset.pattern.permute.xlu0 34
  %3548 = vperm.xlu0 %3547, %v55
  %v3549 = vpop.permute.xlu0 %3548
  %3551 = vset.pattern.permute.xlu0 34
  %3552 = vperm.xlu0 %3551, %v56
  %v3553 = vpop.permute.xlu0 %3552
  %3555 = vset.pattern.permute.xlu0 34
  %3556 = vperm.xlu0 %3555, %v57
  %v3557 = vpop.permute.xlu0 %3556
  %3559 = vset.pattern.permute.xlu0 34
  %3560 = vperm.xlu0 %3559, %v58
  %v3561 = vpop.permute.xlu0 %3560
  %3563 = vset.pattern.permute.xlu0 34
  %3564 = vperm.xlu0 %3563, %v59
  %v3565 = vpop.permute.xlu0 %3564
  %3567 = vset.pattern.permute.xlu0 34
  %3568 = vperm.xlu0 %3567, %v60
  %v3569 = vpop.permute.xlu0 %3568
  %3571 = vset.pattern.permute.xlu0 34
  %3572 = vperm.xlu0 %3571, %v61
  %v3573 = vpop.permute.xlu0 %3572
  %3575 = vset.pattern.permute.xlu0 34
  %3576 = vperm.xlu0 %3575, %v62
  %v3577 = vpop.permute.xlu0 %3576
  %3579 = vset.pattern.permute.xlu0 34
  %3580 = vperm.xlu0 %3579, %v63
  %v3581 = vpop.permute.xlu0 %3580
  %3583 = vset.pattern.permute.xlu0 34
  %3584 = vperm.xlu0 %3583, %v64
  %v3585 = vpop.permute.xlu0 %3584
  %3587 = vset.pattern.permute.xlu0 34
  %3588 = vperm.xlu0 %3587, %v65
  %v3589 = vpop.permute.xlu0 %3588
  %3591 = vset.pattern.permute.xlu0 34
  %3592 = vperm.xlu0 %3591, %v66
  %v3593 = vpop.permute.xlu0 %3592
  %3595 = vset.pattern.permute.xlu0 34
  %3596 = vperm.xlu0 %3595, %v67
  %v3597 = vpop.permute.xlu0 %3596
  %3599 = vset.pattern.permute.xlu0 34
  %3600 = vperm.xlu0 %3599, %v68
  %v3601 = vpop.permute.xlu0 %3600
  %3603 = vset.pattern.permute.xlu0 34
  %3604 = vperm.xlu0 %3603, %v69
  %v3605 = vpop.permute.xlu0 %3604
  %3607 = vset.pattern.permute.xlu0 34
  %3608 = vperm.xlu0 %3607, %v70
  %v3609 = vpop.permute.xlu0 %3608
  %3611 = vset.pattern.permute.xlu0 34
  %3612 = vperm.xlu0 %3611, %v71
  %v3613 = vpop.permute.xlu0 %3612
  %3615 = vset.pattern.permute.xlu0 34
  %3616 = vperm.xlu0 %3615, %v72
  %v3617 = vpop.permute.xlu0 %3616
  %3619 = vset.pattern.permute.xlu0 34
  %3620 = vperm.xlu0 %3619, %v73
  %v3621 = vpop.permute.xlu0 %3620
  %3623 = vset.pattern.permute.xlu0 34
  %3624 = vperm.xlu0 %3623, %v74
  %v3625 = vpop.permute.xlu0 %3624
  %3627 = vset.pattern.permute.xlu0 34
  %3628 = vperm.xlu0 %3627, %v75
  %v3629 = vpop.permute.xlu0 %3628
  %3631 = vset.pattern.permute.xlu0 34
  %3632 = vperm.xlu0 %3631, %v76
  %v3633 = vpop.permute.xlu0 %3632
  %3635 = vset.pattern.permute.xlu0 34
  %3636 = vperm.xlu0 %3635, %v77
  %v3637 = vpop.permute.xlu0 %3636
  %3639 = vset.pattern.permute.xlu0 34
  %3640 = vperm.xlu0 %3639, %v78
  %v3641 = vpop.permute.xlu0 %3640
  %3643 = vset.pattern.permute.xlu0 34
  %3644 = vperm.xlu0 %3643, %v79
  %v3645 = vpop.permute.xlu0 %3644
  %3647 = vset.pattern.permute.xlu0 34
  %3648 = vperm.xlu0 %3647, %v80
  %v3649 = vpop.permute.xlu0 %3648
  %3651 = vset.pattern.permute.xlu0 34
  %3652 = vperm.xlu0 %3651, %v81
  %v3653 = vpop.permute.xlu0 %3652
  %3655 = vset.pattern.permute.xlu0 34
  %3656 = vperm.xlu0 %3655, %v82
  %v3657 = vpop.permute.xlu0 %3656
  %3659 = vset.pattern.permute.xlu0 34
  %3660 = vperm.xlu0 %3659, %v83
  %v3661 = vpop.permute.xlu0 %3660
  %3663 = vset.pattern.permute.xlu0 34
  %3664 = vperm.xlu0 %3663, %v84
  %v3665 = vpop.permute.xlu0 %3664
  %3667 = vset.pattern.permute.xlu0 34
  %3668 = vperm.xlu0 %3667, %v85
  %v3669 = vpop.permute.xlu0 %3668
  %3671 = vset.pattern.permute.xlu0 34
  %3672 = vperm.xlu0 %3671, %v86
  %v3673 = vpop.permute.xlu0 %3672
  %3675 = vset.pattern.permute.xlu0 34
  %3676 = vperm.xlu0 %3675, %v87
  %v3677 = vpop.permute.xlu0 %3676
  %3679 = vset.pattern.permute.xlu0 34
  %3680 = vperm.xlu0 %3679, %v88
  %v3681 = vpop.permute.xlu0 %3680
  %3683 = vset.pattern.permute.xlu0 34
  %3684 = vperm.xlu0 %3683, %v89
  %v3685 = vpop.permute.xlu0 %3684
  %3687 = vset.pattern.permute.xlu0 34
  %3688 = vperm.xlu0 %3687, %v90
  %v3689 = vpop.permute.xlu0 %3688
  %3691 = vset.pattern.permute.xlu0 34
  %3692 = vperm.xlu0 %3691, %v91
  %v3693 = vpop.permute.xlu0 %3692
  %3695 = vset.pattern.permute.xlu0 34
  %3696 = vperm.xlu0 %3695, %v92
  %v3697 = vpop.permute.xlu0 %3696
  %3699 = vset.pattern.permute.xlu0 34
  %3700 = vperm.xlu0 %3699, %v93
  %v3701 = vpop.permute.xlu0 %3700
  %3703 = vset.pattern.permute.xlu0 34
  %3704 = vperm.xlu0 %3703, %v94
  %v3705 = vpop.permute.xlu0 %3704
  %3707 = vset.pattern.permute.xlu0 34
  %3708 = vperm.xlu0 %3707, %v95
  %v3709 = vpop.permute.xlu0 %3708
  %3711 = vset.pattern.permute.xlu0 34
  %3712 = vperm.xlu0 %3711, %v96
  %v3713 = vpop.permute.xlu0 %3712
  %3715 = vset.pattern.permute.xlu0 34
  %3716 = vperm.xlu0 %3715, %v97
  %v3717 = vpop.permute.xlu0 %3716
  %3719 = vset.pattern.permute.xlu0 34
  %3720 = vperm.xlu0 %3719, %v98
  %v3721 = vpop.permute.xlu0 %3720
  %3723 = vset.pattern.permute.xlu0 34
  %3724 = vperm.xlu0 %3723, %v99
  %v3725 = vpop.permute.xlu0 %3724
  %3727 = vset.pattern.permute.xlu0 34
  %3728 = vperm.xlu0 %3727, %v100
  %v3729 = vpop.permute.xlu0 %3728
  %3731 = vset.pattern.permute.xlu0 34
  %3732 = vperm.xlu0 %3731, %v101
  %v3733 = vpop.permute.xlu0 %3732
  %3735 = vset.pattern.permute.xlu0 34
  %3736 = vperm.xlu0 %3735, %v102
  %v3737 = vpop.permute.xlu0 %3736
  %3739 = vset.pattern.permute.xlu0 34
  %3740 = vperm.xlu0 %3739, %v103
  %v3741 = vpop.permute.xlu0 %3740
  %3743 = vset.pattern.permute.xlu0 34
  %3744 = vperm.xlu0 %3743, %v104
  %v3745 = vpop.permute.xlu0 %3744
  %3747 = vset.pattern.permute.xlu0 34
  %3748 = vperm.xlu0 %3747, %v105
  %v3749 = vpop.permute.xlu0 %3748
  %3751 = vset.pattern.permute.xlu0 34
  %3752 = vperm.xlu0 %3751, %v106
  %v3753 = vpop.permute.xlu0 %3752
  %3755 = vset.pattern.permute.xlu0 34
  %3756 = vperm.xlu0 %3755, %v107
  %v3757 = vpop.permute.xlu0 %3756
  %3759 = vset.pattern.permute.xlu0 34
  %3760 = vperm.xlu0 %3759, %v108
  %v3761 = vpop.permute.xlu0 %3760
  %3763 = vset.pattern.permute.xlu0 34
  %3764 = vperm.xlu0 %3763, %v109
  %v3765 = vpop.permute.xlu0 %3764
  %3767 = vset.pattern.permute.xlu0 34
  %3768 = vperm.xlu0 %3767, %v110
  %v3769 = vpop.permute.xlu0 %3768
  %3771 = vset.pattern.permute.xlu0 34
  %3772 = vperm.xlu0 %3771, %v111
  %v3773 = vpop.permute.xlu0 %3772
  %3775 = vset.pattern.permute.xlu0 34
  %3776 = vperm.xlu0 %3775, %v112
  %v3777 = vpop.permute.xlu0 %3776
  %3779 = vset.pattern.permute.xlu0 34
  %3780 = vperm.xlu0 %3779, %v113
  %v3781 = vpop.permute.xlu0 %3780
  %3783 = vset.pattern.permute.xlu0 34
  %3784 = vperm.xlu0 %3783, %v114
  %v3785 = vpop.permute.xlu0 %3784
  %3787 = vset.pattern.permute.xlu0 34
  %3788 = vperm.xlu0 %3787, %v115
  %v3789 = vpop.permute.xlu0 %3788
  %3791 = vset.pattern.permute.xlu0 34
  %3792 = vperm.xlu0 %3791, %v116
  %v3793 = vpop.permute.xlu0 %3792
  %3795 = vset.pattern.permute.xlu0 34
  %3796 = vperm.xlu0 %3795, %v117
  %v3797 = vpop.permute.xlu0 %3796
  %3799 = vset.pattern.permute.xlu0 34
  %3800 = vperm.xlu0 %3799, %v118
  %v3801 = vpop.permute.xlu0 %3800
  %3803 = vset.pattern.permute.xlu0 34
  %3804 = vperm.xlu0 %3803, %v119
  %v3805 = vpop.permute.xlu0 %3804
  %3807 = vset.pattern.permute.xlu0 34
  %3808 = vperm.xlu0 %3807, %v120
  %v3809 = vpop.permute.xlu0 %3808
  %3811 = vset.pattern.permute.xlu0 34
  %3812 = vperm.xlu0 %3811, %v121
  %v3813 = vpop.permute.xlu0 %3812
  %3815 = vset.pattern.permute.xlu0 34
  %3816 = vperm.xlu0 %3815, %v122
  %v3817 = vpop.permute.xlu0 %3816
  %3819 = vset.pattern.permute.xlu0 34
  %3820 = vperm.xlu0 %3819, %v123
  %v3821 = vpop.permute.xlu0 %3820
  %3823 = vset.pattern.permute.xlu0 34
  %3824 = vperm.xlu0 %3823, %v124
  %v3825 = vpop.permute.xlu0 %3824
  %3827 = vset.pattern.permute.xlu0 34
  %3828 = vperm.xlu0 %3827, %v125
  %v3829 = vpop.permute.xlu0 %3828
  %3831 = vset.pattern.permute.xlu0 34
  %3832 = vperm.xlu0 %3831, %v126
  %v3833 = vpop.permute.xlu0 %3832
  %3835 = vset.pattern.permute.xlu0 34
  %3836 = vperm.xlu0 %3835, %v127
  %v3837 = vpop.permute.xlu0 %3836
  %3839 = vset.pattern.permute.xlu0 34
  %3840 = vperm.xlu0 %3839, %v128
  %v3841 = vpop.permute.xlu0 %3840
  %3843 = vset.pattern.permute.xlu0 34
  %3844 = vperm.xlu0 %3843, %v129
  %v3845 = vpop.permute.xlu0 %3844
  %3847 = vset.pattern.permute.xlu0 34
  %3848 = vperm.xlu0 %3847, %v130
  %v3849 = vpop.permute.xlu0 %3848
  %3851 = vset.pattern.permute.xlu0 34
  %3852 = vperm.xlu0 %3851, %v131
  %v3853 = vpop.permute.xlu0 %3852
  %3855 = vset.pattern.permute.xlu0 34
  %3856 = vperm.xlu0 %3855, %v132
  %v3857 = vpop.permute.xlu0 %3856
  %3859 = vset.pattern.permute.xlu0 34
  %3860 = vperm.xlu0 %3859, %v133
  %v3861 = vpop.permute.xlu0 %3860
  %3863 = vset.pattern.permute.xlu0 34
  %3864 = vperm.xlu0 %3863, %v134
  %v3865 = vpop.permute.xlu0 %3864
  %3867 = vset.pattern.permute.xlu0 34
  %3868 = vperm.xlu0 %3867, %v135
  %v3869 = vpop.permute.xlu0 %3868
  %3871 = vset.pattern.permute.xlu0 34
  %3872 = vperm.xlu0 %3871, %v136
  %v3873 = vpop.permute.xlu0 %3872
  %3875 = vset.pattern.permute.xlu0 34
  %3876 = vperm.xlu0 %3875, %v137
  %v3877 = vpop.permute.xlu0 %3876
  %3879 = vset.pattern.permute.xlu0 34
  %3880 = vperm.xlu0 %3879, %v138
  %v3881 = vpop.permute.xlu0 %3880
  %3883 = vset.pattern.permute.xlu0 34
  %3884 = vperm.xlu0 %3883, %v139
  %v3885 = vpop.permute.xlu0 %3884
  %3887 = vset.pattern.permute.xlu0 34
  %3888 = vperm.xlu0 %3887, %v140
  %v3889 = vpop.permute.xlu0 %3888
  %3891 = vset.pattern.permute.xlu0 34
  %3892 = vperm.xlu0 %3891, %v141
  %v3893 = vpop.permute.xlu0 %3892
  %v3895 = vlaneseq
  %v3896 = vshrl.u32 %v3895, 7
  %v3897 = vsub.s32 0, %v3896
  %v3898 = vrot.slane %v3394, %v3897
  %v3899 = vmul.f32 %v3397, %v3898
  %v3900 = vmul.f32 %v3401, %v3898
  %v3901 = vmul.f32 %v3405, %v3898
  %v3902 = vmul.f32 %v3409, %v3898
  %v3903 = vmul.f32 %v3413, %v3898
  %v3904 = vmul.f32 %v3417, %v3898
  %v3905 = vmul.f32 %v3421, %v3898
  %v3906 = vmul.f32 %v3425, %v3898
  %v3907 = vmul.f32 %v3429, %v3898
  %v3908 = vmul.f32 %v3433, %v3898
  %v3909 = vmul.f32 %v3437, %v3898
  %v3910 = vmul.f32 %v3441, %v3898
  %v3911 = vmul.f32 %v3445, %v3898
  %v3912 = vmul.f32 %v3449, %v3898
  %v3913 = vmul.f32 %v3453, %v3898
  %v3914 = vmul.f32 %v3457, %v3898
  %v3915 = vmul.f32 %v3461, %v3898
  %v3916 = vmul.f32 %v3465, %v3898
  %v3917 = vmul.f32 %v3469, %v3898
  %v3918 = vmul.f32 %v3473, %v3898
  %v3919 = vmul.f32 %v3477, %v3898
  %v3920 = vmul.f32 %v3481, %v3898
  %v3921 = vmul.f32 %v3485, %v3898
  %v3922 = vmul.f32 %v3489, %v3898
  %v3923 = vmul.f32 %v3493, %v3898
  %v3924 = vmul.f32 %v3497, %v3898
  %v3925 = vmul.f32 %v3501, %v3898
  %v3926 = vmul.f32 %v3505, %v3898
  %v3927 = vmul.f32 %v3509, %v3898
  %v3928 = vmul.f32 %v3513, %v3898
  %v3929 = vmul.f32 %v3517, %v3898
  %v3930 = vmul.f32 %v3521, %v3898
  %v3931 = vmul.f32 %v3525, %v3898
  %v3932 = vmul.f32 %v3529, %v3898
  %v3933 = vmul.f32 %v3533, %v3898
  %v3934 = vmul.f32 %v3537, %v3898
  %v3935 = vmul.f32 %v3541, %v3898
  %v3936 = vmul.f32 %v3545, %v3898
  %v3937 = vmul.f32 %v3549, %v3898
  %v3938 = vmul.f32 %v3553, %v3898
  %v3939 = vmul.f32 %v3557, %v3898
  %v3940 = vmul.f32 %v3561, %v3898
  %v3941 = vmul.f32 %v3565, %v3898
  %v3942 = vmul.f32 %v3569, %v3898
  %v3943 = vmul.f32 %v3573, %v3898
  %v3944 = vmul.f32 %v3577, %v3898
  %v3945 = vmul.f32 %v3581, %v3898
  %v3946 = vmul.f32 %v3585, %v3898
  %v3947 = vmul.f32 %v3589, %v3898
  %v3948 = vmul.f32 %v3593, %v3898
  %v3949 = vmul.f32 %v3597, %v3898
  %v3950 = vmul.f32 %v3601, %v3898
  %v3951 = vmul.f32 %v3605, %v3898
  %v3952 = vmul.f32 %v3609, %v3898
  %v3953 = vmul.f32 %v3613, %v3898
  %v3954 = vmul.f32 %v3617, %v3898
  %v3955 = vmul.f32 %v3621, %v3898
  %v3956 = vmul.f32 %v3625, %v3898
  %v3957 = vmul.f32 %v3629, %v3898
  %v3958 = vmul.f32 %v3633, %v3898
  %v3959 = vmul.f32 %v3637, %v3898
  %v3960 = vmul.f32 %v3641, %v3898
  %v3961 = vmul.f32 %v3645, %v3898
  %v3962 = vmul.f32 %v3649, %v3898
  %v3963 = vmul.f32 %v3653, %v3898
  %v3964 = vmul.f32 %v3657, %v3898
  %v3965 = vmul.f32 %v3661, %v3898
  %v3966 = vmul.f32 %v3665, %v3898
  %v3967 = vmul.f32 %v3669, %v3898
  %v3968 = vmul.f32 %v3673, %v3898
  %v3969 = vmul.f32 %v3677, %v3898
  %v3970 = vmul.f32 %v3681, %v3898
  %v3971 = vmul.f32 %v3685, %v3898
  %v3972 = vmul.f32 %v3689, %v3898
  %v3973 = vmul.f32 %v3693, %v3898
  %v3974 = vmul.f32 %v3697, %v3898
  %v3975 = vmul.f32 %v3701, %v3898
  %v3976 = vmul.f32 %v3705, %v3898
  %v3977 = vmul.f32 %v3709, %v3898
  %v3978 = vmul.f32 %v3713, %v3898
  %v3979 = vmul.f32 %v3717, %v3898
  %v3980 = vmul.f32 %v3721, %v3898
  %v3981 = vmul.f32 %v3725, %v3898
  %v3982 = vmul.f32 %v3729, %v3898
  %v3983 = vmul.f32 %v3733, %v3898
  %v3984 = vmul.f32 %v3737, %v3898
  %v3985 = vmul.f32 %v3741, %v3898
  %v3986 = vmul.f32 %v3745, %v3898
  %v3987 = vmul.f32 %v3749, %v3898
  %v3988 = vmul.f32 %v3753, %v3898
  %v3989 = vmul.f32 %v3757, %v3898
  %v3990 = vmul.f32 %v3761, %v3898
  %v3991 = vmul.f32 %v3765, %v3898
  %v3992 = vmul.f32 %v3769, %v3898
  %v3993 = vmul.f32 %v3773, %v3898
  %v3994 = vmul.f32 %v3777, %v3898
  %v3995 = vmul.f32 %v3781, %v3898
  %v3996 = vmul.f32 %v3785, %v3898
  %v3997 = vmul.f32 %v3789, %v3898
  %v3998 = vmul.f32 %v3793, %v3898
  %v3999 = vmul.f32 %v3797, %v3898
  %v4000 = vmul.f32 %v3801, %v3898
  %v4001 = vmul.f32 %v3805, %v3898
  %v4002 = vmul.f32 %v3809, %v3898
  %v4003 = vmul.f32 %v3813, %v3898
  %v4004 = vmul.f32 %v3817, %v3898
  %v4005 = vmul.f32 %v3821, %v3898
  %v4006 = vmul.f32 %v3825, %v3898
  %v4007 = vmul.f32 %v3829, %v3898
  %v4008 = vmul.f32 %v3833, %v3898
  %v4009 = vmul.f32 %v3837, %v3898
  %v4010 = vmul.f32 %v3841, %v3898
  %v4011 = vmul.f32 %v3845, %v3898
  %v4012 = vmul.f32 %v3849, %v3898
  %v4013 = vmul.f32 %v3853, %v3898
  %v4014 = vmul.f32 %v3857, %v3898
  %v4015 = vmul.f32 %v3861, %v3898
  %v4016 = vmul.f32 %v3865, %v3898
  %v4017 = vmul.f32 %v3869, %v3898
  %v4018 = vmul.f32 %v3873, %v3898
  %v4019 = vmul.f32 %v3877, %v3898
  %v4020 = vmul.f32 %v3881, %v3898
  %v4021 = vmul.f32 %v3885, %v3898
  %v4022 = vmul.f32 %v3889, %v3898
  %v4023 = vmul.f32 %v3893, %v3898
  %v4024 = vadd.f32 %v3269, %v3899
  %v4025 = vadd.f32 %v3270, %v3900
  %v4026 = vadd.f32 %v3271, %v3901
  %v4027 = vadd.f32 %v3272, %v3902
  %v4028 = vadd.f32 %v3273, %v3903
  %v4029 = vadd.f32 %v3274, %v3904
  %v4030 = vadd.f32 %v3275, %v3905
  %v4031 = vadd.f32 %v3276, %v3906
  %v4032 = vadd.f32 %v3277, %v3907
  %v4033 = vadd.f32 %v3278, %v3908
  %v4034 = vadd.f32 %v3279, %v3909
  %v4035 = vadd.f32 %v3280, %v3910
  %v4036 = vadd.f32 %v3281, %v3911
  %v4037 = vadd.f32 %v3282, %v3912
  %v4038 = vadd.f32 %v3283, %v3913
  %v4039 = vadd.f32 %v3284, %v3914
  %v4040 = vadd.f32 %v3285, %v3915
  %v4041 = vadd.f32 %v3286, %v3916
  %v4042 = vadd.f32 %v3287, %v3917
  %v4043 = vadd.f32 %v3288, %v3918
  %v4044 = vadd.f32 %v3289, %v3919
  %v4045 = vadd.f32 %v3290, %v3920
  %v4046 = vadd.f32 %v3291, %v3921
  %v4047 = vadd.f32 %v3292, %v3922
  %v4048 = vadd.f32 %v3293, %v3923
  %v4049 = vadd.f32 %v3294, %v3924
  %v4050 = vadd.f32 %v3295, %v3925
  %v4051 = vadd.f32 %v3296, %v3926
  %v4052 = vadd.f32 %v3297, %v3927
  %v4053 = vadd.f32 %v3298, %v3928
  %v4054 = vadd.f32 %v3299, %v3929
  %v4055 = vadd.f32 %v3300, %v3930
  %v4056 = vadd.f32 %v3301, %v3931
  %v4057 = vadd.f32 %v3302, %v3932
  %v4058 = vadd.f32 %v3303, %v3933
  %v4059 = vadd.f32 %v3304, %v3934
  %v4060 = vadd.f32 %v3305, %v3935
  %v4061 = vadd.f32 %v3306, %v3936
  %v4062 = vadd.f32 %v3307, %v3937
  %v4063 = vadd.f32 %v3308, %v3938
  %v4064 = vadd.f32 %v3309, %v3939
  %v4065 = vadd.f32 %v3310, %v3940
  %v4066 = vadd.f32 %v3311, %v3941
  %v4067 = vadd.f32 %v3312, %v3942
  %v4068 = vadd.f32 %v3313, %v3943
  %v4069 = vadd.f32 %v3314, %v3944
  %v4070 = vadd.f32 %v3315, %v3945
  %v4071 = vadd.f32 %v3316, %v3946
  %v4072 = vadd.f32 %v3317, %v3947
  %v4073 = vadd.f32 %v3318, %v3948
  %v4074 = vadd.f32 %v3319, %v3949
  %v4075 = vadd.f32 %v3320, %v3950
  %v4076 = vadd.f32 %v3321, %v3951
  %v4077 = vadd.f32 %v3322, %v3952
  %v4078 = vadd.f32 %v3323, %v3953
  %v4079 = vadd.f32 %v3324, %v3954
  %v4080 = vadd.f32 %v3325, %v3955
  %v4081 = vadd.f32 %v3326, %v3956
  %v4082 = vadd.f32 %v3327, %v3957
  %v4083 = vadd.f32 %v3328, %v3958
  %v4084 = vadd.f32 %v3329, %v3959
  %v4085 = vadd.f32 %v3330, %v3960
  %v4086 = vadd.f32 %v3331, %v3961
  %v4087 = vadd.f32 %v3332, %v3962
  %v4088 = vadd.f32 %v3333, %v3963
  %v4089 = vadd.f32 %v3334, %v3964
  %v4090 = vadd.f32 %v3335, %v3965
  %v4091 = vadd.f32 %v3336, %v3966
  %v4092 = vadd.f32 %v3337, %v3967
  %v4093 = vadd.f32 %v3338, %v3968
  %v4094 = vadd.f32 %v3339, %v3969
  %v4095 = vadd.f32 %v3340, %v3970
  %v4096 = vadd.f32 %v3341, %v3971
  %v4097 = vadd.f32 %v3342, %v3972
  %v4098 = vadd.f32 %v3343, %v3973
  %v4099 = vadd.f32 %v3344, %v3974
  %v4100 = vadd.f32 %v3345, %v3975
  %v4101 = vadd.f32 %v3346, %v3976
  %v4102 = vadd.f32 %v3347, %v3977
  %v4103 = vadd.f32 %v3348, %v3978
  %v4104 = vadd.f32 %v3349, %v3979
  %v4105 = vadd.f32 %v3350, %v3980
  %v4106 = vadd.f32 %v3351, %v3981
  %v4107 = vadd.f32 %v3352, %v3982
  %v4108 = vadd.f32 %v3353, %v3983
  %v4109 = vadd.f32 %v3354, %v3984
  %v4110 = vadd.f32 %v3355, %v3985
  %v4111 = vadd.f32 %v3356, %v3986
  %v4112 = vadd.f32 %v3357, %v3987
  %v4113 = vadd.f32 %v3358, %v3988
  %v4114 = vadd.f32 %v3359, %v3989
  %v4115 = vadd.f32 %v3360, %v3990
  %v4116 = vadd.f32 %v3361, %v3991
  %v4117 = vadd.f32 %v3362, %v3992
  %v4118 = vadd.f32 %v3363, %v3993
  %v4119 = vadd.f32 %v3364, %v3994
  %v4120 = vadd.f32 %v3365, %v3995
  %v4121 = vadd.f32 %v3366, %v3996
  %v4122 = vadd.f32 %v3367, %v3997
  %v4123 = vadd.f32 %v3368, %v3998
  %v4124 = vadd.f32 %v3369, %v3999
  %v4125 = vadd.f32 %v3370, %v4000
  %v4126 = vadd.f32 %v3371, %v4001
  %v4127 = vadd.f32 %v3372, %v4002
  %v4128 = vadd.f32 %v3373, %v4003
  %v4129 = vadd.f32 %v3374, %v4004
  %v4130 = vadd.f32 %v3375, %v4005
  %v4131 = vadd.f32 %v3376, %v4006
  %v4132 = vadd.f32 %v3377, %v4007
  %v4133 = vadd.f32 %v3378, %v4008
  %v4134 = vadd.f32 %v3379, %v4009
  %v4135 = vadd.f32 %v3380, %v4010
  %v4136 = vadd.f32 %v3381, %v4011
  %v4137 = vadd.f32 %v3382, %v4012
  %v4138 = vadd.f32 %v3383, %v4013
  %v4139 = vadd.f32 %v3384, %v4014
  %v4140 = vadd.f32 %v3385, %v4015
  %v4141 = vadd.f32 %v3386, %v4016
  %v4142 = vadd.f32 %v3387, %v4017
  %v4143 = vadd.f32 %v3388, %v4018
  %v4144 = vadd.f32 %v3389, %v4019
  %v4145 = vadd.f32 %v3390, %v4020
  %v4146 = vadd.f32 %v3391, %v4021
  %v4147 = vadd.f32 %v3392, %v4022
  %v4148 = vadd.f32 %v3393, %v4023
  %4149 = vmatprep.subr.mxu0 0.0
  %4150 = vmatpush1.msra.mxu0 %v2008
  %4151 = vmatprep.subr.mxu0 0.0
  %4152 = vmatpush1.msra.mxu0 %v2007
  %4153 = vmatprep.subr.mxu0 0.0
  %4154 = vmatpush1.msra.mxu0 %v2006
  %4155 = vmatprep.subr.mxu0 0.0
  %4156 = vmatpush1.msra.mxu0 %v2005
  %4157 = vmatprep.subr.mxu0 0.0
  %4158 = vmatpush1.msra.mxu0 %v2004
  %4159 = vmatprep.subr.mxu0 0.0
  %4160 = vmatpush1.msra.mxu0 %v2003
  %4161 = vmatprep.subr.mxu0 0.0
  %4162 = vmatpush1.msra.mxu0 %v2002
  %4163 = vmatprep.subr.mxu0 0.0
  %4164 = vmatpush1.msra.mxu0 %v2001
  %4165 = vmatprep.subr.mxu0 0.0
  %4166 = vmatpush1.msra.mxu0 %v2000
  %4167 = vmatprep.subr.mxu0 0.0
  %4168 = vmatpush1.msra.mxu0 %v1999
  %4169 = vmatprep.subr.mxu0 0.0
  %4170 = vmatpush1.msra.mxu0 %v1998
  %4171 = vmatprep.subr.mxu0 0.0
  %4172 = vmatpush1.msra.mxu0 %v1997
  %4173 = vmatprep.subr.mxu0 0.0
  %4174 = vmatpush1.msra.mxu0 %v1996
  %4175 = vmatprep.subr.mxu0 0.0
  %4176 = vmatpush1.msra.mxu0 %v1995
  %4177 = vmatprep.subr.mxu0 0.0
  %4178 = vmatpush1.msra.mxu0 %v1994
  %4179 = vmatprep.subr.mxu0 0.0
  %4180 = vmatpush1.msra.mxu0 %v1993
  %4181 = vmatprep.subr.mxu0 0.0
  %4182 = vmatpush2.msra.mxu0 0.0
  %4183 = vmatprep.subr.mxu0 0.0
  %4184 = vmatpush2.msra.mxu0 0.0
  %4185 = vmatprep.subr.mxu0 0.0
  %4186 = vmatpush2.msra.mxu0 0.0
  %4187 = vmatprep.subr.mxu0 0.0
  %4188 = vmatpush2.msra.mxu0 0.0
  %4189 = vmatprep.subr.mxu0 0.0
  %4190 = vmatpush2.msra.mxu0 0.0
  %4191 = vmatprep.subr.mxu0 0.0
  %4192 = vmatpush2.msra.mxu0 0.0
  %4193 = vmatprep.subr.mxu0 0.0
  %4194 = vmatpush2.msra.mxu0 0.0
  %4195 = vmatprep.subr.mxu0 0.0
  %4196 = vmatpush2.msra.mxu0 0.0
  %4197 = vmatprep.subr.mxu0 0.0
  %4198 = vmatpush2.msra.mxu0 0.0
  %4199 = vmatprep.subr.mxu0 0.0
  %4200 = vmatpush2.msra.mxu0 0.0
  %4201 = vmatprep.subr.mxu0 0.0
  %4202 = vmatpush2.msra.mxu0 0.0
  %4203 = vmatprep.subr.mxu0 0.0
  %4204 = vmatpush2.msra.mxu0 0.0
  %4205 = vmatprep.subr.mxu0 0.0
  %4206 = vmatpush2.msra.mxu0 0.0
  %4207 = vmatprep.subr.mxu0 0.0
  %4208 = vmatpush2.msra.mxu0 0.0
  %4209 = vmatprep.subr.mxu0 0.0
  %4210 = vmatpush2.msra.mxu0 0.0
  %4211 = vmatprep.subr.mxu0 0.0
  %4212 = vmatpush2.msra.mxu0 0.0
  %4213 = vmatprep.mubr.f32.mxu0 0.0
  %4214 = vmatmul.mubr.f32.gmra.mxu0 %v1868
  %v4215 = vpop.f32.mrf.mxu0
  %v4216 = vadd.f32 %v4024, %v4215
  %v4217 = vpop.f32.mrf.mxu0
  %4218 = vmatprep.mubr.f32.mxu0 0.0
  %4219 = vmatmul.mubr.f32.gmra.mxu0 %v1869
  %v4220 = vpop.f32.mrf.mxu0
  %v4221 = vadd.f32 %v4025, %v4220
  %v4222 = vpop.f32.mrf.mxu0
  %4223 = vmatprep.mubr.f32.mxu0 0.0
  %4224 = vmatmul.mubr.f32.gmra.mxu0 %v1870
  %v4225 = vpop.f32.mrf.mxu0
  %v4226 = vadd.f32 %v4026, %v4225
  %v4227 = vpop.f32.mrf.mxu0
  %4228 = vmatprep.mubr.f32.mxu0 0.0
  %4229 = vmatmul.mubr.f32.gmra.mxu0 %v1871
  %v4230 = vpop.f32.mrf.mxu0
  %v4231 = vadd.f32 %v4027, %v4230
  %v4232 = vpop.f32.mrf.mxu0
  %4233 = vmatprep.mubr.f32.mxu0 0.0
  %4234 = vmatmul.mubr.f32.gmra.mxu0 %v1872
  %v4235 = vpop.f32.mrf.mxu0
  %v4236 = vadd.f32 %v4028, %v4235
  %v4237 = vpop.f32.mrf.mxu0
  %4238 = vmatprep.mubr.f32.mxu0 0.0
  %4239 = vmatmul.mubr.f32.gmra.mxu0 %v1873
  %v4240 = vpop.f32.mrf.mxu0
  %v4241 = vadd.f32 %v4029, %v4240
  %v4242 = vpop.f32.mrf.mxu0
  %4243 = vmatprep.mubr.f32.mxu0 0.0
  %4244 = vmatmul.mubr.f32.gmra.mxu0 %v1874
  %v4245 = vpop.f32.mrf.mxu0
  %v4246 = vadd.f32 %v4030, %v4245
  %v4247 = vpop.f32.mrf.mxu0
  %4248 = vmatprep.mubr.f32.mxu0 0.0
  %4249 = vmatmul.mubr.f32.gmra.mxu0 %v1875
  %v4250 = vpop.f32.mrf.mxu0
  %v4251 = vadd.f32 %v4031, %v4250
  %v4252 = vpop.f32.mrf.mxu0
  %4253 = vmatprep.mubr.f32.mxu0 0.0
  %4254 = vmatmul.mubr.f32.gmra.mxu0 %v1876
  %v4255 = vpop.f32.mrf.mxu0
  %v4256 = vadd.f32 %v4032, %v4255
  %v4257 = vpop.f32.mrf.mxu0
  %4258 = vmatprep.mubr.f32.mxu0 0.0
  %4259 = vmatmul.mubr.f32.gmra.mxu0 %v1877
  %v4260 = vpop.f32.mrf.mxu0
  %v4261 = vadd.f32 %v4033, %v4260
  %v4262 = vpop.f32.mrf.mxu0
  %4263 = vmatprep.mubr.f32.mxu0 0.0
  %4264 = vmatmul.mubr.f32.gmra.mxu0 %v1878
  %v4265 = vpop.f32.mrf.mxu0
  %v4266 = vadd.f32 %v4034, %v4265
  %v4267 = vpop.f32.mrf.mxu0
  %4268 = vmatprep.mubr.f32.mxu0 0.0
  %4269 = vmatmul.mubr.f32.gmra.mxu0 %v1879
  %v4270 = vpop.f32.mrf.mxu0
  %v4271 = vadd.f32 %v4035, %v4270
  %v4272 = vpop.f32.mrf.mxu0
  %4273 = vmatprep.mubr.f32.mxu0 0.0
  %4274 = vmatmul.mubr.f32.gmra.mxu0 %v1880
  %v4275 = vpop.f32.mrf.mxu0
  %v4276 = vadd.f32 %v4036, %v4275
  %v4277 = vpop.f32.mrf.mxu0
  %4278 = vmatprep.mubr.f32.mxu0 0.0
  %4279 = vmatmul.mubr.f32.gmra.mxu0 %v1881
  %v4280 = vpop.f32.mrf.mxu0
  %v4281 = vadd.f32 %v4037, %v4280
  %v4282 = vpop.f32.mrf.mxu0
  %4283 = vmatprep.mubr.f32.mxu0 0.0
  %4284 = vmatmul.mubr.f32.gmra.mxu0 %v1882
  %v4285 = vpop.f32.mrf.mxu0
  %v4286 = vadd.f32 %v4038, %v4285
  %v4287 = vpop.f32.mrf.mxu0
  %4288 = vmatprep.mubr.f32.mxu0 0.0
  %4289 = vmatmul.mubr.f32.gmra.mxu0 %v1883
  %v4290 = vpop.f32.mrf.mxu0
  %v4291 = vadd.f32 %v4039, %v4290
  %v4292 = vpop.f32.mrf.mxu0
  %4293 = vmatprep.mubr.f32.mxu0 0.0
  %4294 = vmatmul.mubr.f32.gmra.mxu0 %v1884
  %v4295 = vpop.f32.mrf.mxu0
  %v4296 = vadd.f32 %v4040, %v4295
  %v4297 = vpop.f32.mrf.mxu0
  %4298 = vmatprep.mubr.f32.mxu0 0.0
  %4299 = vmatmul.mubr.f32.gmra.mxu0 %v1885
  %v4300 = vpop.f32.mrf.mxu0
  %v4301 = vadd.f32 %v4041, %v4300
  %v4302 = vpop.f32.mrf.mxu0
  %4303 = vmatprep.mubr.f32.mxu0 0.0
  %4304 = vmatmul.mubr.f32.gmra.mxu0 %v1886
  %v4305 = vpop.f32.mrf.mxu0
  %v4306 = vadd.f32 %v4042, %v4305
  %v4307 = vpop.f32.mrf.mxu0
  %4308 = vmatprep.mubr.f32.mxu0 0.0
  %4309 = vmatmul.mubr.f32.gmra.mxu0 %v1887
  %v4310 = vpop.f32.mrf.mxu0
  %v4311 = vadd.f32 %v4043, %v4310
  %v4312 = vpop.f32.mrf.mxu0
  %4313 = vmatprep.mubr.f32.mxu0 0.0
  %4314 = vmatmul.mubr.f32.gmra.mxu0 %v1888
  %v4315 = vpop.f32.mrf.mxu0
  %v4316 = vadd.f32 %v4044, %v4315
  %v4317 = vpop.f32.mrf.mxu0
  %4318 = vmatprep.mubr.f32.mxu0 0.0
  %4319 = vmatmul.mubr.f32.gmra.mxu0 %v1889
  %v4320 = vpop.f32.mrf.mxu0
  %v4321 = vadd.f32 %v4045, %v4320
  %v4322 = vpop.f32.mrf.mxu0
  %4323 = vmatprep.mubr.f32.mxu0 0.0
  %4324 = vmatmul.mubr.f32.gmra.mxu0 %v1890
  %v4325 = vpop.f32.mrf.mxu0
  %v4326 = vadd.f32 %v4046, %v4325
  %v4327 = vpop.f32.mrf.mxu0
  %4328 = vmatprep.mubr.f32.mxu0 0.0
  %4329 = vmatmul.mubr.f32.gmra.mxu0 %v1891
  %v4330 = vpop.f32.mrf.mxu0
  %v4331 = vadd.f32 %v4047, %v4330
  %v4332 = vpop.f32.mrf.mxu0
  %4333 = vmatprep.mubr.f32.mxu0 0.0
  %4334 = vmatmul.mubr.f32.gmra.mxu0 %v1892
  %v4335 = vpop.f32.mrf.mxu0
  %v4336 = vadd.f32 %v4048, %v4335
  %v4337 = vpop.f32.mrf.mxu0
  %4338 = vmatprep.mubr.f32.mxu0 0.0
  %4339 = vmatmul.mubr.f32.gmra.mxu0 %v1893
  %v4340 = vpop.f32.mrf.mxu0
  %v4341 = vadd.f32 %v4049, %v4340
  %v4342 = vpop.f32.mrf.mxu0
  %4343 = vmatprep.mubr.f32.mxu0 0.0
  %4344 = vmatmul.mubr.f32.gmra.mxu0 %v1894
  %v4345 = vpop.f32.mrf.mxu0
  %v4346 = vadd.f32 %v4050, %v4345
  %v4347 = vpop.f32.mrf.mxu0
  %4348 = vmatprep.mubr.f32.mxu0 0.0
  %4349 = vmatmul.mubr.f32.gmra.mxu0 %v1895
  %v4350 = vpop.f32.mrf.mxu0
  %v4351 = vadd.f32 %v4051, %v4350
  %v4352 = vpop.f32.mrf.mxu0
  %4353 = vmatprep.mubr.f32.mxu0 0.0
  %4354 = vmatmul.mubr.f32.gmra.mxu0 %v1896
  %v4355 = vpop.f32.mrf.mxu0
  %v4356 = vadd.f32 %v4052, %v4355
  %v4357 = vpop.f32.mrf.mxu0
  %4358 = vmatprep.mubr.f32.mxu0 0.0
  %4359 = vmatmul.mubr.f32.gmra.mxu0 %v1897
  %v4360 = vpop.f32.mrf.mxu0
  %v4361 = vadd.f32 %v4053, %v4360
  %v4362 = vpop.f32.mrf.mxu0
  %4363 = vmatprep.mubr.f32.mxu0 0.0
  %4364 = vmatmul.mubr.f32.gmra.mxu0 %v1898
  %v4365 = vpop.f32.mrf.mxu0
  %v4366 = vadd.f32 %v4054, %v4365
  %v4367 = vpop.f32.mrf.mxu0
  %4368 = vmatprep.mubr.f32.mxu0 0.0
  %4369 = vmatmul.mubr.f32.gmra.mxu0 %v1899
  %v4370 = vpop.f32.mrf.mxu0
  %v4371 = vadd.f32 %v4055, %v4370
  %v4372 = vpop.f32.mrf.mxu0
  %4373 = vmatprep.mubr.f32.mxu0 0.0
  %4374 = vmatmul.mubr.f32.gmra.mxu0 %v1900
  %v4375 = vpop.f32.mrf.mxu0
  %v4376 = vadd.f32 %v4056, %v4375
  %v4377 = vpop.f32.mrf.mxu0
  %4378 = vmatprep.mubr.f32.mxu0 0.0
  %4379 = vmatmul.mubr.f32.gmra.mxu0 %v1901
  %v4380 = vpop.f32.mrf.mxu0
  %v4381 = vadd.f32 %v4057, %v4380
  %v4382 = vpop.f32.mrf.mxu0
  %4383 = vmatprep.mubr.f32.mxu0 0.0
  %4384 = vmatmul.mubr.f32.gmra.mxu0 %v1902
  %v4385 = vpop.f32.mrf.mxu0
  %v4386 = vadd.f32 %v4058, %v4385
  %v4387 = vpop.f32.mrf.mxu0
  %4388 = vmatprep.mubr.f32.mxu0 0.0
  %4389 = vmatmul.mubr.f32.gmra.mxu0 %v1903
  %v4390 = vpop.f32.mrf.mxu0
  %v4391 = vadd.f32 %v4059, %v4390
  %v4392 = vpop.f32.mrf.mxu0
  %4393 = vmatprep.mubr.f32.mxu0 0.0
  %4394 = vmatmul.mubr.f32.gmra.mxu0 %v1904
  %v4395 = vpop.f32.mrf.mxu0
  %v4396 = vadd.f32 %v4060, %v4395
  %v4397 = vpop.f32.mrf.mxu0
  %4398 = vmatprep.mubr.f32.mxu0 0.0
  %4399 = vmatmul.mubr.f32.gmra.mxu0 %v1905
  %v4400 = vpop.f32.mrf.mxu0
  %v4401 = vadd.f32 %v4061, %v4400
  %v4402 = vpop.f32.mrf.mxu0
  %4403 = vmatprep.mubr.f32.mxu0 0.0
  %4404 = vmatmul.mubr.f32.gmra.mxu0 %v1906
  %v4405 = vpop.f32.mrf.mxu0
  %v4406 = vadd.f32 %v4062, %v4405
  %v4407 = vpop.f32.mrf.mxu0
  %4408 = vmatprep.mubr.f32.mxu0 0.0
  %4409 = vmatmul.mubr.f32.gmra.mxu0 %v1907
  %v4410 = vpop.f32.mrf.mxu0
  %v4411 = vadd.f32 %v4063, %v4410
  %v4412 = vpop.f32.mrf.mxu0
  %4413 = vmatprep.mubr.f32.mxu0 0.0
  %4414 = vmatmul.mubr.f32.gmra.mxu0 %v1908
  %v4415 = vpop.f32.mrf.mxu0
  %v4416 = vadd.f32 %v4064, %v4415
  %v4417 = vpop.f32.mrf.mxu0
  %4418 = vmatprep.mubr.f32.mxu0 0.0
  %4419 = vmatmul.mubr.f32.gmra.mxu0 %v1909
  %v4420 = vpop.f32.mrf.mxu0
  %v4421 = vadd.f32 %v4065, %v4420
  %v4422 = vpop.f32.mrf.mxu0
  %4423 = vmatprep.mubr.f32.mxu0 0.0
  %4424 = vmatmul.mubr.f32.gmra.mxu0 %v1910
  %v4425 = vpop.f32.mrf.mxu0
  %v4426 = vadd.f32 %v4066, %v4425
  %v4427 = vpop.f32.mrf.mxu0
  %4428 = vmatprep.mubr.f32.mxu0 0.0
  %4429 = vmatmul.mubr.f32.gmra.mxu0 %v1911
  %v4430 = vpop.f32.mrf.mxu0
  %v4431 = vadd.f32 %v4067, %v4430
  %v4432 = vpop.f32.mrf.mxu0
  %4433 = vmatprep.mubr.f32.mxu0 0.0
  %4434 = vmatmul.mubr.f32.gmra.mxu0 %v1912
  %v4435 = vpop.f32.mrf.mxu0
  %v4436 = vadd.f32 %v4068, %v4435
  %v4437 = vpop.f32.mrf.mxu0
  %4438 = vmatprep.mubr.f32.mxu0 0.0
  %4439 = vmatmul.mubr.f32.gmra.mxu0 %v1913
  %v4440 = vpop.f32.mrf.mxu0
  %v4441 = vadd.f32 %v4069, %v4440
  %v4442 = vpop.f32.mrf.mxu0
  %4443 = vmatprep.mubr.f32.mxu0 0.0
  %4444 = vmatmul.mubr.f32.gmra.mxu0 %v1914
  %v4445 = vpop.f32.mrf.mxu0
  %v4446 = vadd.f32 %v4070, %v4445
  %v4447 = vpop.f32.mrf.mxu0
  %4448 = vmatprep.mubr.f32.mxu0 0.0
  %4449 = vmatmul.mubr.f32.gmra.mxu0 %v1915
  %v4450 = vpop.f32.mrf.mxu0
  %v4451 = vadd.f32 %v4071, %v4450
  %v4452 = vpop.f32.mrf.mxu0
  %4453 = vmatprep.mubr.f32.mxu0 0.0
  %4454 = vmatmul.mubr.f32.gmra.mxu0 %v1916
  %v4455 = vpop.f32.mrf.mxu0
  %v4456 = vadd.f32 %v4072, %v4455
  %v4457 = vpop.f32.mrf.mxu0
  %4458 = vmatprep.mubr.f32.mxu0 0.0
  %4459 = vmatmul.mubr.f32.gmra.mxu0 %v1917
  %v4460 = vpop.f32.mrf.mxu0
  %v4461 = vadd.f32 %v4073, %v4460
  %v4462 = vpop.f32.mrf.mxu0
  %4463 = vmatprep.mubr.f32.mxu0 0.0
  %4464 = vmatmul.mubr.f32.gmra.mxu0 %v1918
  %v4465 = vpop.f32.mrf.mxu0
  %v4466 = vadd.f32 %v4074, %v4465
  %v4467 = vpop.f32.mrf.mxu0
  %4468 = vmatprep.mubr.f32.mxu0 0.0
  %4469 = vmatmul.mubr.f32.gmra.mxu0 %v1919
  %v4470 = vpop.f32.mrf.mxu0
  %v4471 = vadd.f32 %v4075, %v4470
  %v4472 = vpop.f32.mrf.mxu0
  %4473 = vmatprep.mubr.f32.mxu0 0.0
  %4474 = vmatmul.mubr.f32.gmra.mxu0 %v1920
  %v4475 = vpop.f32.mrf.mxu0
  %v4476 = vadd.f32 %v4076, %v4475
  %v4477 = vpop.f32.mrf.mxu0
  %4478 = vmatprep.mubr.f32.mxu0 0.0
  %4479 = vmatmul.mubr.f32.gmra.mxu0 %v1921
  %v4480 = vpop.f32.mrf.mxu0
  %v4481 = vadd.f32 %v4077, %v4480
  %v4482 = vpop.f32.mrf.mxu0
  %4483 = vmatprep.mubr.f32.mxu0 0.0
  %4484 = vmatmul.mubr.f32.gmra.mxu0 %v1922
  %v4485 = vpop.f32.mrf.mxu0
  %v4486 = vadd.f32 %v4078, %v4485
  %v4487 = vpop.f32.mrf.mxu0
  %4488 = vmatprep.mubr.f32.mxu0 0.0
  %4489 = vmatmul.mubr.f32.gmra.mxu0 %v1923
  %v4490 = vpop.f32.mrf.mxu0
  %v4491 = vadd.f32 %v4079, %v4490
  %v4492 = vpop.f32.mrf.mxu0
  %4493 = vmatprep.mubr.f32.mxu0 0.0
  %4494 = vmatmul.mubr.f32.gmra.mxu0 %v1924
  %v4495 = vpop.f32.mrf.mxu0
  %v4496 = vadd.f32 %v4080, %v4495
  %v4497 = vpop.f32.mrf.mxu0
  %4498 = vmatprep.mubr.f32.mxu0 0.0
  %4499 = vmatmul.mubr.f32.gmra.mxu0 %v1925
  %v4500 = vpop.f32.mrf.mxu0
  %v4501 = vadd.f32 %v4081, %v4500
  %v4502 = vpop.f32.mrf.mxu0
  %4503 = vmatprep.mubr.f32.mxu0 0.0
  %4504 = vmatmul.mubr.f32.gmra.mxu0 %v1926
  %v4505 = vpop.f32.mrf.mxu0
  %v4506 = vadd.f32 %v4082, %v4505
  %v4507 = vpop.f32.mrf.mxu0
  %4508 = vmatprep.mubr.f32.mxu0 0.0
  %4509 = vmatmul.mubr.f32.gmra.mxu0 %v1927
  %v4510 = vpop.f32.mrf.mxu0
  %v4511 = vadd.f32 %v4083, %v4510
  %v4512 = vpop.f32.mrf.mxu0
  %4513 = vmatprep.mubr.f32.mxu0 0.0
  %4514 = vmatmul.mubr.f32.gmra.mxu0 %v1928
  %v4515 = vpop.f32.mrf.mxu0
  %v4516 = vadd.f32 %v4084, %v4515
  %v4517 = vpop.f32.mrf.mxu0
  %4518 = vmatprep.mubr.f32.mxu0 0.0
  %4519 = vmatmul.mubr.f32.gmra.mxu0 %v1929
  %v4520 = vpop.f32.mrf.mxu0
  %v4521 = vadd.f32 %v4085, %v4520
  %v4522 = vpop.f32.mrf.mxu0
  %4523 = vmatprep.mubr.f32.mxu0 0.0
  %4524 = vmatmul.mubr.f32.gmra.mxu0 %v1930
  %v4525 = vpop.f32.mrf.mxu0
  %v4526 = vadd.f32 %v4086, %v4525
  %v4527 = vpop.f32.mrf.mxu0
  %4528 = vmatprep.mubr.f32.mxu0 0.0
  %4529 = vmatmul.mubr.f32.gmra.mxu0 %v1931
  %v4530 = vpop.f32.mrf.mxu0
  %v4531 = vadd.f32 %v4087, %v4530
  %v4532 = vpop.f32.mrf.mxu0
  %4533 = vmatprep.mubr.f32.mxu0 0.0
  %4534 = vmatmul.mubr.f32.gmra.mxu0 %v1932
  %v4535 = vpop.f32.mrf.mxu0
  %v4536 = vadd.f32 %v4088, %v4535
  %v4537 = vpop.f32.mrf.mxu0
  %4538 = vmatprep.mubr.f32.mxu0 0.0
  %4539 = vmatmul.mubr.f32.gmra.mxu0 %v1933
  %v4540 = vpop.f32.mrf.mxu0
  %v4541 = vadd.f32 %v4089, %v4540
  %v4542 = vpop.f32.mrf.mxu0
  %4543 = vmatprep.mubr.f32.mxu0 0.0
  %4544 = vmatmul.mubr.f32.gmra.mxu0 %v1934
  %v4545 = vpop.f32.mrf.mxu0
  %v4546 = vadd.f32 %v4090, %v4545
  %v4547 = vpop.f32.mrf.mxu0
  %4548 = vmatprep.mubr.f32.mxu0 0.0
  %4549 = vmatmul.mubr.f32.gmra.mxu0 %v1935
  %v4550 = vpop.f32.mrf.mxu0
  %v4551 = vadd.f32 %v4091, %v4550
  %v4552 = vpop.f32.mrf.mxu0
  %4553 = vmatprep.mubr.f32.mxu0 0.0
  %4554 = vmatmul.mubr.f32.gmra.mxu0 %v1936
  %v4555 = vpop.f32.mrf.mxu0
  %v4556 = vadd.f32 %v4092, %v4555
  %v4557 = vpop.f32.mrf.mxu0
  %4558 = vmatprep.mubr.f32.mxu0 0.0
  %4559 = vmatmul.mubr.f32.gmra.mxu0 %v1937
  %v4560 = vpop.f32.mrf.mxu0
  %v4561 = vadd.f32 %v4093, %v4560
  %v4562 = vpop.f32.mrf.mxu0
  %4563 = vmatprep.mubr.f32.mxu0 0.0
  %4564 = vmatmul.mubr.f32.gmra.mxu0 %v1938
  %v4565 = vpop.f32.mrf.mxu0
  %v4566 = vadd.f32 %v4094, %v4565
  %v4567 = vpop.f32.mrf.mxu0
  %4568 = vmatprep.mubr.f32.mxu0 0.0
  %4569 = vmatmul.mubr.f32.gmra.mxu0 %v1939
  %v4570 = vpop.f32.mrf.mxu0
  %v4571 = vadd.f32 %v4095, %v4570
  %v4572 = vpop.f32.mrf.mxu0
  %4573 = vmatprep.mubr.f32.mxu0 0.0
  %4574 = vmatmul.mubr.f32.gmra.mxu0 %v1940
  %v4575 = vpop.f32.mrf.mxu0
  %v4576 = vadd.f32 %v4096, %v4575
  %v4577 = vpop.f32.mrf.mxu0
  %4578 = vmatprep.mubr.f32.mxu0 0.0
  %4579 = vmatmul.mubr.f32.gmra.mxu0 %v1941
  %v4580 = vpop.f32.mrf.mxu0
  %v4581 = vadd.f32 %v4097, %v4580
  %v4582 = vpop.f32.mrf.mxu0
  %4583 = vmatprep.mubr.f32.mxu0 0.0
  %4584 = vmatmul.mubr.f32.gmra.mxu0 %v1942
  %v4585 = vpop.f32.mrf.mxu0
  %v4586 = vadd.f32 %v4098, %v4585
  %v4587 = vpop.f32.mrf.mxu0
  %4588 = vmatprep.mubr.f32.mxu0 0.0
  %4589 = vmatmul.mubr.f32.gmra.mxu0 %v1943
  %v4590 = vpop.f32.mrf.mxu0
  %v4591 = vadd.f32 %v4099, %v4590
  %v4592 = vpop.f32.mrf.mxu0
  %4593 = vmatprep.mubr.f32.mxu0 0.0
  %4594 = vmatmul.mubr.f32.gmra.mxu0 %v1944
  %v4595 = vpop.f32.mrf.mxu0
  %v4596 = vadd.f32 %v4100, %v4595
  %v4597 = vpop.f32.mrf.mxu0
  %4598 = vmatprep.mubr.f32.mxu0 0.0
  %4599 = vmatmul.mubr.f32.gmra.mxu0 %v1945
  %v4600 = vpop.f32.mrf.mxu0
  %v4601 = vadd.f32 %v4101, %v4600
  %v4602 = vpop.f32.mrf.mxu0
  %4603 = vmatprep.mubr.f32.mxu0 0.0
  %4604 = vmatmul.mubr.f32.gmra.mxu0 %v1946
  %v4605 = vpop.f32.mrf.mxu0
  %v4606 = vadd.f32 %v4102, %v4605
  %v4607 = vpop.f32.mrf.mxu0
  %4608 = vmatprep.mubr.f32.mxu0 0.0
  %4609 = vmatmul.mubr.f32.gmra.mxu0 %v1947
  %v4610 = vpop.f32.mrf.mxu0
  %v4611 = vadd.f32 %v4103, %v4610
  %v4612 = vpop.f32.mrf.mxu0
  %4613 = vmatprep.mubr.f32.mxu0 0.0
  %4614 = vmatmul.mubr.f32.gmra.mxu0 %v1948
  %v4615 = vpop.f32.mrf.mxu0
  %v4616 = vadd.f32 %v4104, %v4615
  %v4617 = vpop.f32.mrf.mxu0
  %4618 = vmatprep.mubr.f32.mxu0 0.0
  %4619 = vmatmul.mubr.f32.gmra.mxu0 %v1949
  %v4620 = vpop.f32.mrf.mxu0
  %v4621 = vadd.f32 %v4105, %v4620
  %v4622 = vpop.f32.mrf.mxu0
  %4623 = vmatprep.mubr.f32.mxu0 0.0
  %4624 = vmatmul.mubr.f32.gmra.mxu0 %v1950
  %v4625 = vpop.f32.mrf.mxu0
  %v4626 = vadd.f32 %v4106, %v4625
  %v4627 = vpop.f32.mrf.mxu0
  %4628 = vmatprep.mubr.f32.mxu0 0.0
  %4629 = vmatmul.mubr.f32.gmra.mxu0 %v1951
  %v4630 = vpop.f32.mrf.mxu0
  %v4631 = vadd.f32 %v4107, %v4630
  %v4632 = vpop.f32.mrf.mxu0
  %4633 = vmatprep.mubr.f32.mxu0 0.0
  %4634 = vmatmul.mubr.f32.gmra.mxu0 %v1952
  %v4635 = vpop.f32.mrf.mxu0
  %v4636 = vadd.f32 %v4108, %v4635
  %v4637 = vpop.f32.mrf.mxu0
  %4638 = vmatprep.mubr.f32.mxu0 0.0
  %4639 = vmatmul.mubr.f32.gmra.mxu0 %v1953
  %v4640 = vpop.f32.mrf.mxu0
  %v4641 = vadd.f32 %v4109, %v4640
  %v4642 = vpop.f32.mrf.mxu0
  %4643 = vmatprep.mubr.f32.mxu0 0.0
  %4644 = vmatmul.mubr.f32.gmra.mxu0 %v1954
  %v4645 = vpop.f32.mrf.mxu0
  %v4646 = vadd.f32 %v4110, %v4645
  %v4647 = vpop.f32.mrf.mxu0
  %4648 = vmatprep.mubr.f32.mxu0 0.0
  %4649 = vmatmul.mubr.f32.gmra.mxu0 %v1955
  %v4650 = vpop.f32.mrf.mxu0
  %v4651 = vadd.f32 %v4111, %v4650
  %v4652 = vpop.f32.mrf.mxu0
  %4653 = vmatprep.mubr.f32.mxu0 0.0
  %4654 = vmatmul.mubr.f32.gmra.mxu0 %v1956
  %v4655 = vpop.f32.mrf.mxu0
  %v4656 = vadd.f32 %v4112, %v4655
  %v4657 = vpop.f32.mrf.mxu0
  %4658 = vmatprep.mubr.f32.mxu0 0.0
  %4659 = vmatmul.mubr.f32.gmra.mxu0 %v1957
  %v4660 = vpop.f32.mrf.mxu0
  %v4661 = vadd.f32 %v4113, %v4660
  %v4662 = vpop.f32.mrf.mxu0
  %4663 = vmatprep.mubr.f32.mxu0 0.0
  %4664 = vmatmul.mubr.f32.gmra.mxu0 %v1958
  %v4665 = vpop.f32.mrf.mxu0
  %v4666 = vadd.f32 %v4114, %v4665
  %v4667 = vpop.f32.mrf.mxu0
  %4668 = vmatprep.mubr.f32.mxu0 0.0
  %4669 = vmatmul.mubr.f32.gmra.mxu0 %v1959
  %v4670 = vpop.f32.mrf.mxu0
  %v4671 = vadd.f32 %v4115, %v4670
  %v4672 = vpop.f32.mrf.mxu0
  %4673 = vmatprep.mubr.f32.mxu0 0.0
  %4674 = vmatmul.mubr.f32.gmra.mxu0 %v1960
  %v4675 = vpop.f32.mrf.mxu0
  %v4676 = vadd.f32 %v4116, %v4675
  %v4677 = vpop.f32.mrf.mxu0
  %4678 = vmatprep.mubr.f32.mxu0 0.0
  %4679 = vmatmul.mubr.f32.gmra.mxu0 %v1961
  %v4680 = vpop.f32.mrf.mxu0
  %v4681 = vadd.f32 %v4117, %v4680
  %v4682 = vpop.f32.mrf.mxu0
  %4683 = vmatprep.mubr.f32.mxu0 0.0
  %4684 = vmatmul.mubr.f32.gmra.mxu0 %v1962
  %v4685 = vpop.f32.mrf.mxu0
  %v4686 = vadd.f32 %v4118, %v4685
  %v4687 = vpop.f32.mrf.mxu0
  %4688 = vmatprep.mubr.f32.mxu0 0.0
  %4689 = vmatmul.mubr.f32.gmra.mxu0 %v1963
  %v4690 = vpop.f32.mrf.mxu0
  %v4691 = vadd.f32 %v4119, %v4690
  %v4692 = vpop.f32.mrf.mxu0
  %4693 = vmatprep.mubr.f32.mxu0 0.0
  %4694 = vmatmul.mubr.f32.gmra.mxu0 %v1964
  %v4695 = vpop.f32.mrf.mxu0
  %v4696 = vadd.f32 %v4120, %v4695
  %v4697 = vpop.f32.mrf.mxu0
  %4698 = vmatprep.mubr.f32.mxu0 0.0
  %4699 = vmatmul.mubr.f32.gmra.mxu0 %v1965
  %v4700 = vpop.f32.mrf.mxu0
  %v4701 = vadd.f32 %v4121, %v4700
  %v4702 = vpop.f32.mrf.mxu0
  %4703 = vmatprep.mubr.f32.mxu0 0.0
  %4704 = vmatmul.mubr.f32.gmra.mxu0 %v1966
  %v4705 = vpop.f32.mrf.mxu0
  %v4706 = vadd.f32 %v4122, %v4705
  %v4707 = vpop.f32.mrf.mxu0
  %4708 = vmatprep.mubr.f32.mxu0 0.0
  %4709 = vmatmul.mubr.f32.gmra.mxu0 %v1967
  %v4710 = vpop.f32.mrf.mxu0
  %v4711 = vadd.f32 %v4123, %v4710
  %v4712 = vpop.f32.mrf.mxu0
  %4713 = vmatprep.mubr.f32.mxu0 0.0
  %4714 = vmatmul.mubr.f32.gmra.mxu0 %v1968
  %v4715 = vpop.f32.mrf.mxu0
  %v4716 = vadd.f32 %v4124, %v4715
  %v4717 = vpop.f32.mrf.mxu0
  %4718 = vmatprep.mubr.f32.mxu0 0.0
  %4719 = vmatmul.mubr.f32.gmra.mxu0 %v1969
  %v4720 = vpop.f32.mrf.mxu0
  %v4721 = vadd.f32 %v4125, %v4720
  %v4722 = vpop.f32.mrf.mxu0
  %4723 = vmatprep.mubr.f32.mxu0 0.0
  %4724 = vmatmul.mubr.f32.gmra.mxu0 %v1970
  %v4725 = vpop.f32.mrf.mxu0
  %v4726 = vadd.f32 %v4126, %v4725
  %v4727 = vpop.f32.mrf.mxu0
  %4728 = vmatprep.mubr.f32.mxu0 0.0
  %4729 = vmatmul.mubr.f32.gmra.mxu0 %v1971
  %v4730 = vpop.f32.mrf.mxu0
  %v4731 = vadd.f32 %v4127, %v4730
  %v4732 = vpop.f32.mrf.mxu0
  %4733 = vmatprep.mubr.f32.mxu0 0.0
  %4734 = vmatmul.mubr.f32.gmra.mxu0 %v1972
  %v4735 = vpop.f32.mrf.mxu0
  %v4736 = vadd.f32 %v4128, %v4735
  %v4737 = vpop.f32.mrf.mxu0
  %4738 = vmatprep.mubr.f32.mxu0 0.0
  %4739 = vmatmul.mubr.f32.gmra.mxu0 %v1973
  %v4740 = vpop.f32.mrf.mxu0
  %v4741 = vadd.f32 %v4129, %v4740
  %v4742 = vpop.f32.mrf.mxu0
  %4743 = vmatprep.mubr.f32.mxu0 0.0
  %4744 = vmatmul.mubr.f32.gmra.mxu0 %v1974
  %v4745 = vpop.f32.mrf.mxu0
  %v4746 = vadd.f32 %v4130, %v4745
  %v4747 = vpop.f32.mrf.mxu0
  %4748 = vmatprep.mubr.f32.mxu0 0.0
  %4749 = vmatmul.mubr.f32.gmra.mxu0 %v1975
  %v4750 = vpop.f32.mrf.mxu0
  %v4751 = vadd.f32 %v4131, %v4750
  %v4752 = vpop.f32.mrf.mxu0
  %4753 = vmatprep.mubr.f32.mxu0 0.0
  %4754 = vmatmul.mubr.f32.gmra.mxu0 %v1976
  %v4755 = vpop.f32.mrf.mxu0
  %v4756 = vadd.f32 %v4132, %v4755
  %v4757 = vpop.f32.mrf.mxu0
  %4758 = vmatprep.mubr.f32.mxu0 0.0
  %4759 = vmatmul.mubr.f32.gmra.mxu0 %v1977
  %v4760 = vpop.f32.mrf.mxu0
  %v4761 = vadd.f32 %v4133, %v4760
  %v4762 = vpop.f32.mrf.mxu0
  %4763 = vmatprep.mubr.f32.mxu0 0.0
  %4764 = vmatmul.mubr.f32.gmra.mxu0 %v1978
  %v4765 = vpop.f32.mrf.mxu0
  %v4766 = vadd.f32 %v4134, %v4765
  %v4767 = vpop.f32.mrf.mxu0
  %4768 = vmatprep.mubr.f32.mxu0 0.0
  %4769 = vmatmul.mubr.f32.gmra.mxu0 %v1979
  %v4770 = vpop.f32.mrf.mxu0
  %v4771 = vadd.f32 %v4135, %v4770
  %v4772 = vpop.f32.mrf.mxu0
  %4773 = vmatprep.mubr.f32.mxu0 0.0
  %4774 = vmatmul.mubr.f32.gmra.mxu0 %v1980
  %v4775 = vpop.f32.mrf.mxu0
  %v4776 = vadd.f32 %v4136, %v4775
  %v4777 = vpop.f32.mrf.mxu0
  %4778 = vmatprep.mubr.f32.mxu0 0.0
  %4779 = vmatmul.mubr.f32.gmra.mxu0 %v1981
  %v4780 = vpop.f32.mrf.mxu0
  %v4781 = vadd.f32 %v4137, %v4780
  %v4782 = vpop.f32.mrf.mxu0
  %4783 = vmatprep.mubr.f32.mxu0 0.0
  %4784 = vmatmul.mubr.f32.gmra.mxu0 %v1982
  %v4785 = vpop.f32.mrf.mxu0
  %v4786 = vadd.f32 %v4138, %v4785
  %v4787 = vpop.f32.mrf.mxu0
  %4788 = vmatprep.mubr.f32.mxu0 0.0
  %4789 = vmatmul.mubr.f32.gmra.mxu0 %v1983
  %v4790 = vpop.f32.mrf.mxu0
  %v4791 = vadd.f32 %v4139, %v4790
  %v4792 = vpop.f32.mrf.mxu0
  %4793 = vmatprep.mubr.f32.mxu0 0.0
  %4794 = vmatmul.mubr.f32.gmra.mxu0 %v1984
  %v4795 = vpop.f32.mrf.mxu0
  %v4796 = vadd.f32 %v4140, %v4795
  %v4797 = vpop.f32.mrf.mxu0
  %4798 = vmatprep.mubr.f32.mxu0 0.0
  %4799 = vmatmul.mubr.f32.gmra.mxu0 %v1985
  %v4800 = vpop.f32.mrf.mxu0
  %v4801 = vadd.f32 %v4141, %v4800
  %v4802 = vpop.f32.mrf.mxu0
  %4803 = vmatprep.mubr.f32.mxu0 0.0
  %4804 = vmatmul.mubr.f32.gmra.mxu0 %v1986
  %v4805 = vpop.f32.mrf.mxu0
  %v4806 = vadd.f32 %v4142, %v4805
  %v4807 = vpop.f32.mrf.mxu0
  %4808 = vmatprep.mubr.f32.mxu0 0.0
  %4809 = vmatmul.mubr.f32.gmra.mxu0 %v1987
  %v4810 = vpop.f32.mrf.mxu0
  %v4811 = vadd.f32 %v4143, %v4810
  %v4812 = vpop.f32.mrf.mxu0
  %4813 = vmatprep.mubr.f32.mxu0 0.0
  %4814 = vmatmul.mubr.f32.gmra.mxu0 %v1988
  %v4815 = vpop.f32.mrf.mxu0
  %v4816 = vadd.f32 %v4144, %v4815
  %v4817 = vpop.f32.mrf.mxu0
  %4818 = vmatprep.mubr.f32.mxu0 0.0
  %4819 = vmatmul.mubr.f32.gmra.mxu0 %v1989
  %v4820 = vpop.f32.mrf.mxu0
  %v4821 = vadd.f32 %v4145, %v4820
  %v4822 = vpop.f32.mrf.mxu0
  %4823 = vmatprep.mubr.f32.mxu0 0.0
  %4824 = vmatmul.mubr.f32.gmra.mxu0 %v1990
  %v4825 = vpop.f32.mrf.mxu0
  %v4826 = vadd.f32 %v4146, %v4825
  %v4827 = vpop.f32.mrf.mxu0
  %4828 = vmatprep.mubr.f32.mxu0 0.0
  %4829 = vmatmul.mubr.f32.gmra.mxu0 %v1991
  %v4830 = vpop.f32.mrf.mxu0
  %v4831 = vadd.f32 %v4147, %v4830
  %v4832 = vpop.f32.mrf.mxu0
  %4833 = vmatprep.mubr.f32.mxu0 0.0
  %4834 = vmatmul.mubr.f32.gmra.mxu0 %v1992
  %v4835 = vpop.f32.mrf.mxu0
  %v4836 = vadd.f32 %v4148, %v4835
  %v4837 = vpop.f32.mrf.mxu0
  %4838 = vdwg.mxu0
  %v4839 = vadd.f32 %v4216, %v4221
  %v4840 = vadd.f32 %v4839, %v4226
  %v4841 = vadd.f32 %v4840, %v4231
  %v4842 = vadd.f32 %v4841, %v4236
  %v4843 = vadd.f32 %v4842, %v4241
  %v4844 = vadd.f32 %v4843, %v4246
  %v4845 = vadd.f32 %v4844, %v4251
  %v4846 = vadd.f32 %v4845, %v4256
  %v4847 = vadd.f32 %v4846, %v4261
  %v4848 = vadd.f32 %v4847, %v4266
  %v4849 = vadd.f32 %v4848, %v4271
  %v4850 = vadd.f32 %v4849, %v4276
  %v4851 = vadd.f32 %v4850, %v4281
  %v4852 = vadd.f32 %v4851, %v4286
  %v4853 = vadd.f32 %v4852, %v4291
  %v4854 = vadd.f32 %v4853, %v4296
  %v4855 = vadd.f32 %v4854, %v4301
  %v4856 = vadd.f32 %v4855, %v4306
  %v4857 = vadd.f32 %v4856, %v4311
  %v4858 = vadd.f32 %v4857, %v4316
  %v4859 = vadd.f32 %v4858, %v4321
  %v4860 = vadd.f32 %v4859, %v4326
  %v4861 = vadd.f32 %v4860, %v4331
  %v4862 = vadd.f32 %v4861, %v4336
  %v4863 = vadd.f32 %v4862, %v4341
  %v4864 = vadd.f32 %v4863, %v4346
  %v4865 = vadd.f32 %v4864, %v4351
  %v4866 = vadd.f32 %v4865, %v4356
  %v4867 = vadd.f32 %v4866, %v4361
  %v4868 = vadd.f32 %v4867, %v4366
  %v4869 = vadd.f32 %v4868, %v4371
  %v4870 = vadd.f32 %v4869, %v4376
  %v4871 = vadd.f32 %v4870, %v4381
  %v4872 = vadd.f32 %v4871, %v4386
  %v4873 = vadd.f32 %v4872, %v4391
  %v4874 = vadd.f32 %v4873, %v4396
  %v4875 = vadd.f32 %v4874, %v4401
  %v4876 = vadd.f32 %v4875, %v4406
  %v4877 = vadd.f32 %v4876, %v4411
  %v4878 = vadd.f32 %v4877, %v4416
  %v4879 = vadd.f32 %v4878, %v4421
  %v4880 = vadd.f32 %v4879, %v4426
  %v4881 = vadd.f32 %v4880, %v4431
  %v4882 = vadd.f32 %v4881, %v4436
  %v4883 = vadd.f32 %v4882, %v4441
  %v4884 = vadd.f32 %v4883, %v4446
  %v4885 = vadd.f32 %v4884, %v4451
  %v4886 = vadd.f32 %v4885, %v4456
  %v4887 = vadd.f32 %v4886, %v4461
  %v4888 = vadd.f32 %v4887, %v4466
  %v4889 = vadd.f32 %v4888, %v4471
  %v4890 = vadd.f32 %v4889, %v4476
  %v4891 = vadd.f32 %v4890, %v4481
  %v4892 = vadd.f32 %v4891, %v4486
  %v4893 = vadd.f32 %v4892, %v4491
  %v4894 = vadd.f32 %v4893, %v4496
  %v4895 = vadd.f32 %v4894, %v4501
  %v4896 = vadd.f32 %v4895, %v4506
  %v4897 = vadd.f32 %v4896, %v4511
  %v4898 = vadd.f32 %v4897, %v4516
  %v4899 = vadd.f32 %v4898, %v4521
  %v4900 = vadd.f32 %v4899, %v4526
  %v4901 = vadd.f32 %v4900, %v4531
  %v4902 = vadd.f32 %v4901, %v4536
  %v4903 = vadd.f32 %v4902, %v4541
  %v4904 = vadd.f32 %v4903, %v4546
  %v4905 = vadd.f32 %v4904, %v4551
  %v4906 = vadd.f32 %v4905, %v4556
  %v4907 = vadd.f32 %v4906, %v4561
  %v4908 = vadd.f32 %v4907, %v4566
  %v4909 = vadd.f32 %v4908, %v4571
  %v4910 = vadd.f32 %v4909, %v4576
  %v4911 = vadd.f32 %v4910, %v4581
  %v4912 = vadd.f32 %v4911, %v4586
  %v4913 = vadd.f32 %v4912, %v4591
  %v4914 = vadd.f32 %v4913, %v4596
  %v4915 = vadd.f32 %v4914, %v4601
  %v4916 = vadd.f32 %v4915, %v4606
  %v4917 = vadd.f32 %v4916, %v4611
  %v4918 = vadd.f32 %v4917, %v4616
  %v4919 = vadd.f32 %v4918, %v4621
  %v4920 = vadd.f32 %v4919, %v4626
  %v4921 = vadd.f32 %v4920, %v4631
  %v4922 = vadd.f32 %v4921, %v4636
  %v4923 = vadd.f32 %v4922, %v4641
  %v4924 = vadd.f32 %v4923, %v4646
  %v4925 = vadd.f32 %v4924, %v4651
  %v4926 = vadd.f32 %v4925, %v4656
  %v4927 = vadd.f32 %v4926, %v4661
  %v4928 = vadd.f32 %v4927, %v4666
  %v4929 = vadd.f32 %v4928, %v4671
  %v4930 = vadd.f32 %v4929, %v4676
  %v4931 = vadd.f32 %v4930, %v4681
  %v4932 = vadd.f32 %v4931, %v4686
  %v4933 = vadd.f32 %v4932, %v4691
  %v4934 = vadd.f32 %v4933, %v4696
  %v4935 = vadd.f32 %v4934, %v4701
  %v4936 = vadd.f32 %v4935, %v4706
  %v4937 = vadd.f32 %v4936, %v4711
  %v4938 = vadd.f32 %v4937, %v4716
  %v4939 = vadd.f32 %v4938, %v4721
  %v4940 = vadd.f32 %v4939, %v4726
  %v4941 = vadd.f32 %v4940, %v4731
  %v4942 = vadd.f32 %v4941, %v4736
  %v4943 = vadd.f32 %v4942, %v4741
  %v4944 = vadd.f32 %v4943, %v4746
  %v4945 = vadd.f32 %v4944, %v4751
  %v4946 = vadd.f32 %v4945, %v4756
  %v4947 = vadd.f32 %v4946, %v4761
  %v4948 = vadd.f32 %v4947, %v4766
  %v4949 = vadd.f32 %v4948, %v4771
  %v4950 = vadd.f32 %v4949, %v4776
  %v4951 = vadd.f32 %v4950, %v4781
  %v4952 = vadd.f32 %v4951, %v4786
  %v4953 = vadd.f32 %v4952, %v4791
  %v4954 = vadd.f32 %v4953, %v4796
  %v4955 = vadd.f32 %v4954, %v4801
  %v4956 = vadd.f32 %v4955, %v4806
  %v4957 = vadd.f32 %v4956, %v4811
  %v4958 = vadd.f32 %v4957, %v4816
  %v4959 = vadd.f32 %v4958, %v4821
  %v4960 = vadd.f32 %v4959, %v4826
  %v4961 = vadd.f32 %v4960, %v4831
  %v4962 = vadd.f32 %v4961, %v4836
  %v4963 = vrot.slane %v4962, 4
  %v4964 = vadd.f32 %v4962, %v4963
  %v4965 = vrot.slane %v4964, 2
  %v4966 = vadd.f32 %v4964, %v4965
  %v4967 = vrot.slane %v4966, 1
  %v4968 = vadd.f32 %v4966, %v4967
  %v4969 = vmul.f32 %v4968, 0.001
  %v4970 = vmul.f32 %v4216, %v4216
  %v4971 = vmul.f32 %v4221, %v4221
  %v4972 = vmul.f32 %v4226, %v4226
  %v4973 = vmul.f32 %v4231, %v4231
  %v4974 = vmul.f32 %v4236, %v4236
  %v4975 = vmul.f32 %v4241, %v4241
  %v4976 = vmul.f32 %v4246, %v4246
  %v4977 = vmul.f32 %v4251, %v4251
  %v4978 = vmul.f32 %v4256, %v4256
  %v4979 = vmul.f32 %v4261, %v4261
  %v4980 = vmul.f32 %v4266, %v4266
  %v4981 = vmul.f32 %v4271, %v4271
  %v4982 = vmul.f32 %v4276, %v4276
  %v4983 = vmul.f32 %v4281, %v4281
  %v4984 = vmul.f32 %v4286, %v4286
  %v4985 = vmul.f32 %v4291, %v4291
  %v4986 = vmul.f32 %v4296, %v4296
  %v4987 = vmul.f32 %v4301, %v4301
  %v4988 = vmul.f32 %v4306, %v4306
  %v4989 = vmul.f32 %v4311, %v4311
  %v4990 = vmul.f32 %v4316, %v4316
  %v4991 = vmul.f32 %v4321, %v4321
  %v4992 = vmul.f32 %v4326, %v4326
  %v4993 = vmul.f32 %v4331, %v4331
  %v4994 = vmul.f32 %v4336, %v4336
  %v4995 = vmul.f32 %v4341, %v4341
  %v4996 = vmul.f32 %v4346, %v4346
  %v4997 = vmul.f32 %v4351, %v4351
  %v4998 = vmul.f32 %v4356, %v4356
  %v4999 = vmul.f32 %v4361, %v4361
  %v5000 = vmul.f32 %v4366, %v4366
  %v5001 = vmul.f32 %v4371, %v4371
  %v5002 = vmul.f32 %v4376, %v4376
  %v5003 = vmul.f32 %v4381, %v4381
  %v5004 = vmul.f32 %v4386, %v4386
  %v5005 = vmul.f32 %v4391, %v4391
  %v5006 = vmul.f32 %v4396, %v4396
  %v5007 = vmul.f32 %v4401, %v4401
  %v5008 = vmul.f32 %v4406, %v4406
  %v5009 = vmul.f32 %v4411, %v4411
  %v5010 = vmul.f32 %v4416, %v4416
  %v5011 = vmul.f32 %v4421, %v4421
  %v5012 = vmul.f32 %v4426, %v4426
  %v5013 = vmul.f32 %v4431, %v4431
  %v5014 = vmul.f32 %v4436, %v4436
  %v5015 = vmul.f32 %v4441, %v4441
  %v5016 = vmul.f32 %v4446, %v4446
  %v5017 = vmul.f32 %v4451, %v4451
  %v5018 = vmul.f32 %v4456, %v4456
  %v5019 = vmul.f32 %v4461, %v4461
  %v5020 = vmul.f32 %v4466, %v4466
  %v5021 = vmul.f32 %v4471, %v4471
  %v5022 = vmul.f32 %v4476, %v4476
  %v5023 = vmul.f32 %v4481, %v4481
  %v5024 = vmul.f32 %v4486, %v4486
  %v5025 = vmul.f32 %v4491, %v4491
  %v5026 = vmul.f32 %v4496, %v4496
  %v5027 = vmul.f32 %v4501, %v4501
  %v5028 = vmul.f32 %v4506, %v4506
  %v5029 = vmul.f32 %v4511, %v4511
  %v5030 = vmul.f32 %v4516, %v4516
  %v5031 = vmul.f32 %v4521, %v4521
  %v5032 = vmul.f32 %v4526, %v4526
  %v5033 = vmul.f32 %v4531, %v4531
  %v5034 = vmul.f32 %v4536, %v4536
  %v5035 = vmul.f32 %v4541, %v4541
  %v5036 = vmul.f32 %v4546, %v4546
  %v5037 = vmul.f32 %v4551, %v4551
  %v5038 = vmul.f32 %v4556, %v4556
  %v5039 = vmul.f32 %v4561, %v4561
  %v5040 = vmul.f32 %v4566, %v4566
  %v5041 = vmul.f32 %v4571, %v4571
  %v5042 = vmul.f32 %v4576, %v4576
  %v5043 = vmul.f32 %v4581, %v4581
  %v5044 = vmul.f32 %v4586, %v4586
  %v5045 = vmul.f32 %v4591, %v4591
  %v5046 = vmul.f32 %v4596, %v4596
  %v5047 = vmul.f32 %v4601, %v4601
  %v5048 = vmul.f32 %v4606, %v4606
  %v5049 = vmul.f32 %v4611, %v4611
  %v5050 = vmul.f32 %v4616, %v4616
  %v5051 = vmul.f32 %v4621, %v4621
  %v5052 = vmul.f32 %v4626, %v4626
  %v5053 = vmul.f32 %v4631, %v4631
  %v5054 = vmul.f32 %v4636, %v4636
  %v5055 = vmul.f32 %v4641, %v4641
  %v5056 = vmul.f32 %v4646, %v4646
  %v5057 = vmul.f32 %v4651, %v4651
  %v5058 = vmul.f32 %v4656, %v4656
  %v5059 = vmul.f32 %v4661, %v4661
  %v5060 = vmul.f32 %v4666, %v4666
  %v5061 = vmul.f32 %v4671, %v4671
  %v5062 = vmul.f32 %v4676, %v4676
  %v5063 = vmul.f32 %v4681, %v4681
  %v5064 = vmul.f32 %v4686, %v4686
  %v5065 = vmul.f32 %v4691, %v4691
  %v5066 = vmul.f32 %v4696, %v4696
  %v5067 = vmul.f32 %v4701, %v4701
  %v5068 = vmul.f32 %v4706, %v4706
  %v5069 = vmul.f32 %v4711, %v4711
  %v5070 = vmul.f32 %v4716, %v4716
  %v5071 = vmul.f32 %v4721, %v4721
  %v5072 = vmul.f32 %v4726, %v4726
  %v5073 = vmul.f32 %v4731, %v4731
  %v5074 = vmul.f32 %v4736, %v4736
  %v5075 = vmul.f32 %v4741, %v4741
  %v5076 = vmul.f32 %v4746, %v4746
  %v5077 = vmul.f32 %v4751, %v4751
  %v5078 = vmul.f32 %v4756, %v4756
  %v5079 = vmul.f32 %v4761, %v4761
  %v5080 = vmul.f32 %v4766, %v4766
  %v5081 = vmul.f32 %v4771, %v4771
  %v5082 = vmul.f32 %v4776, %v4776
  %v5083 = vmul.f32 %v4781, %v4781
  %v5084 = vmul.f32 %v4786, %v4786
  %v5085 = vmul.f32 %v4791, %v4791
  %v5086 = vmul.f32 %v4796, %v4796
  %v5087 = vmul.f32 %v4801, %v4801
  %v5088 = vmul.f32 %v4806, %v4806
  %v5089 = vmul.f32 %v4811, %v4811
  %v5090 = vmul.f32 %v4816, %v4816
  %v5091 = vmul.f32 %v4821, %v4821
  %v5092 = vmul.f32 %v4826, %v4826
  %v5093 = vmul.f32 %v4831, %v4831
  %v5094 = vmul.f32 %v4836, %v4836
  %v5095 = vadd.f32 %v4970, %v4971
  %v5096 = vadd.f32 %v5095, %v4972
  %v5097 = vadd.f32 %v5096, %v4973
  %v5098 = vadd.f32 %v5097, %v4974
  %v5099 = vadd.f32 %v5098, %v4975
  %v5100 = vadd.f32 %v5099, %v4976
  %v5101 = vadd.f32 %v5100, %v4977
  %v5102 = vadd.f32 %v5101, %v4978
  %v5103 = vadd.f32 %v5102, %v4979
  %v5104 = vadd.f32 %v5103, %v4980
  %v5105 = vadd.f32 %v5104, %v4981
  %v5106 = vadd.f32 %v5105, %v4982
  %v5107 = vadd.f32 %v5106, %v4983
  %v5108 = vadd.f32 %v5107, %v4984
  %v5109 = vadd.f32 %v5108, %v4985
  %v5110 = vadd.f32 %v5109, %v4986
  %v5111 = vadd.f32 %v5110, %v4987
  %v5112 = vadd.f32 %v5111, %v4988
  %v5113 = vadd.f32 %v5112, %v4989
  %v5114 = vadd.f32 %v5113, %v4990
  %v5115 = vadd.f32 %v5114, %v4991
  %v5116 = vadd.f32 %v5115, %v4992
  %v5117 = vadd.f32 %v5116, %v4993
  %v5118 = vadd.f32 %v5117, %v4994
  %v5119 = vadd.f32 %v5118, %v4995
  %v5120 = vadd.f32 %v5119, %v4996
  %v5121 = vadd.f32 %v5120, %v4997
  %v5122 = vadd.f32 %v5121, %v4998
  %v5123 = vadd.f32 %v5122, %v4999
  %v5124 = vadd.f32 %v5123, %v5000
  %v5125 = vadd.f32 %v5124, %v5001
  %v5126 = vadd.f32 %v5125, %v5002
  %v5127 = vadd.f32 %v5126, %v5003
  %v5128 = vadd.f32 %v5127, %v5004
  %v5129 = vadd.f32 %v5128, %v5005
  %v5130 = vadd.f32 %v5129, %v5006
  %v5131 = vadd.f32 %v5130, %v5007
  %v5132 = vadd.f32 %v5131, %v5008
  %v5133 = vadd.f32 %v5132, %v5009
  %v5134 = vadd.f32 %v5133, %v5010
  %v5135 = vadd.f32 %v5134, %v5011
  %v5136 = vadd.f32 %v5135, %v5012
  %v5137 = vadd.f32 %v5136, %v5013
  %v5138 = vadd.f32 %v5137, %v5014
  %v5139 = vadd.f32 %v5138, %v5015
  %v5140 = vadd.f32 %v5139, %v5016
  %v5141 = vadd.f32 %v5140, %v5017
  %v5142 = vadd.f32 %v5141, %v5018
  %v5143 = vadd.f32 %v5142, %v5019
  %v5144 = vadd.f32 %v5143, %v5020
  %v5145 = vadd.f32 %v5144, %v5021
  %v5146 = vadd.f32 %v5145, %v5022
  %v5147 = vadd.f32 %v5146, %v5023
  %v5148 = vadd.f32 %v5147, %v5024
  %v5149 = vadd.f32 %v5148, %v5025
  %v5150 = vadd.f32 %v5149, %v5026
  %v5151 = vadd.f32 %v5150, %v5027
  %v5152 = vadd.f32 %v5151, %v5028
  %v5153 = vadd.f32 %v5152, %v5029
  %v5154 = vadd.f32 %v5153, %v5030
  %v5155 = vadd.f32 %v5154, %v5031
  %v5156 = vadd.f32 %v5155, %v5032
  %v5157 = vadd.f32 %v5156, %v5033
  %v5158 = vadd.f32 %v5157, %v5034
  %v5159 = vadd.f32 %v5158, %v5035
  %v5160 = vadd.f32 %v5159, %v5036
  %v5161 = vadd.f32 %v5160, %v5037
  %v5162 = vadd.f32 %v5161, %v5038
  %v5163 = vadd.f32 %v5162, %v5039
  %v5164 = vadd.f32 %v5163, %v5040
  %v5165 = vadd.f32 %v5164, %v5041
  %v5166 = vadd.f32 %v5165, %v5042
  %v5167 = vadd.f32 %v5166, %v5043
  %v5168 = vadd.f32 %v5167, %v5044
  %v5169 = vadd.f32 %v5168, %v5045
  %v5170 = vadd.f32 %v5169, %v5046
  %v5171 = vadd.f32 %v5170, %v5047
  %v5172 = vadd.f32 %v5171, %v5048
  %v5173 = vadd.f32 %v5172, %v5049
  %v5174 = vadd.f32 %v5173, %v5050
  %v5175 = vadd.f32 %v5174, %v5051
  %v5176 = vadd.f32 %v5175, %v5052
  %v5177 = vadd.f32 %v5176, %v5053
  %v5178 = vadd.f32 %v5177, %v5054
  %v5179 = vadd.f32 %v5178, %v5055
  %v5180 = vadd.f32 %v5179, %v5056
  %v5181 = vadd.f32 %v5180, %v5057
  %v5182 = vadd.f32 %v5181, %v5058
  %v5183 = vadd.f32 %v5182, %v5059
  %v5184 = vadd.f32 %v5183, %v5060
  %v5185 = vadd.f32 %v5184, %v5061
  %v5186 = vadd.f32 %v5185, %v5062
  %v5187 = vadd.f32 %v5186, %v5063
  %v5188 = vadd.f32 %v5187, %v5064
  %v5189 = vadd.f32 %v5188, %v5065
  %v5190 = vadd.f32 %v5189, %v5066
  %v5191 = vadd.f32 %v5190, %v5067
  %v5192 = vadd.f32 %v5191, %v5068
  %v5193 = vadd.f32 %v5192, %v5069
  %v5194 = vadd.f32 %v5193, %v5070
  %v5195 = vadd.f32 %v5194, %v5071
  %v5196 = vadd.f32 %v5195, %v5072
  %v5197 = vadd.f32 %v5196, %v5073
  %v5198 = vadd.f32 %v5197, %v5074
  %v5199 = vadd.f32 %v5198, %v5075
  %v5200 = vadd.f32 %v5199, %v5076
  %v5201 = vadd.f32 %v5200, %v5077
  %v5202 = vadd.f32 %v5201, %v5078
  %v5203 = vadd.f32 %v5202, %v5079
  %v5204 = vadd.f32 %v5203, %v5080
  %v5205 = vadd.f32 %v5204, %v5081
  %v5206 = vadd.f32 %v5205, %v5082
  %v5207 = vadd.f32 %v5206, %v5083
  %v5208 = vadd.f32 %v5207, %v5084
  %v5209 = vadd.f32 %v5208, %v5085
  %v5210 = vadd.f32 %v5209, %v5086
  %v5211 = vadd.f32 %v5210, %v5087
  %v5212 = vadd.f32 %v5211, %v5088
  %v5213 = vadd.f32 %v5212, %v5089
  %v5214 = vadd.f32 %v5213, %v5090
  %v5215 = vadd.f32 %v5214, %v5091
  %v5216 = vadd.f32 %v5215, %v5092
  %v5217 = vadd.f32 %v5216, %v5093
  %v5218 = vadd.f32 %v5217, %v5094
  %v5219 = vrot.slane %v5218, 4
  %v5220 = vadd.f32 %v5218, %v5219
  %v5221 = vrot.slane %v5220, 2
  %v5222 = vadd.f32 %v5220, %v5221
  %v5223 = vrot.slane %v5222, 1
  %v5224 = vadd.f32 %v5222, %v5223
  %v5225 = vmul.f32 %v5224, 0.001
  %v5226 = vmul.f32 %v4969, %v4969
  %v5227 = vsub.f32 %v5225, %v5226
  %v5228 = vmax.f32 %v5227, 0.0
  %v5229 = vld [vmem:[%s3 + $0x5] sm:$0x1]
  %v5230 = vadd.f32 %v5228, 1e-05
  %v5231 = vrsqrt.pop %v5230
  %v5232 = vmul.f32 %v5229, %v5231
  %v5233 = vld [vmem:[%s3 + $0x6] sm:$0x1]
  %v5234 = vmul.f32 %v4969, %v5232
  %v5235 = vsub.f32 %v5233, %v5234
  %v5236 = vlaneseq
  %v5237 = vshrl.u32 %v5236, 7
  %v5238 = vsub.s32 0, %v5237
  %v5239 = vrot.slane %v5232, %v5238
  %v5240 = vmul.f32 %v4216, %v5239
  %v5241 = vmul.f32 %v4221, %v5239
  %v5242 = vmul.f32 %v4226, %v5239
  %v5243 = vmul.f32 %v4231, %v5239
  %v5244 = vmul.f32 %v4236, %v5239
  %v5245 = vmul.f32 %v4241, %v5239
  %v5246 = vmul.f32 %v4246, %v5239
  %v5247 = vmul.f32 %v4251, %v5239
  %v5248 = vmul.f32 %v4256, %v5239
  %v5249 = vmul.f32 %v4261, %v5239
  %v5250 = vmul.f32 %v4266, %v5239
  %v5251 = vmul.f32 %v4271, %v5239
  %v5252 = vmul.f32 %v4276, %v5239
  %v5253 = vmul.f32 %v4281, %v5239
  %v5254 = vmul.f32 %v4286, %v5239
  %v5255 = vmul.f32 %v4291, %v5239
  %v5256 = vmul.f32 %v4296, %v5239
  %v5257 = vmul.f32 %v4301, %v5239
  %v5258 = vmul.f32 %v4306, %v5239
  %v5259 = vmul.f32 %v4311, %v5239
  %v5260 = vmul.f32 %v4316, %v5239
  %v5261 = vmul.f32 %v4321, %v5239
  %v5262 = vmul.f32 %v4326, %v5239
  %v5263 = vmul.f32 %v4331, %v5239
  %v5264 = vmul.f32 %v4336, %v5239
  %v5265 = vmul.f32 %v4341, %v5239
  %v5266 = vmul.f32 %v4346, %v5239
  %v5267 = vmul.f32 %v4351, %v5239
  %v5268 = vmul.f32 %v4356, %v5239
  %v5269 = vmul.f32 %v4361, %v5239
  %v5270 = vmul.f32 %v4366, %v5239
  %v5271 = vmul.f32 %v4371, %v5239
  %v5272 = vmul.f32 %v4376, %v5239
  %v5273 = vmul.f32 %v4381, %v5239
  %v5274 = vmul.f32 %v4386, %v5239
  %v5275 = vmul.f32 %v4391, %v5239
  %v5276 = vmul.f32 %v4396, %v5239
  %v5277 = vmul.f32 %v4401, %v5239
  %v5278 = vmul.f32 %v4406, %v5239
  %v5279 = vmul.f32 %v4411, %v5239
  %v5280 = vmul.f32 %v4416, %v5239
  %v5281 = vmul.f32 %v4421, %v5239
  %v5282 = vmul.f32 %v4426, %v5239
  %v5283 = vmul.f32 %v4431, %v5239
  %v5284 = vmul.f32 %v4436, %v5239
  %v5285 = vmul.f32 %v4441, %v5239
  %v5286 = vmul.f32 %v4446, %v5239
  %v5287 = vmul.f32 %v4451, %v5239
  %v5288 = vmul.f32 %v4456, %v5239
  %v5289 = vmul.f32 %v4461, %v5239
  %v5290 = vmul.f32 %v4466, %v5239
  %v5291 = vmul.f32 %v4471, %v5239
  %v5292 = vmul.f32 %v4476, %v5239
  %v5293 = vmul.f32 %v4481, %v5239
  %v5294 = vmul.f32 %v4486, %v5239
  %v5295 = vmul.f32 %v4491, %v5239
  %v5296 = vmul.f32 %v4496, %v5239
  %v5297 = vmul.f32 %v4501, %v5239
  %v5298 = vmul.f32 %v4506, %v5239
  %v5299 = vmul.f32 %v4511, %v5239
  %v5300 = vmul.f32 %v4516, %v5239
  %v5301 = vmul.f32 %v4521, %v5239
  %v5302 = vmul.f32 %v4526, %v5239
  %v5303 = vmul.f32 %v4531, %v5239
  %v5304 = vmul.f32 %v4536, %v5239
  %v5305 = vmul.f32 %v4541, %v5239
  %v5306 = vmul.f32 %v4546, %v5239
  %v5307 = vmul.f32 %v4551, %v5239
  %v5308 = vmul.f32 %v4556, %v5239
  %v5309 = vmul.f32 %v4561, %v5239
  %v5310 = vmul.f32 %v4566, %v5239
  %v5311 = vmul.f32 %v4571, %v5239
  %v5312 = vmul.f32 %v4576, %v5239
  %v5313 = vmul.f32 %v4581, %v5239
  %v5314 = vmul.f32 %v4586, %v5239
  %v5315 = vmul.f32 %v4591, %v5239
  %v5316 = vmul.f32 %v4596, %v5239
  %v5317 = vmul.f32 %v4601, %v5239
  %v5318 = vmul.f32 %v4606, %v5239
  %v5319 = vmul.f32 %v4611, %v5239
  %v5320 = vmul.f32 %v4616, %v5239
  %v5321 = vmul.f32 %v4621, %v5239
  %v5322 = vmul.f32 %v4626, %v5239
  %v5323 = vmul.f32 %v4631, %v5239
  %v5324 = vmul.f32 %v4636, %v5239
  %v5325 = vmul.f32 %v4641, %v5239
  %v5326 = vmul.f32 %v4646, %v5239
  %v5327 = vmul.f32 %v4651, %v5239
  %v5328 = vmul.f32 %v4656, %v5239
  %v5329 = vmul.f32 %v4661, %v5239
  %v5330 = vmul.f32 %v4666, %v5239
  %v5331 = vmul.f32 %v4671, %v5239
  %v5332 = vmul.f32 %v4676, %v5239
  %v5333 = vmul.f32 %v4681, %v5239
  %v5334 = vmul.f32 %v4686, %v5239
  %v5335 = vmul.f32 %v4691, %v5239
  %v5336 = vmul.f32 %v4696, %v5239
  %v5337 = vmul.f32 %v4701, %v5239
  %v5338 = vmul.f32 %v4706, %v5239
  %v5339 = vmul.f32 %v4711, %v5239
  %v5340 = vmul.f32 %v4716, %v5239
  %v5341 = vmul.f32 %v4721, %v5239
  %v5342 = vmul.f32 %v4726, %v5239
  %v5343 = vmul.f32 %v4731, %v5239
  %v5344 = vmul.f32 %v4736, %v5239
  %v5345 = vmul.f32 %v4741, %v5239
  %v5346 = vmul.f32 %v4746, %v5239
  %v5347 = vmul.f32 %v4751, %v5239
  %v5348 = vmul.f32 %v4756, %v5239
  %v5349 = vmul.f32 %v4761, %v5239
  %v5350 = vmul.f32 %v4766, %v5239
  %v5351 = vmul.f32 %v4771, %v5239
  %v5352 = vmul.f32 %v4776, %v5239
  %v5353 = vmul.f32 %v4781, %v5239
  %v5354 = vmul.f32 %v4786, %v5239
  %v5355 = vmul.f32 %v4791, %v5239
  %v5356 = vmul.f32 %v4796, %v5239
  %v5357 = vmul.f32 %v4801, %v5239
  %v5358 = vmul.f32 %v4806, %v5239
  %v5359 = vmul.f32 %v4811, %v5239
  %v5360 = vmul.f32 %v4816, %v5239
  %v5361 = vmul.f32 %v4821, %v5239
  %v5362 = vmul.f32 %v4826, %v5239
  %v5363 = vmul.f32 %v4831, %v5239
  %v5364 = vmul.f32 %v4836, %v5239
  %v5365 = vlaneseq
  %v5366 = vshrl.u32 %v5365, 7
  %v5367 = vsub.s32 0, %v5366
  %v5368 = vrot.slane %v5235, %v5367
  %v5369 = vadd.f32 %v5240, %v5368
  %v5370 = vadd.f32 %v5241, %v5368
  %v5371 = vadd.f32 %v5242, %v5368
  %v5372 = vadd.f32 %v5243, %v5368
  %v5373 = vadd.f32 %v5244, %v5368
  %v5374 = vadd.f32 %v5245, %v5368
  %v5375 = vadd.f32 %v5246, %v5368
  %v5376 = vadd.f32 %v5247, %v5368
  %v5377 = vadd.f32 %v5248, %v5368
  %v5378 = vadd.f32 %v5249, %v5368
  %v5379 = vadd.f32 %v5250, %v5368
  %v5380 = vadd.f32 %v5251, %v5368
  %v5381 = vadd.f32 %v5252, %v5368
  %v5382 = vadd.f32 %v5253, %v5368
  %v5383 = vadd.f32 %v5254, %v5368
  %v5384 = vadd.f32 %v5255, %v5368
  %v5385 = vadd.f32 %v5256, %v5368
  %v5386 = vadd.f32 %v5257, %v5368
  %v5387 = vadd.f32 %v5258, %v5368
  %v5388 = vadd.f32 %v5259, %v5368
  %v5389 = vadd.f32 %v5260, %v5368
  %v5390 = vadd.f32 %v5261, %v5368
  %v5391 = vadd.f32 %v5262, %v5368
  %v5392 = vadd.f32 %v5263, %v5368
  %v5393 = vadd.f32 %v5264, %v5368
  %v5394 = vadd.f32 %v5265, %v5368
  %v5395 = vadd.f32 %v5266, %v5368
  %v5396 = vadd.f32 %v5267, %v5368
  %v5397 = vadd.f32 %v5268, %v5368
  %v5398 = vadd.f32 %v5269, %v5368
  %v5399 = vadd.f32 %v5270, %v5368
  %v5400 = vadd.f32 %v5271, %v5368
  %v5401 = vadd.f32 %v5272, %v5368
  %v5402 = vadd.f32 %v5273, %v5368
  %v5403 = vadd.f32 %v5274, %v5368
  %v5404 = vadd.f32 %v5275, %v5368
  %v5405 = vadd.f32 %v5276, %v5368
  %v5406 = vadd.f32 %v5277, %v5368
  %v5407 = vadd.f32 %v5278, %v5368
  %v5408 = vadd.f32 %v5279, %v5368
  %v5409 = vadd.f32 %v5280, %v5368
  %v5410 = vadd.f32 %v5281, %v5368
  %v5411 = vadd.f32 %v5282, %v5368
  %v5412 = vadd.f32 %v5283, %v5368
  %v5413 = vadd.f32 %v5284, %v5368
  %v5414 = vadd.f32 %v5285, %v5368
  %v5415 = vadd.f32 %v5286, %v5368
  %v5416 = vadd.f32 %v5287, %v5368
  %v5417 = vadd.f32 %v5288, %v5368
  %v5418 = vadd.f32 %v5289, %v5368
  %v5419 = vadd.f32 %v5290, %v5368
  %v5420 = vadd.f32 %v5291, %v5368
  %v5421 = vadd.f32 %v5292, %v5368
  %v5422 = vadd.f32 %v5293, %v5368
  %v5423 = vadd.f32 %v5294, %v5368
  %v5424 = vadd.f32 %v5295, %v5368
  %v5425 = vadd.f32 %v5296, %v5368
  %v5426 = vadd.f32 %v5297, %v5368
  %v5427 = vadd.f32 %v5298, %v5368
  %v5428 = vadd.f32 %v5299, %v5368
  %v5429 = vadd.f32 %v5300, %v5368
  %v5430 = vadd.f32 %v5301, %v5368
  %v5431 = vadd.f32 %v5302, %v5368
  %v5432 = vadd.f32 %v5303, %v5368
  %v5433 = vadd.f32 %v5304, %v5368
  %v5434 = vadd.f32 %v5305, %v5368
  %v5435 = vadd.f32 %v5306, %v5368
  %v5436 = vadd.f32 %v5307, %v5368
  %v5437 = vadd.f32 %v5308, %v5368
  %v5438 = vadd.f32 %v5309, %v5368
  %v5439 = vadd.f32 %v5310, %v5368
  %v5440 = vadd.f32 %v5311, %v5368
  %v5441 = vadd.f32 %v5312, %v5368
  %v5442 = vadd.f32 %v5313, %v5368
  %v5443 = vadd.f32 %v5314, %v5368
  %v5444 = vadd.f32 %v5315, %v5368
  %v5445 = vadd.f32 %v5316, %v5368
  %v5446 = vadd.f32 %v5317, %v5368
  %v5447 = vadd.f32 %v5318, %v5368
  %v5448 = vadd.f32 %v5319, %v5368
  %v5449 = vadd.f32 %v5320, %v5368
  %v5450 = vadd.f32 %v5321, %v5368
  %v5451 = vadd.f32 %v5322, %v5368
  %v5452 = vadd.f32 %v5323, %v5368
  %v5453 = vadd.f32 %v5324, %v5368
  %v5454 = vadd.f32 %v5325, %v5368
  %v5455 = vadd.f32 %v5326, %v5368
  %v5456 = vadd.f32 %v5327, %v5368
  %v5457 = vadd.f32 %v5328, %v5368
  %v5458 = vadd.f32 %v5329, %v5368
  %v5459 = vadd.f32 %v5330, %v5368
  %v5460 = vadd.f32 %v5331, %v5368
  %v5461 = vadd.f32 %v5332, %v5368
  %v5462 = vadd.f32 %v5333, %v5368
  %v5463 = vadd.f32 %v5334, %v5368
  %v5464 = vadd.f32 %v5335, %v5368
  %v5465 = vadd.f32 %v5336, %v5368
  %v5466 = vadd.f32 %v5337, %v5368
  %v5467 = vadd.f32 %v5338, %v5368
  %v5468 = vadd.f32 %v5339, %v5368
  %v5469 = vadd.f32 %v5340, %v5368
  %v5470 = vadd.f32 %v5341, %v5368
  %v5471 = vadd.f32 %v5342, %v5368
  %v5472 = vadd.f32 %v5343, %v5368
  %v5473 = vadd.f32 %v5344, %v5368
  %v5474 = vadd.f32 %v5345, %v5368
  %v5475 = vadd.f32 %v5346, %v5368
  %v5476 = vadd.f32 %v5347, %v5368
  %v5477 = vadd.f32 %v5348, %v5368
  %v5478 = vadd.f32 %v5349, %v5368
  %v5479 = vadd.f32 %v5350, %v5368
  %v5480 = vadd.f32 %v5351, %v5368
  %v5481 = vadd.f32 %v5352, %v5368
  %v5482 = vadd.f32 %v5353, %v5368
  %v5483 = vadd.f32 %v5354, %v5368
  %v5484 = vadd.f32 %v5355, %v5368
  %v5485 = vadd.f32 %v5356, %v5368
  %v5486 = vadd.f32 %v5357, %v5368
  %v5487 = vadd.f32 %v5358, %v5368
  %v5488 = vadd.f32 %v5359, %v5368
  %v5489 = vadd.f32 %v5360, %v5368
  %v5490 = vadd.f32 %v5361, %v5368
  %v5491 = vadd.f32 %v5362, %v5368
  %v5492 = vadd.f32 %v5363, %v5368
  %v5493 = vadd.f32 %v5364, %v5368
  %v5494 = vadd.f32 %v5369, %v17
  %v5495 = vadd.f32 %v5370, %v18
  %v5496 = vadd.f32 %v5371, %v19
  %v5497 = vadd.f32 %v5372, %v20
  %v5498 = vadd.f32 %v5373, %v21
  %v5499 = vadd.f32 %v5374, %v22
  %v5500 = vadd.f32 %v5375, %v23
  %v5501 = vadd.f32 %v5376, %v24
  %v5502 = vadd.f32 %v5377, %v25
  %v5503 = vadd.f32 %v5378, %v26
  %v5504 = vadd.f32 %v5379, %v27
  %v5505 = vadd.f32 %v5380, %v28
  %v5506 = vadd.f32 %v5381, %v29
  %v5507 = vadd.f32 %v5382, %v30
  %v5508 = vadd.f32 %v5383, %v31
  %v5509 = vadd.f32 %v5384, %v32
  %v5510 = vadd.f32 %v5385, %v33
  %v5511 = vadd.f32 %v5386, %v34
  %v5512 = vadd.f32 %v5387, %v35
  %v5513 = vadd.f32 %v5388, %v36
  %v5514 = vadd.f32 %v5389, %v37
  %v5515 = vadd.f32 %v5390, %v38
  %v5516 = vadd.f32 %v5391, %v39
  %v5517 = vadd.f32 %v5392, %v40
  %v5518 = vadd.f32 %v5393, %v41
  %v5519 = vadd.f32 %v5394, %v42
  %v5520 = vadd.f32 %v5395, %v43
  %v5521 = vadd.f32 %v5396, %v44
  %v5522 = vadd.f32 %v5397, %v45
  %v5523 = vadd.f32 %v5398, %v46
  %v5524 = vadd.f32 %v5399, %v47
  %v5525 = vadd.f32 %v5400, %v48
  %v5526 = vadd.f32 %v5401, %v49
  %v5527 = vadd.f32 %v5402, %v50
  %v5528 = vadd.f32 %v5403, %v51
  %v5529 = vadd.f32 %v5404, %v52
  %v5530 = vadd.f32 %v5405, %v53
  %v5531 = vadd.f32 %v5406, %v54
  %v5532 = vadd.f32 %v5407, %v55
  %v5533 = vadd.f32 %v5408, %v56
  %v5534 = vadd.f32 %v5409, %v57
  %v5535 = vadd.f32 %v5410, %v58
  %v5536 = vadd.f32 %v5411, %v59
  %v5537 = vadd.f32 %v5412, %v60
  %v5538 = vadd.f32 %v5413, %v61
  %v5539 = vadd.f32 %v5414, %v62
  %v5540 = vadd.f32 %v5415, %v63
  %v5541 = vadd.f32 %v5416, %v64
  %v5542 = vadd.f32 %v5417, %v65
  %v5543 = vadd.f32 %v5418, %v66
  %v5544 = vadd.f32 %v5419, %v67
  %v5545 = vadd.f32 %v5420, %v68
  %v5546 = vadd.f32 %v5421, %v69
  %v5547 = vadd.f32 %v5422, %v70
  %v5548 = vadd.f32 %v5423, %v71
  %v5549 = vadd.f32 %v5424, %v72
  %v5550 = vadd.f32 %v5425, %v73
  %v5551 = vadd.f32 %v5426, %v74
  %v5552 = vadd.f32 %v5427, %v75
  %v5553 = vadd.f32 %v5428, %v76
  %v5554 = vadd.f32 %v5429, %v77
  %v5555 = vadd.f32 %v5430, %v78
  %v5556 = vadd.f32 %v5431, %v79
  %v5557 = vadd.f32 %v5432, %v80
  %v5558 = vadd.f32 %v5433, %v81
  %v5559 = vadd.f32 %v5434, %v82
  %v5560 = vadd.f32 %v5435, %v83
  %v5561 = vadd.f32 %v5436, %v84
  %v5562 = vadd.f32 %v5437, %v85
  %v5563 = vadd.f32 %v5438, %v86
  %v5564 = vadd.f32 %v5439, %v87
  %v5565 = vadd.f32 %v5440, %v88
  %v5566 = vadd.f32 %v5441, %v89
  %v5567 = vadd.f32 %v5442, %v90
  %v5568 = vadd.f32 %v5443, %v91
  %v5569 = vadd.f32 %v5444, %v92
  %v5570 = vadd.f32 %v5445, %v93
  %v5571 = vadd.f32 %v5446, %v94
  %v5572 = vadd.f32 %v5447, %v95
  %v5573 = vadd.f32 %v5448, %v96
  %v5574 = vadd.f32 %v5449, %v97
  %v5575 = vadd.f32 %v5450, %v98
  %v5576 = vadd.f32 %v5451, %v99
  %v5577 = vadd.f32 %v5452, %v100
  %v5578 = vadd.f32 %v5453, %v101
  %v5579 = vadd.f32 %v5454, %v102
  %v5580 = vadd.f32 %v5455, %v103
  %v5581 = vadd.f32 %v5456, %v104
  %v5582 = vadd.f32 %v5457, %v105
  %v5583 = vadd.f32 %v5458, %v106
  %v5584 = vadd.f32 %v5459, %v107
  %v5585 = vadd.f32 %v5460, %v108
  %v5586 = vadd.f32 %v5461, %v109
  %v5587 = vadd.f32 %v5462, %v110
  %v5588 = vadd.f32 %v5463, %v111
  %v5589 = vadd.f32 %v5464, %v112
  %v5590 = vadd.f32 %v5465, %v113
  %v5591 = vadd.f32 %v5466, %v114
  %v5592 = vadd.f32 %v5467, %v115
  %v5593 = vadd.f32 %v5468, %v116
  %v5594 = vadd.f32 %v5469, %v117
  %v5595 = vadd.f32 %v5470, %v118
  %v5596 = vadd.f32 %v5471, %v119
  %v5597 = vadd.f32 %v5472, %v120
  %v5598 = vadd.f32 %v5473, %v121
  %v5599 = vadd.f32 %v5474, %v122
  %v5600 = vadd.f32 %v5475, %v123
  %v5601 = vadd.f32 %v5476, %v124
  %v5602 = vadd.f32 %v5477, %v125
  %v5603 = vadd.f32 %v5478, %v126
  %v5604 = vadd.f32 %v5479, %v127
  %v5605 = vadd.f32 %v5480, %v128
  %v5606 = vadd.f32 %v5481, %v129
  %v5607 = vadd.f32 %v5482, %v130
  %v5608 = vadd.f32 %v5483, %v131
  %v5609 = vadd.f32 %v5484, %v132
  %v5610 = vadd.f32 %v5485, %v133
  %v5611 = vadd.f32 %v5486, %v134
  %v5612 = vadd.f32 %v5487, %v135
  %v5613 = vadd.f32 %v5488, %v136
  %v5614 = vadd.f32 %v5489, %v137
  %v5615 = vadd.f32 %v5490, %v138
  %v5616 = vadd.f32 %v5491, %v139
  %v5617 = vadd.f32 %v5492, %v140
  %v5618 = vadd.f32 %v5493, %v141
  %v5619 = vmax.f32 %v5494, 0.0
  %v5620 = vmax.f32 %v5495, 0.0
  %v5621 = vmax.f32 %v5496, 0.0
  %v5622 = vmax.f32 %v5497, 0.0
  %v5623 = vmax.f32 %v5498, 0.0
  %v5624 = vmax.f32 %v5499, 0.0
  %v5625 = vmax.f32 %v5500, 0.0
  %v5626 = vmax.f32 %v5501, 0.0
  %v5627 = vmax.f32 %v5502, 0.0
  %v5628 = vmax.f32 %v5503, 0.0
  %v5629 = vmax.f32 %v5504, 0.0
  %v5630 = vmax.f32 %v5505, 0.0
  %v5631 = vmax.f32 %v5506, 0.0
  %v5632 = vmax.f32 %v5507, 0.0
  %v5633 = vmax.f32 %v5508, 0.0
  %v5634 = vmax.f32 %v5509, 0.0
  %v5635 = vmax.f32 %v5510, 0.0
  %v5636 = vmax.f32 %v5511, 0.0
  %v5637 = vmax.f32 %v5512, 0.0
  %v5638 = vmax.f32 %v5513, 0.0
  %v5639 = vmax.f32 %v5514, 0.0
  %v5640 = vmax.f32 %v5515, 0.0
  %v5641 = vmax.f32 %v5516, 0.0
  %v5642 = vmax.f32 %v5517, 0.0
  %v5643 = vmax.f32 %v5518, 0.0
  %v5644 = vmax.f32 %v5519, 0.0
  %v5645 = vmax.f32 %v5520, 0.0
  %v5646 = vmax.f32 %v5521, 0.0
  %v5647 = vmax.f32 %v5522, 0.0
  %v5648 = vmax.f32 %v5523, 0.0
  %v5649 = vmax.f32 %v5524, 0.0
  %v5650 = vmax.f32 %v5525, 0.0
  %v5651 = vmax.f32 %v5526, 0.0
  %v5652 = vmax.f32 %v5527, 0.0
  %v5653 = vmax.f32 %v5528, 0.0
  %v5654 = vmax.f32 %v5529, 0.0
  %v5655 = vmax.f32 %v5530, 0.0
  %v5656 = vmax.f32 %v5531, 0.0
  %v5657 = vmax.f32 %v5532, 0.0
  %v5658 = vmax.f32 %v5533, 0.0
  %v5659 = vmax.f32 %v5534, 0.0
  %v5660 = vmax.f32 %v5535, 0.0
  %v5661 = vmax.f32 %v5536, 0.0
  %v5662 = vmax.f32 %v5537, 0.0
  %v5663 = vmax.f32 %v5538, 0.0
  %v5664 = vmax.f32 %v5539, 0.0
  %v5665 = vmax.f32 %v5540, 0.0
  %v5666 = vmax.f32 %v5541, 0.0
  %v5667 = vmax.f32 %v5542, 0.0
  %v5668 = vmax.f32 %v5543, 0.0
  %v5669 = vmax.f32 %v5544, 0.0
  %v5670 = vmax.f32 %v5545, 0.0
  %v5671 = vmax.f32 %v5546, 0.0
  %v5672 = vmax.f32 %v5547, 0.0
  %v5673 = vmax.f32 %v5548, 0.0
  %v5674 = vmax.f32 %v5549, 0.0
  %v5675 = vmax.f32 %v5550, 0.0
  %v5676 = vmax.f32 %v5551, 0.0
  %v5677 = vmax.f32 %v5552, 0.0
  %v5678 = vmax.f32 %v5553, 0.0
  %v5679 = vmax.f32 %v5554, 0.0
  %v5680 = vmax.f32 %v5555, 0.0
  %v5681 = vmax.f32 %v5556, 0.0
  %v5682 = vmax.f32 %v5557, 0.0
  %v5683 = vmax.f32 %v5558, 0.0
  %v5684 = vmax.f32 %v5559, 0.0
  %v5685 = vmax.f32 %v5560, 0.0
  %v5686 = vmax.f32 %v5561, 0.0
  %v5687 = vmax.f32 %v5562, 0.0
  %v5688 = vmax.f32 %v5563, 0.0
  %v5689 = vmax.f32 %v5564, 0.0
  %v5690 = vmax.f32 %v5565, 0.0
  %v5691 = vmax.f32 %v5566, 0.0
  %v5692 = vmax.f32 %v5567, 0.0
  %v5693 = vmax.f32 %v5568, 0.0
  %v5694 = vmax.f32 %v5569, 0.0
  %v5695 = vmax.f32 %v5570, 0.0
  %v5696 = vmax.f32 %v5571, 0.0
  %v5697 = vmax.f32 %v5572, 0.0
  %v5698 = vmax.f32 %v5573, 0.0
  %v5699 = vmax.f32 %v5574, 0.0
  %v5700 = vmax.f32 %v5575, 0.0
  %v5701 = vmax.f32 %v5576, 0.0
  %v5702 = vmax.f32 %v5577, 0.0
  %v5703 = vmax.f32 %v5578, 0.0
  %v5704 = vmax.f32 %v5579, 0.0
  %v5705 = vmax.f32 %v5580, 0.0
  %v5706 = vmax.f32 %v5581, 0.0
  %v5707 = vmax.f32 %v5582, 0.0
  %v5708 = vmax.f32 %v5583, 0.0
  %v5709 = vmax.f32 %v5584, 0.0
  %v5710 = vmax.f32 %v5585, 0.0
  %v5711 = vmax.f32 %v5586, 0.0
  %v5712 = vmax.f32 %v5587, 0.0
  %v5713 = vmax.f32 %v5588, 0.0
  %v5714 = vmax.f32 %v5589, 0.0
  %v5715 = vmax.f32 %v5590, 0.0
  %v5716 = vmax.f32 %v5591, 0.0
  %v5717 = vmax.f32 %v5592, 0.0
  %v5718 = vmax.f32 %v5593, 0.0
  %v5719 = vmax.f32 %v5594, 0.0
  %v5720 = vmax.f32 %v5595, 0.0
  %v5721 = vmax.f32 %v5596, 0.0
  %v5722 = vmax.f32 %v5597, 0.0
  %v5723 = vmax.f32 %v5598, 0.0
  %v5724 = vmax.f32 %v5599, 0.0
  %v5725 = vmax.f32 %v5600, 0.0
  %v5726 = vmax.f32 %v5601, 0.0
  %v5727 = vmax.f32 %v5602, 0.0
  %v5728 = vmax.f32 %v5603, 0.0
  %v5729 = vmax.f32 %v5604, 0.0
  %v5730 = vmax.f32 %v5605, 0.0
  %v5731 = vmax.f32 %v5606, 0.0
  %v5732 = vmax.f32 %v5607, 0.0
  %v5733 = vmax.f32 %v5608, 0.0
  %v5734 = vmax.f32 %v5609, 0.0
  %v5735 = vmax.f32 %v5610, 0.0
  %v5736 = vmax.f32 %v5611, 0.0
  %v5737 = vmax.f32 %v5612, 0.0
  %v5738 = vmax.f32 %v5613, 0.0
  %v5739 = vmax.f32 %v5614, 0.0
  %v5740 = vmax.f32 %v5615, 0.0
  %v5741 = vmax.f32 %v5616, 0.0
  %v5742 = vmax.f32 %v5617, 0.0
  %v5743 = vmax.f32 %v5618, 0.0
  %vm5744 = vcmask 261120
  %5745 = vst.msk [vmem:[%s4] sm:$0xff] %vm5744, %v5619
  %5746 = vst.msk [vmem:[%s4 + $0x8] sm:$0xff] %vm5744, %v5620
  %5747 = vst.msk [vmem:[%s4 + $0x10] sm:$0xff] %vm5744, %v5621
  %5748 = vst.msk [vmem:[%s4 + $0x18] sm:$0xff] %vm5744, %v5622
  %5749 = vst.msk [vmem:[%s4 + $0x20] sm:$0xff] %vm5744, %v5623
  %5750 = vst.msk [vmem:[%s4 + $0x28] sm:$0xff] %vm5744, %v5624
  %5751 = vst.msk [vmem:[%s4 + $0x30] sm:$0xff] %vm5744, %v5625
  %5752 = vst.msk [vmem:[%s4 + $0x38] sm:$0xff] %vm5744, %v5626
  %5753 = vst.msk [vmem:[%s4 + $0x40] sm:$0xff] %vm5744, %v5627
  %5754 = vst.msk [vmem:[%s4 + $0x48] sm:$0xff] %vm5744, %v5628
  %5755 = vst.msk [vmem:[%s4 + $0x50] sm:$0xff] %vm5744, %v5629
  %5756 = vst.msk [vmem:[%s4 + $0x58] sm:$0xff] %vm5744, %v5630
  %5757 = vst.msk [vmem:[%s4 + $0x60] sm:$0xff] %vm5744, %v5631
  %5758 = vst.msk [vmem:[%s4 + $0x68] sm:$0xff] %vm5744, %v5632
  %5759 = vst.msk [vmem:[%s4 + $0x70] sm:$0xff] %vm5744, %v5633
  %5760 = vst.msk [vmem:[%s4 + $0x78] sm:$0xff] %vm5744, %v5634
  %5761 = vst.msk [vmem:[%s4 + $0x80] sm:$0xff] %vm5744, %v5635
  %5762 = vst.msk [vmem:[%s4 + $0x88] sm:$0xff] %vm5744, %v5636
  %5763 = vst.msk [vmem:[%s4 + $0x90] sm:$0xff] %vm5744, %v5637
  %5764 = vst.msk [vmem:[%s4 + $0x98] sm:$0xff] %vm5744, %v5638
  %5765 = vst.msk [vmem:[%s4 + $0xa0] sm:$0xff] %vm5744, %v5639
  %5766 = vst.msk [vmem:[%s4 + $0xa8] sm:$0xff] %vm5744, %v5640
  %5767 = vst.msk [vmem:[%s4 + $0xb0] sm:$0xff] %vm5744, %v5641
  %5768 = vst.msk [vmem:[%s4 + $0xb8] sm:$0xff] %vm5744, %v5642
  %5769 = vst.msk [vmem:[%s4 + $0xc0] sm:$0xff] %vm5744, %v5643
  %5770 = vst.msk [vmem:[%s4 + $0xc8] sm:$0xff] %vm5744, %v5644
  %5771 = vst.msk [vmem:[%s4 + $0xd0] sm:$0xff] %vm5744, %v5645
  %5772 = vst.msk [vmem:[%s4 + $0xd8] sm:$0xff] %vm5744, %v5646
  %5773 = vst.msk [vmem:[%s4 + $0xe0] sm:$0xff] %vm5744, %v5647
  %5774 = vst.msk [vmem:[%s4 + $0xe8] sm:$0xff] %vm5744, %v5648
  %5775 = vst.msk [vmem:[%s4 + $0xf0] sm:$0xff] %vm5744, %v5649
  %5776 = vst.msk [vmem:[%s4 + $0xf8] sm:$0xff] %vm5744, %v5650
  %5777 = vst.msk [vmem:[%s4 + $0x100] sm:$0xff] %vm5744, %v5651
  %5778 = vst.msk [vmem:[%s4 + $0x108] sm:$0xff] %vm5744, %v5652
  %5779 = vst.msk [vmem:[%s4 + $0x110] sm:$0xff] %vm5744, %v5653
  %5780 = vst.msk [vmem:[%s4 + $0x118] sm:$0xff] %vm5744, %v5654
  %5781 = vst.msk [vmem:[%s4 + $0x120] sm:$0xff] %vm5744, %v5655
  %5782 = vst.msk [vmem:[%s4 + $0x128] sm:$0xff] %vm5744, %v5656
  %5783 = vst.msk [vmem:[%s4 + $0x130] sm:$0xff] %vm5744, %v5657
  %5784 = vst.msk [vmem:[%s4 + $0x138] sm:$0xff] %vm5744, %v5658
  %5785 = vst.msk [vmem:[%s4 + $0x140] sm:$0xff] %vm5744, %v5659
  %5786 = vst.msk [vmem:[%s4 + $0x148] sm:$0xff] %vm5744, %v5660
  %5787 = vst.msk [vmem:[%s4 + $0x150] sm:$0xff] %vm5744, %v5661
  %5788 = vst.msk [vmem:[%s4 + $0x158] sm:$0xff] %vm5744, %v5662
  %5789 = vst.msk [vmem:[%s4 + $0x160] sm:$0xff] %vm5744, %v5663
  %5790 = vst.msk [vmem:[%s4 + $0x168] sm:$0xff] %vm5744, %v5664
  %5791 = vst.msk [vmem:[%s4 + $0x170] sm:$0xff] %vm5744, %v5665
  %5792 = vst.msk [vmem:[%s4 + $0x178] sm:$0xff] %vm5744, %v5666
  %5793 = vst.msk [vmem:[%s4 + $0x180] sm:$0xff] %vm5744, %v5667
  %5794 = vst.msk [vmem:[%s4 + $0x188] sm:$0xff] %vm5744, %v5668
  %5795 = vst.msk [vmem:[%s4 + $0x190] sm:$0xff] %vm5744, %v5669
  %5796 = vst.msk [vmem:[%s4 + $0x198] sm:$0xff] %vm5744, %v5670
  %5797 = vst.msk [vmem:[%s4 + $0x1a0] sm:$0xff] %vm5744, %v5671
  %5798 = vst.msk [vmem:[%s4 + $0x1a8] sm:$0xff] %vm5744, %v5672
  %5799 = vst.msk [vmem:[%s4 + $0x1b0] sm:$0xff] %vm5744, %v5673
  %5800 = vst.msk [vmem:[%s4 + $0x1b8] sm:$0xff] %vm5744, %v5674
  %5801 = vst.msk [vmem:[%s4 + $0x1c0] sm:$0xff] %vm5744, %v5675
  %5802 = vst.msk [vmem:[%s4 + $0x1c8] sm:$0xff] %vm5744, %v5676
  %5803 = vst.msk [vmem:[%s4 + $0x1d0] sm:$0xff] %vm5744, %v5677
  %5804 = vst.msk [vmem:[%s4 + $0x1d8] sm:$0xff] %vm5744, %v5678
  %5805 = vst.msk [vmem:[%s4 + $0x1e0] sm:$0xff] %vm5744, %v5679
  %5806 = vst.msk [vmem:[%s4 + $0x1e8] sm:$0xff] %vm5744, %v5680
  %5807 = vst.msk [vmem:[%s4 + $0x1f0] sm:$0xff] %vm5744, %v5681
  %5808 = vst.msk [vmem:[%s4 + $0x1f8] sm:$0xff] %vm5744, %v5682
  %5809 = vst.msk [vmem:[%s4 + $0x200] sm:$0xff] %vm5744, %v5683
  %5810 = vst.msk [vmem:[%s4 + $0x208] sm:$0xff] %vm5744, %v5684
  %5811 = vst.msk [vmem:[%s4 + $0x210] sm:$0xff] %vm5744, %v5685
  %5812 = vst.msk [vmem:[%s4 + $0x218] sm:$0xff] %vm5744, %v5686
  %5813 = vst.msk [vmem:[%s4 + $0x220] sm:$0xff] %vm5744, %v5687
  %5814 = vst.msk [vmem:[%s4 + $0x228] sm:$0xff] %vm5744, %v5688
  %5815 = vst.msk [vmem:[%s4 + $0x230] sm:$0xff] %vm5744, %v5689
  %5816 = vst.msk [vmem:[%s4 + $0x238] sm:$0xff] %vm5744, %v5690
  %5817 = vst.msk [vmem:[%s4 + $0x240] sm:$0xff] %vm5744, %v5691
  %5818 = vst.msk [vmem:[%s4 + $0x248] sm:$0xff] %vm5744, %v5692
  %5819 = vst.msk [vmem:[%s4 + $0x250] sm:$0xff] %vm5744, %v5693
  %5820 = vst.msk [vmem:[%s4 + $0x258] sm:$0xff] %vm5744, %v5694
  %5821 = vst.msk [vmem:[%s4 + $0x260] sm:$0xff] %vm5744, %v5695
  %5822 = vst.msk [vmem:[%s4 + $0x268] sm:$0xff] %vm5744, %v5696
  %5823 = vst.msk [vmem:[%s4 + $0x270] sm:$0xff] %vm5744, %v5697
  %5824 = vst.msk [vmem:[%s4 + $0x278] sm:$0xff] %vm5744, %v5698
  %5825 = vst.msk [vmem:[%s4 + $0x280] sm:$0xff] %vm5744, %v5699
  %5826 = vst.msk [vmem:[%s4 + $0x288] sm:$0xff] %vm5744, %v5700
  %5827 = vst.msk [vmem:[%s4 + $0x290] sm:$0xff] %vm5744, %v5701
  %5828 = vst.msk [vmem:[%s4 + $0x298] sm:$0xff] %vm5744, %v5702
  %5829 = vst.msk [vmem:[%s4 + $0x2a0] sm:$0xff] %vm5744, %v5703
  %5830 = vst.msk [vmem:[%s4 + $0x2a8] sm:$0xff] %vm5744, %v5704
  %5831 = vst.msk [vmem:[%s4 + $0x2b0] sm:$0xff] %vm5744, %v5705
  %5832 = vst.msk [vmem:[%s4 + $0x2b8] sm:$0xff] %vm5744, %v5706
  %5833 = vst.msk [vmem:[%s4 + $0x2c0] sm:$0xff] %vm5744, %v5707
  %5834 = vst.msk [vmem:[%s4 + $0x2c8] sm:$0xff] %vm5744, %v5708
  %5835 = vst.msk [vmem:[%s4 + $0x2d0] sm:$0xff] %vm5744, %v5709
  %5836 = vst.msk [vmem:[%s4 + $0x2d8] sm:$0xff] %vm5744, %v5710
  %5837 = vst.msk [vmem:[%s4 + $0x2e0] sm:$0xff] %vm5744, %v5711
  %5838 = vst.msk [vmem:[%s4 + $0x2e8] sm:$0xff] %vm5744, %v5712
  %5839 = vst.msk [vmem:[%s4 + $0x2f0] sm:$0xff] %vm5744, %v5713
  %5840 = vst.msk [vmem:[%s4 + $0x2f8] sm:$0xff] %vm5744, %v5714
  %5841 = vst.msk [vmem:[%s4 + $0x300] sm:$0xff] %vm5744, %v5715
  %5842 = vst.msk [vmem:[%s4 + $0x308] sm:$0xff] %vm5744, %v5716
  %5843 = vst.msk [vmem:[%s4 + $0x310] sm:$0xff] %vm5744, %v5717
  %5844 = vst.msk [vmem:[%s4 + $0x318] sm:$0xff] %vm5744, %v5718
  %5845 = vst.msk [vmem:[%s4 + $0x320] sm:$0xff] %vm5744, %v5719
  %5846 = vst.msk [vmem:[%s4 + $0x328] sm:$0xff] %vm5744, %v5720
  %5847 = vst.msk [vmem:[%s4 + $0x330] sm:$0xff] %vm5744, %v5721
  %5848 = vst.msk [vmem:[%s4 + $0x338] sm:$0xff] %vm5744, %v5722
  %5849 = vst.msk [vmem:[%s4 + $0x340] sm:$0xff] %vm5744, %v5723
  %5850 = vst.msk [vmem:[%s4 + $0x348] sm:$0xff] %vm5744, %v5724
  %5851 = vst.msk [vmem:[%s4 + $0x350] sm:$0xff] %vm5744, %v5725
  %5852 = vst.msk [vmem:[%s4 + $0x358] sm:$0xff] %vm5744, %v5726
  %5853 = vst.msk [vmem:[%s4 + $0x360] sm:$0xff] %vm5744, %v5727
  %5854 = vst.msk [vmem:[%s4 + $0x368] sm:$0xff] %vm5744, %v5728
  %5855 = vst.msk [vmem:[%s4 + $0x370] sm:$0xff] %vm5744, %v5729
  %5856 = vst.msk [vmem:[%s4 + $0x378] sm:$0xff] %vm5744, %v5730
  %5857 = vst.msk [vmem:[%s4 + $0x380] sm:$0xff] %vm5744, %v5731
  %5858 = vst.msk [vmem:[%s4 + $0x388] sm:$0xff] %vm5744, %v5732
  %5859 = vst.msk [vmem:[%s4 + $0x390] sm:$0xff] %vm5744, %v5733
  %5860 = vst.msk [vmem:[%s4 + $0x398] sm:$0xff] %vm5744, %v5734
  %5861 = vst.msk [vmem:[%s4 + $0x3a0] sm:$0xff] %vm5744, %v5735
  %5862 = vst.msk [vmem:[%s4 + $0x3a8] sm:$0xff] %vm5744, %v5736
  %5863 = vst.msk [vmem:[%s4 + $0x3b0] sm:$0xff] %vm5744, %v5737
  %5864 = vst.msk [vmem:[%s4 + $0x3b8] sm:$0xff] %vm5744, %v5738
  %5865 = vst.msk [vmem:[%s4 + $0x3c0] sm:$0xff] %vm5744, %v5739
  %5866 = vst.msk [vmem:[%s4 + $0x3c8] sm:$0xff] %vm5744, %v5740
  %5867 = vst.msk [vmem:[%s4 + $0x3d0] sm:$0xff] %vm5744, %v5741
  %5868 = vst.msk [vmem:[%s4 + $0x3d8] sm:$0xff] %vm5744, %v5742
  %5869 = vst.msk [vmem:[%s4 + $0x3e0] sm:$0xff] %vm5744, %v5743
  // Predicated region
  $region18: #{residual_block_with_points.1} parent=0 // pred_check
    _
  $region19: #{residual_block_with_points.1} parent=0 // pred_check_branch
    %5871 = sbr.rel (0) target = $region21
  $region20: #{residual_block_with_points.1} parent=0 // pred_region
    _
  $region21: #{residual_block_with_points.1} parent=0 // pred_fallthru
    _
  // Predicated region
  $region22: #{residual_block_with_points.1} parent=0 // pred_check
    _
  $region23: #{residual_block_with_points.1} parent=0 // pred_check_branch
    %5873 = sbr.rel (0) target = $region25
  $region24: #{residual_block_with_points.1} parent=0 // pred_region
    _
  $region25: #{residual_block_with_points.1} parent=0 // pred_fallthru
    _

</llo_original>
